<compile_context>
chip_gen: v7x
topology: tpu7x:2x2x1
jax: 0.10.0
libtpu: 0.0.40
codegen_flags: <defaults>
</compile_context>

<pallas_src>
import functools

import jax
import jax.numpy as jnp
import numpy as np
from jax import lax
from jax.experimental import pallas as pl
from jax.experimental.pallas import tpu as pltpu


def _round_up(v, m):
    return (v + m - 1) // m * m


# ---------------------------------------------------------------------------
# Fused per-block kernel: tb samples per grid step.
#   C, dC, XXT  via three small batched Grams on lane-dense operands
#   T_pre       via in-kernel augmented Gauss-Jordan on the SPD C
#   RR          = dXc - T_pre^T @ Xc  (== dX - ff - T_pre^T @ X0)
#   RRX, sumX0, RS1, QQ  reductions
# All results are packed into one lane-dense output slab of width out_w and
# written with a single unmasked store.
# ---------------------------------------------------------------------------
def _make_fused_kernel(nx, nt, n_step, dt, out_w):
    nT = nt - n_step
    denom = 1.0 / float(nt - 1 - n_step)
    inv_step = 1.0 / float(n_step * dt)
    inv_nT = 1.0 / float(nT)
    pad_w = out_w - (4 * nx + 3)

    dims_gram = (((2,), (2,)), ((0,), (0,)))    # 'bit,bjt->bij'
    dims_projT = (((1,), (1,)), ((0,), (0,)))   # 'bji,bjt->bit' (lhs transposed)

    def kernel(x_ref, out_ref):
        x = x_ref[...]                                  # (tb, nx, nt)
        tb = x.shape[0]

        # Lane-aligned time handling: full-width roll + "< nT" lane mask.
        # Padded lanes are re-zeroed AFTER mean-centering so they do not
        # pollute the Grams / sums.
        lane = lax.broadcasted_iota(jnp.int32, (1, 1, nt), 2)
        maskf = (lane < nT).astype(jnp.float32)         # (1, 1, nt)

        x1 = pltpu.roll(x, nt - n_step, axis=2)         # x1[.., t] = x[.., t+n_step] for t < nT
        dx = x1 - x                                     # Euler-forward derivative
        if inv_step != 1.0:                             # fold out the multiply when n_step*dt == 1
            dx = dx * inv_step

        xm = jnp.sum(x * maskf, axis=2, keepdims=True) * inv_nT    # mean(X0)
        dxm = jnp.sum(dx * maskf, axis=2, keepdims=True) * inv_nT  # mean(dX)
        xc = (x - xm) * maskf                           # centered, padded lanes zeroed
        dxc = (dx - dxm) * maskf
        x0 = x * maskf                                  # masked X0 (offset-0, lane-dense)

        # Three small batched Grams straight off the lane-dense operands.
        c = lax.dot_general(xc, xc, dims_gram,
                            preferred_element_type=jnp.float32) * denom
        dc = lax.dot_general(xc, dxc, dims_gram,
                             preferred_element_type=jnp.float32) * denom
        xxt = lax.dot_general(x0, x0, dims_gram,
                              preferred_element_type=jnp.float32)

        # Solve C @ T_pre = dC with an augmented-matrix Gauss-Jordan:
        # one reciprocal (EUP) and one where/update per pivot.
        # TODO(synk): no pivoting / pinv fallback for singular C (the torch
        # module falls back to linalg.pinv); fine for generic full-rank data.
        ab = jnp.concatenate([c, dc], axis=2)           # (tb, nx, 2nx)
        rowm = lax.broadcasted_iota(jnp.int32, (1, nx, 1), 1)
        for k in range(nx):
            inv_piv = pl.reciprocal(ab[:, k:k + 1, k:k + 1])   # (tb,1,1), exact
            rowk = ab[:, k:k + 1, :] * inv_piv                 # (tb,1,2nx)
            colk = ab[:, :, k:k + 1]                           # (tb,nx,1)
            ab = jnp.where(rowm == k, rowk, ab - colk * rowk)
        t_pre = ab[:, :, nx:]                                  # (tb,nx,nx) = C^{-1} dC

        # Residuals: RR = dXc - T_pre^T @ Xc  (padded lanes stay exactly 0)
        proj = lax.dot_general(t_pre, xc, dims_projT,
                               preferred_element_type=jnp.float32)  # (tb, nx, nt)
        rr = dxc - proj

        rrx = lax.dot_general(rr, x0, dims_gram,
                              preferred_element_type=jnp.float32)   # RR @ X0^T
        sum_x0 = xm * float(nT)                                     # sum(X0) reuses the mean
        rs1 = jnp.sum(rr, axis=2, keepdims=True)
        qq = jnp.sum(rr * rr, axis=2, keepdims=True)

        # Single lane-dense packed slab per sample, one unmasked store:
        #   [ C | T_pre | XXT | RRX | sumX0 | RS1 | QQ | 0-pad ]   width = out_w
        pieces = [c, t_pre, xxt, rrx, sum_x0, rs1, qq]
        if pad_w > 0:
            pieces.append(jnp.zeros((tb, nx, pad_w), jnp.float32))
        out_ref[...] = jnp.concatenate(pieces, axis=2)

    return kernel


# ---------------------------------------------------------------------------
# Generation-aware tiling
# ---------------------------------------------------------------------------
def _device_kind():
    try:
        d = jax.devices()[0]
        if d.platform == "tpu":
            return d.device_kind.lower()
    except Exception:
        pass
    return ""


def _vmem_plan(nx, nt, out_w, kind):
    """Per-sample live-VMEM estimate + generation-aware budget."""
    is_v7 = "7" in kind                                   # v7x: 64 MiB physical VMEM
    is_v5e = ("v5 lite" in kind) or ("v5e" in kind) or ("v5litepod" in kind)
    # double-buffered input tile + double-buffered output tile + ~8 live
    # (nx, nt) f32 temporaries inside the body
    per_sample = (2 * nx * nt + 2 * nx * out_w + 8 * nx * nt) * 4
    budget = (24 << 20) if is_v7 else (48 << 20)
    vmem_limit = (40 << 20) if is_v7 else (64 << 20)
    tb_max = max(1, budget // per_sample)
    return per_sample, tb_max, vmem_limit, is_v7, is_v5e


def _pick_block_b(B, tb_max, two_cores):
    """Samples per grid step: amortize per-step overhead within the VMEM
    budget; on v7x (2 TensorCores) keep an even number of >= 2 grid steps."""
    if two_cores and B > 1:
        steps = max(2, pl.cdiv(B, tb_max))
        if steps % 2:
            steps += 1
        return pl.cdiv(B, steps)
    return min(B, tb_max)


def _make_in_spec(tb, nx, nt, is_v5e):
    idx = lambda i: (i, 0, 0)
    if is_v5e and hasattr(pl, "Buffered"):
        try:   # extra pipeline stage: v5e's lower HBM BW exposes the input DMA
            return pl.BlockSpec((tb, nx, nt), idx, pipeline_mode=pl.Buffered(3))
        except TypeError:
            pass
    return pl.BlockSpec((tb, nx, nt), idx)


# ---------------------------------------------------------------------------
# Forward pass (equivalent of LiangCausalityEstimator.forward)
# ---------------------------------------------------------------------------
def liang_forward(x, n_step=1, dt=1, block_b=None):
    x = jnp.asarray(x, jnp.float32)
    B, nx, nt = x.shape
    dt = float(dt)

    out_w = max(128, _round_up(4 * nx + 3, 128))          # lane-dense packed slab width
    kind = _device_kind()
    per_sample, tb_max, vmem_limit, is_v7, is_v5e = _vmem_plan(nx, nt, out_w, kind)

    if block_b is not None:
        tb = max(1, min(int(block_b), B))
    else:
        tb = _pick_block_b(B, tb_max, two_cores=is_v7)
    grid = (pl.cdiv(B, tb),)                               # no batch padding / x rewrite

    # Only raise the scoped-VMEM limit when the tile is actually large.
    cp_kwargs = dict(dimension_semantics=("parallel",))
    if tb * per_sample > (16 << 20):
        cp_kwargs["vmem_limit_bytes"] = int(vmem_limit)

    # Advisory cost hint: three Grams + projection + residual Gram.
    flops = 10 * nx * nx * nt * B
    cost = pl.CostEstimate(flops=int(flops), transcendentals=0,
                           bytes_accessed=int(B * nx * (nt + out_w) * 4))

    # TODO(synk): for very long series (nx*nt*4 B approaching VMEM) a T-tiled
    # reduction grid axis with two-pass centering would be needed; not implemented.
    packed = pl.pallas_call(
        _make_fused_kernel(nx, nt, n_step, dt, out_w),
        out_shape=jax.ShapeDtypeStruct((B, nx, out_w), jnp.float32),
        grid=grid,
        in_specs=[_make_in_spec(tb, nx, nt, is_v5e)],
        out_specs=pl.BlockSpec((tb, nx, out_w), lambda i: (i, 0, 0)),
        compiler_params=pltpu.CompilerParams(**cp_kwargs),
        cost_estimate=cost,
    )(x)

    C = packed[:, :, 0:nx]                 # (B, nx, nx)
    T_pre = packed[:, :, nx:2 * nx]
    XXT = packed[:, :, 2 * nx:3 * nx]
    rrx = packed[:, :, 3 * nx:4 * nx]
    sumX0 = packed[:, :, 4 * nx]           # (B, nx)
    RS1 = packed[:, :, 4 * nx + 1]
    QQ = packed[:, :, 4 * nx + 2]

    diagC = jnp.diagonal(C, axis1=1, axis2=2)          # (B, nx)
    inv_diagC = 1.0 / diagC

    # cM = C @ diag(1/diag(C)) * T_pre   (column scaling, elementwise product)
    cM = C * inv_diagC[:, None, :] * T_pre

    bb = jnp.sqrt(QQ * dt / float(nt - n_step))        # (B, nx)
    dH_noise = bb * bb / 2.0 / diagC
    ZZ = jnp.sum(jnp.abs(cM), axis=1, keepdims=True) + jnp.abs(dH_noise)[:, None, :]
    cM_Z = cM / ZZ

    # --- Fisher information matrices NNI (B, nx, nx+2, nx+2) ---------------
    N = float(nt - 1)
    center = (dt / (bb[:, :, None, None] ** 2)) * XXT[:, None, :, :]
    top_center = (dt / (bb[:, :, None] ** 2)) * sumX0[:, None, :]
    right_center = (2.0 * dt / (bb[:, :, None] ** 3)) * rrx
    top_left = N * dt / bb ** 2
    top_right = 2.0 * dt / bb ** 3 * RS1
    bottom_right = 3.0 * dt / bb ** 4 * QQ - N / bb ** 2

    NNI = jnp.zeros((B, nx, nx + 2, nx + 2), jnp.float32)
    NNI = NNI.at[:, :, 1:-1, 1:-1].set(center)
    NNI = NNI.at[:, :, 0, 1:-1].set(top_center)
    NNI = NNI.at[:, :, 1:-1, 0].set(top_center)
    NNI = NNI.at[:, :, 1:-1, -1].set(right_center)
    NNI = NNI.at[:, :, -1, 1:-1].set(right_center)
    NNI = NNI.at[:, :, 0, 0].set(top_left)
    NNI = NNI.at[:, :, 0, -1].set(top_right)
    NNI = NNI.at[:, :, -1, 0].set(top_right)
    NNI = NNI.at[:, :, -1, -1].set(bottom_right)

    # TODO(synk): torch.linalg.inv has no Pallas primitive — batched tiny
    # (nx+2)x(nx+2) inverse stays in plain JAX.
    NNI_inv = jnp.linalg.inv(NNI)
    diag_stack = jnp.diagonal(NNI_inv, axis1=2, axis2=3)[:, :, 1:-1]   # (B, nx, nx)
    var = (inv_diagC[:, :, None] * C) ** 2 * diag_stack
    variance = jnp.swapaxes(var, 1, 2)                                  # var.T per sample

    return cM, variance, cM_Z


class LiangCausalityEstimatorPallas:
    """JAX/Pallas equivalent of the PyTorch LiangCausalityEstimator module."""

    def __init__(self, n_step=1, dt=1):
        self.n_step = n_step
        self.dt = dt

    def __call__(self, x):
        return liang_forward(x, self.n_step, self.dt)


# ---------------------------------------------------------------------------
# Pure-JAX reference (mirrors the PyTorch causal_est_matrix for one sample)
# ---------------------------------------------------------------------------
def _ref_one(X, n_step, dt):
    nx, nt = X.shape
    X0 = X[:, : nt - n_step]
    Xc = X0 - X0.mean(axis=1, keepdims=True)
    C = Xc @ Xc.T / (nt - 1 - n_step)
    dX = (X[:, n_step:] - X0) / (n_step * dt)
    dXc = dX - dX.mean(axis=1, keepdims=True)
    dC = Xc @ dXc.T / (nt - 1 - n_step)
    T_pre = jnp.linalg.solve(C, dC)
    diagC = jnp.diag(C)
    cM = C / diagC[None, :] * T_pre
    ff = dX.mean(axis=1) - X0.mean(axis=1) @ T_pre
    RR = dX - ff[:, None] - T_pre.T @ X0
    QQ = jnp.sum(RR ** 2, axis=-1)
    RS1 = jnp.sum(RR, axis=-1)
    bb = jnp.sqrt(QQ * dt / (nt - n_step))
    dH = bb ** 2 / 2.0 / diagC
    ZZ = jnp.sum(jnp.abs(cM), axis=0, keepdims=True) + jnp.abs(dH)[None, :]
    cM_Z = cM / ZZ

    N = nt - 1
    XXT = X0 @ X0.T
    sumX0 = jnp.sum(X0, axis=-1)
    rrx = RR @ X0.T
    NNI = jnp.zeros((nx, nx + 2, nx + 2), X.dtype)
    NNI = NNI.at[:, 1:-1, 1:-1].set(dt / bb[:, None, None] ** 2 * XXT[None])
    NNI = NNI.at[:, 0, 1:-1].set(dt / bb[:, None] ** 2 * sumX0[None, :])
    NNI = NNI.at[:, 1:-1, 0].set(dt / bb[:, None] ** 2 * sumX0[None, :])
    NNI = NNI.at[:, 1:-1, -1].set(2 * dt / bb[:, None] ** 3 * rrx)
    NNI = NNI.at[:, -1, 1:-1].set(2 * dt / bb[:, None] ** 3 * rrx)
    NNI = NNI.at[:, 0, 0].set(N * dt / bb ** 2)
    NNI = NNI.at[:, 0, -1].set(2 * dt / bb ** 3 * RS1)
    NNI = NNI.at[:, -1, 0].set(2 * dt / bb ** 3 * RS1)
    NNI = NNI.at[:, -1, -1].set(3 * dt / bb ** 4 * QQ - N / bb ** 2)
    NNI_inv = jnp.linalg.inv(NNI)
    diag_stack = jnp.diagonal(NNI_inv, axis1=1, axis2=2)[:, 1:-1]
    var = (C / diagC[:, None]) ** 2 * diag_stack
    return cM, var.T, cM_Z


if __name__ == "__main__":
    key = jax.random.PRNGKey(0)
    B, C_ch, T = 5, 8, 128          # batch=5, nx=8 channels, nt=128 time points
    x = jax.random.normal(key, (B, C_ch, T), dtype=jnp.float32)

    model = LiangCausalityEstimatorPallas(n_step=1, dt=1)
    fwd = jax.jit(functools.partial(liang_forward, n_step=1, dt=1))
    causality, variance, normalized = jax.block_until_ready(fwd(x))

    # sanity check against a pure-JAX reference of the PyTorch math
    ref_cM, ref_var, ref_Z = jax.vmap(lambda xx: _ref_one(xx, 1, 1.0))(x)
    np.testing.assert_allclose(np.asarray(causality), np.asarray(ref_cM),
                               rtol=2e-2, atol=2e-3)
    np.testing.assert_allclose(np.asarray(normalized), np.asarray(ref_Z),
                               rtol=2e-2, atol=2e-3)
    np.testing.assert_allclose(np.asarray(variance), np.asarray(ref_var),
                               rtol=5e-2, atol=1e-5)
    assert causality.shape == (B, C_ch, C_ch)
    assert variance.shape == (B, C_ch, C_ch)
    assert normalized.shape == (B, C_ch, C_ch)
    assert np.all(np.isfinite(np.asarray(variance)))

    print("KERNEL_OK")
</pallas_src>

<mosaic_0001>
module attributes {stable_mosaic.version = 11 : i64} {
  func.func @kernel(%arg0: i32, %arg1: memref<5x8x128xf32, #tpu.memory_space<vmem>>, %arg2: memref<5x8x128xf32, #tpu.memory_space<vmem>>) attributes {dimension_semantics = [#tpu.dimension_semantics<parallel>], iteration_bounds = array<i64: 1>, scalar_prefetch = 0 : i64, scratch_operands = 0 : i64, tpu.core_type = #tpu.core_type<tc>, window_params = [{transform_indices = @transform_0, window_bounds = array<i64: 5, 8, 128>}, {transform_indices = @transform_1, window_bounds = array<i64: 5, 8, 128>}]} {
    %c0 = arith.constant 0 : index
    %c0_0 = arith.constant 0 : index
    %c0_1 = arith.constant 0 : index
    %0 = vector.load %arg1[%c0, %c0_0, %c0_1] : memref<5x8x128xf32, #tpu.memory_space<vmem>>, vector<5x8x128xf32>
    %1 = tpu.iota {dimensions = array<i32: 2>} : vector<1x1x128xi32>
    %c127_i32 = arith.constant 127 : i32
    %2 = vector.broadcast %c127_i32 : i32 to vector<1x1x128xi32>
    %3 = arith.cmpi slt, %1, %2 : vector<1x1x128xi32>
    %4 = arith.extui %3 : vector<1x1x128xi1> to vector<1x1x128xi32>
    %5 = arith.sitofp %4 : vector<1x1x128xi32> to vector<1x1x128xf32>
    %c127_i32_2 = arith.constant 127 : i32
    %6 = tpu.dynamic_rotate %0 by %c127_i32_2 dim 2 : vector<5x8x128xf32>, i32 -> vector<5x8x128xf32>
    %7 = arith.subf %6, %0 : vector<5x8x128xf32>
    %8 = vector.broadcast %5 : vector<1x1x128xf32> to vector<5x8x128xf32>
    %9 = arith.mulf %0, %8 : vector<5x8x128xf32>
    %cst = arith.constant dense<0.000000e+00> : vector<5x8xf32>
    %10 = vector.multi_reduction <add>, %9, %cst [2] : vector<5x8x128xf32> to vector<5x8xf32>
    %11 = vector.shape_cast %10 : vector<5x8xf32> to vector<5x8x1xf32>
    %cst_3 = arith.constant 0.00787401571 : f32
    %12 = vector.broadcast %cst_3 : f32 to vector<5x8x1xf32>
    %13 = arith.mulf %11, %12 : vector<5x8x1xf32>
    %14 = vector.broadcast %5 : vector<1x1x128xf32> to vector<5x8x128xf32>
    %15 = arith.mulf %7, %14 : vector<5x8x128xf32>
    %cst_4 = arith.constant dense<0.000000e+00> : vector<5x8xf32>
    %16 = vector.multi_reduction <add>, %15, %cst_4 [2] : vector<5x8x128xf32> to vector<5x8xf32>
    %17 = vector.shape_cast %16 : vector<5x8xf32> to vector<5x8x1xf32>
    %cst_5 = arith.constant 0.00787401571 : f32
    %18 = vector.broadcast %cst_5 : f32 to vector<5x8x1xf32>
    %19 = arith.mulf %17, %18 : vector<5x8x1xf32>
    %20 = vector.broadcast %13 : vector<5x8x1xf32> to vector<5x8x128xf32>
    %21 = arith.subf %0, %20 : vector<5x8x128xf32>
    %22 = vector.broadcast %5 : vector<1x1x128xf32> to vector<5x8x128xf32>
    %23 = arith.mulf %21, %22 : vector<5x8x128xf32>
    %24 = vector.broadcast %19 : vector<5x8x1xf32> to vector<5x8x128xf32>
    %25 = arith.subf %7, %24 : vector<5x8x128xf32>
    %26 = vector.broadcast %5 : vector<1x1x128xf32> to vector<5x8x128xf32>
    %27 = arith.mulf %25, %26 : vector<5x8x128xf32>
    %28 = vector.broadcast %5 : vector<1x1x128xf32> to vector<5x8x128xf32>
    %29 = arith.mulf %0, %28 : vector<5x8x128xf32>
    %cst_6 = arith.constant dense<0.000000e+00> : vector<5x8x8xf32>
    %30 = tpu.matmul %23, %23, %cst_6 {dimension_numbers = #tpu.dot_dimension_numbers<[2], [2], [1], [1], [0, 0, 0, 1, 1, 1], [0], [0]>} : vector<5x8x128xf32>, vector<5x8x128xf32>, vector<5x8x8xf32> -> vector<5x8x8xf32>
    %cst_7 = arith.constant 0.00793650839 : f32
    %31 = vector.broadcast %cst_7 : f32 to vector<5x8x8xf32>
    %32 = arith.mulf %30, %31 : vector<5x8x8xf32>
    %cst_8 = arith.constant dense<0.000000e+00> : vector<5x8x8xf32>
    %33 = tpu.matmul %23, %27, %cst_8 {dimension_numbers = #tpu.dot_dimension_numbers<[2], [2], [1], [1], [0, 0, 0, 1, 1, 1], [0], [0]>} : vector<5x8x128xf32>, vector<5x8x128xf32>, vector<5x8x8xf32> -> vector<5x8x8xf32>
    %cst_9 = arith.constant 0.00793650839 : f32
    %34 = vector.broadcast %cst_9 : f32 to vector<5x8x8xf32>
    %35 = arith.mulf %33, %34 : vector<5x8x8xf32>
    %cst_10 = arith.constant dense<0.000000e+00> : vector<5x8x8xf32>
    %36 = tpu.matmul %29, %29, %cst_10 {dimension_numbers = #tpu.dot_dimension_numbers<[2], [2], [1], [1], [0, 0, 0, 1, 1, 1], [0], [0]>} : vector<5x8x128xf32>, vector<5x8x128xf32>, vector<5x8x8xf32> -> vector<5x8x8xf32>
    %37 = tpu.concatenate %32, %35 in 2 : vector<5x8x8xf32>, vector<5x8x8xf32> -> vector<5x8x16xf32>
    %38 = tpu.iota {dimensions = array<i32: 1>} : vector<1x8x1xi32>
    %39 = vector.extract_strided_slice %37 {offsets = [0, 0, 0], sizes = [5, 1, 1], strides = [1, 1, 1]} : vector<5x8x16xf32> to vector<5x1x1xf32>
    %40 = tpu.reciprocal %39 : vector<5x1x1xf32> -> vector<5x1x1xf32>
    %41 = vector.extract_strided_slice %37 {offsets = [0, 0, 0], sizes = [5, 1, 16], strides = [1, 1, 1]} : vector<5x8x16xf32> to vector<5x1x16xf32>
    %42 = vector.broadcast %40 : vector<5x1x1xf32> to vector<5x1x16xf32>
    %43 = arith.mulf %41, %42 : vector<5x1x16xf32>
    %44 = vector.extract_strided_slice %37 {offsets = [0, 0, 0], sizes = [5, 8, 1], strides = [1, 1, 1]} : vector<5x8x16xf32> to vector<5x8x1xf32>
    %c0_i32 = arith.constant 0 : i32
    %45 = vector.broadcast %c0_i32 : i32 to vector<1x8x1xi32>
    %46 = arith.cmpi eq, %38, %45 : vector<1x8x1xi32>
    %47 = vector.broadcast %44 : vector<5x8x1xf32> to vector<5x8x16xf32>
    %48 = vector.broadcast %43 : vector<5x1x16xf32> to vector<5x8x16xf32>
    %49 = arith.mulf %47, %48 : vector<5x8x16xf32>
    %50 = arith.subf %37, %49 : vector<5x8x16xf32>
    %51 = vector.shape_cast %46 : vector<1x8x1xi1> to vector<1x8x1xi1>
    %52 = vector.broadcast %51 : vector<1x8x1xi1> to vector<5x8x16xi1>
    %53 = vector.shape_cast %43 : vector<5x1x16xf32> to vector<5x1x16xf32>
    %54 = vector.broadcast %53 : vector<5x1x16xf32> to vector<5x8x16xf32>
    %55 = arith.select %52, %54, %50 : vector<5x8x16xi1>, vector<5x8x16xf32>
    %56 = vector.extract_strided_slice %55 {offsets = [0, 1, 1], sizes = [5, 1, 1], strides = [1, 1, 1]} : vector<5x8x16xf32> to vector<5x1x1xf32>
    %57 = tpu.reciprocal %56 : vector<5x1x1xf32> -> vector<5x1x1xf32>
    %58 = vector.extract_strided_slice %55 {offsets = [0, 1, 0], sizes = [5, 1, 16], strides = [1, 1, 1]} : vector<5x8x16xf32> to vector<5x1x16xf32>
    %59 = vector.broadcast %57 : vector<5x1x1xf32> to vector<5x1x16xf32>
    %60 = arith.mulf %58, %59 : vector<5x1x16xf32>
    %61 = vector.extract_strided_slice %55 {offsets = [0, 0, 1], sizes = [5, 8, 1], strides = [1, 1, 1]} : vector<5x8x16xf32> to vector<5x8x1xf32>
    %c1_i32 = arith.constant 1 : i32
    %62 = vector.broadcast %c1_i32 : i32 to vector<1x8x1xi32>
    %63 = arith.cmpi eq, %38, %62 : vector<1x8x1xi32>
    %64 = vector.broadcast %61 : vector<5x8x1xf32> to vector<5x8x16xf32>
    %65 = vector.broadcast %60 : vector<5x1x16xf32> to vector<5x8x16xf32>
    %66 = arith.mulf %64, %65 : vector<5x8x16xf32>
    %67 = arith.subf %55, %66 : vector<5x8x16xf32>
    %68 = vector.shape_cast %63 : vector<1x8x1xi1> to vector<1x8x1xi1>
    %69 = vector.broadcast %68 : vector<1x8x1xi1> to vector<5x8x16xi1>
    %70 = vector.shape_cast %60 : vector<5x1x16xf32> to vector<5x1x16xf32>
    %71 = vector.broadcast %70 : vector<5x1x16xf32> to vector<5x8x16xf32>
    %72 = arith.select %69, %71, %67 : vector<5x8x16xi1>, vector<5x8x16xf32>
    %73 = vector.extract_strided_slice %72 {offsets = [0, 2, 2], sizes = [5, 1, 1], strides = [1, 1, 1]} : vector<5x8x16xf32> to vector<5x1x1xf32>
    %74 = tpu.reciprocal %73 : vector<5x1x1xf32> -> vector<5x1x1xf32>
    %75 = vector.extract_strided_slice %72 {offsets = [0, 2, 0], sizes = [5, 1, 16], strides = [1, 1, 1]} : vector<5x8x16xf32> to vector<5x1x16xf32>
    %76 = vector.broadcast %74 : vector<5x1x1xf32> to vector<5x1x16xf32>
    %77 = arith.mulf %75, %76 : vector<5x1x16xf32>
    %78 = vector.extract_strided_slice %72 {offsets = [0, 0, 2], sizes = [5, 8, 1], strides = [1, 1, 1]} : vector<5x8x16xf32> to vector<5x8x1xf32>
    %c2_i32 = arith.constant 2 : i32
    %79 = vector.broadcast %c2_i32 : i32 to vector<1x8x1xi32>
    %80 = arith.cmpi eq, %38, %79 : vector<1x8x1xi32>
    %81 = vector.broadcast %78 : vector<5x8x1xf32> to vector<5x8x16xf32>
    %82 = vector.broadcast %77 : vector<5x1x16xf32> to vector<5x8x16xf32>
    %83 = arith.mulf %81, %82 : vector<5x8x16xf32>
    %84 = arith.subf %72, %83 : vector<5x8x16xf32>
    %85 = vector.shape_cast %80 : vector<1x8x1xi1> to vector<1x8x1xi1>
    %86 = vector.broadcast %85 : vector<1x8x1xi1> to vector<5x8x16xi1>
    %87 = vector.shape_cast %77 : vector<5x1x16xf32> to vector<5x1x16xf32>
    %88 = vector.broadcast %87 : vector<5x1x16xf32> to vector<5x8x16xf32>
    %89 = arith.select %86, %88, %84 : vector<5x8x16xi1>, vector<5x8x16xf32>
    %90 = vector.extract_strided_slice %89 {offsets = [0, 3, 3], sizes = [5, 1, 1], strides = [1, 1, 1]} : vector<5x8x16xf32> to vector<5x1x1xf32>
    %91 = tpu.reciprocal %90 : vector<5x1x1xf32> -> vector<5x1x1xf32>
    %92 = vector.extract_strided_slice %89 {offsets = [0, 3, 0], sizes = [5, 1, 16], strides = [1, 1, 1]} : vector<5x8x16xf32> to vector<5x1x16xf32>
    %93 = vector.broadcast %91 : vector<5x1x1xf32> to vector<5x1x16xf32>
    %94 = arith.mulf %92, %93 : vector<5x1x16xf32>
    %95 = vector.extract_strided_slice %89 {offsets = [0, 0, 3], sizes = [5, 8, 1], strides = [1, 1, 1]} : vector<5x8x16xf32> to vector<5x8x1xf32>
    %c3_i32 = arith.constant 3 : i32
    %96 = vector.broadcast %c3_i32 : i32 to vector<1x8x1xi32>
    %97 = arith.cmpi eq, %38, %96 : vector<1x8x1xi32>
    %98 = vector.broadcast %95 : vector<5x8x1xf32> to vector<5x8x16xf32>
    %99 = vector.broadcast %94 : vector<5x1x16xf32> to vector<5x8x16xf32>
    %100 = arith.mulf %98, %99 : vector<5x8x16xf32>
    %101 = arith.subf %89, %100 : vector<5x8x16xf32>
    %102 = vector.shape_cast %97 : vector<1x8x1xi1> to vector<1x8x1xi1>
    %103 = vector.broadcast %102 : vector<1x8x1xi1> to vector<5x8x16xi1>
    %104 = vector.shape_cast %94 : vector<5x1x16xf32> to vector<5x1x16xf32>
    %105 = vector.broadcast %104 : vector<5x1x16xf32> to vector<5x8x16xf32>
    %106 = arith.select %103, %105, %101 : vector<5x8x16xi1>, vector<5x8x16xf32>
    %107 = vector.extract_strided_slice %106 {offsets = [0, 4, 4], sizes = [5, 1, 1], strides = [1, 1, 1]} : vector<5x8x16xf32> to vector<5x1x1xf32>
    %108 = tpu.reciprocal %107 : vector<5x1x1xf32> -> vector<5x1x1xf32>
    %109 = vector.extract_strided_slice %106 {offsets = [0, 4, 0], sizes = [5, 1, 16], strides = [1, 1, 1]} : vector<5x8x16xf32> to vector<5x1x16xf32>
    %110 = vector.broadcast %108 : vector<5x1x1xf32> to vector<5x1x16xf32>
    %111 = arith.mulf %109, %110 : vector<5x1x16xf32>
    %112 = vector.extract_strided_slice %106 {offsets = [0, 0, 4], sizes = [5, 8, 1], strides = [1, 1, 1]} : vector<5x8x16xf32> to vector<5x8x1xf32>
    %c4_i32 = arith.constant 4 : i32
    %113 = vector.broadcast %c4_i32 : i32 to vector<1x8x1xi32>
    %114 = arith.cmpi eq, %38, %113 : vector<1x8x1xi32>
    %115 = vector.broadcast %112 : vector<5x8x1xf32> to vector<5x8x16xf32>
    %116 = vector.broadcast %111 : vector<5x1x16xf32> to vector<5x8x16xf32>
    %117 = arith.mulf %115, %116 : vector<5x8x16xf32>
    %118 = arith.subf %106, %117 : vector<5x8x16xf32>
    %119 = vector.shape_cast %114 : vector<1x8x1xi1> to vector<1x8x1xi1>
    %120 = vector.broadcast %119 : vector<1x8x1xi1> to vector<5x8x16xi1>
    %121 = vector.shape_cast %111 : vector<5x1x16xf32> to vector<5x1x16xf32>
    %122 = vector.broadcast %121 : vector<5x1x16xf32> to vector<5x8x16xf32>
    %123 = arith.select %120, %122, %118 : vector<5x8x16xi1>, vector<5x8x16xf32>
    %124 = vector.extract_strided_slice %123 {offsets = [0, 5, 5], sizes = [5, 1, 1], strides = [1, 1, 1]} : vector<5x8x16xf32> to vector<5x1x1xf32>
    %125 = tpu.reciprocal %124 : vector<5x1x1xf32> -> vector<5x1x1xf32>
    %126 = vector.extract_strided_slice %123 {offsets = [0, 5, 0], sizes = [5, 1, 16], strides = [1, 1, 1]} : vector<5x8x16xf32> to vector<5x1x16xf32>
    %127 = vector.broadcast %125 : vector<5x1x1xf32> to vector<5x1x16xf32>
    %128 = arith.mulf %126, %127 : vector<5x1x16xf32>
    %129 = vector.extract_strided_slice %123 {offsets = [0, 0, 5], sizes = [5, 8, 1], strides = [1, 1, 1]} : vector<5x8x16xf32> to vector<5x8x1xf32>
    %c5_i32 = arith.constant 5 : i32
    %130 = vector.broadcast %c5_i32 : i32 to vector<1x8x1xi32>
    %131 = arith.cmpi eq, %38, %130 : vector<1x8x1xi32>
    %132 = vector.broadcast %129 : vector<5x8x1xf32> to vector<5x8x16xf32>
    %133 = vector.broadcast %128 : vector<5x1x16xf32> to vector<5x8x16xf32>
    %134 = arith.mulf %132, %133 : vector<5x8x16xf32>
    %135 = arith.subf %123, %134 : vector<5x8x16xf32>
    %136 = vector.shape_cast %131 : vector<1x8x1xi1> to vector<1x8x1xi1>
    %137 = vector.broadcast %136 : vector<1x8x1xi1> to vector<5x8x16xi1>
    %138 = vector.shape_cast %128 : vector<5x1x16xf32> to vector<5x1x16xf32>
    %139 = vector.broadcast %138 : vector<5x1x16xf32> to vector<5x8x16xf32>
    %140 = arith.select %137, %139, %135 : vector<5x8x16xi1>, vector<5x8x16xf32>
    %141 = vector.extract_strided_slice %140 {offsets = [0, 6, 6], sizes = [5, 1, 1], strides = [1, 1, 1]} : vector<5x8x16xf32> to vector<5x1x1xf32>
    %142 = tpu.reciprocal %141 : vector<5x1x1xf32> -> vector<5x1x1xf32>
    %143 = vector.extract_strided_slice %140 {offsets = [0, 6, 0], sizes = [5, 1, 16], strides = [1, 1, 1]} : vector<5x8x16xf32> to vector<5x1x16xf32>
    %144 = vector.broadcast %142 : vector<5x1x1xf32> to vector<5x1x16xf32>
    %145 = arith.mulf %143, %144 : vector<5x1x16xf32>
    %146 = vector.extract_strided_slice %140 {offsets = [0, 0, 6], sizes = [5, 8, 1], strides = [1, 1, 1]} : vector<5x8x16xf32> to vector<5x8x1xf32>
    %c6_i32 = arith.constant 6 : i32
    %147 = vector.broadcast %c6_i32 : i32 to vector<1x8x1xi32>
    %148 = arith.cmpi eq, %38, %147 : vector<1x8x1xi32>
    %149 = vector.broadcast %146 : vector<5x8x1xf32> to vector<5x8x16xf32>
    %150 = vector.broadcast %145 : vector<5x1x16xf32> to vector<5x8x16xf32>
    %151 = arith.mulf %149, %150 : vector<5x8x16xf32>
    %152 = arith.subf %140, %151 : vector<5x8x16xf32>
    %153 = vector.shape_cast %148 : vector<1x8x1xi1> to vector<1x8x1xi1>
    %154 = vector.broadcast %153 : vector<1x8x1xi1> to vector<5x8x16xi1>
    %155 = vector.shape_cast %145 : vector<5x1x16xf32> to vector<5x1x16xf32>
    %156 = vector.broadcast %155 : vector<5x1x16xf32> to vector<5x8x16xf32>
    %157 = arith.select %154, %156, %152 : vector<5x8x16xi1>, vector<5x8x16xf32>
    %158 = vector.extract_strided_slice %157 {offsets = [0, 7, 7], sizes = [5, 1, 1], strides = [1, 1, 1]} : vector<5x8x16xf32> to vector<5x1x1xf32>
    %159 = tpu.reciprocal %158 : vector<5x1x1xf32> -> vector<5x1x1xf32>
    %160 = vector.extract_strided_slice %157 {offsets = [0, 7, 0], sizes = [5, 1, 16], strides = [1, 1, 1]} : vector<5x8x16xf32> to vector<5x1x16xf32>
    %161 = vector.broadcast %159 : vector<5x1x1xf32> to vector<5x1x16xf32>
    %162 = arith.mulf %160, %161 : vector<5x1x16xf32>
    %163 = vector.extract_strided_slice %157 {offsets = [0, 0, 7], sizes = [5, 8, 1], strides = [1, 1, 1]} : vector<5x8x16xf32> to vector<5x8x1xf32>
    %c7_i32 = arith.constant 7 : i32
    %164 = vector.broadcast %c7_i32 : i32 to vector<1x8x1xi32>
    %165 = arith.cmpi eq, %38, %164 : vector<1x8x1xi32>
    %166 = vector.broadcast %163 : vector<5x8x1xf32> to vector<5x8x16xf32>
    %167 = vector.broadcast %162 : vector<5x1x16xf32> to vector<5x8x16xf32>
    %168 = arith.mulf %166, %167 : vector<5x8x16xf32>
    %169 = arith.subf %157, %168 : vector<5x8x16xf32>
    %170 = vector.shape_cast %165 : vector<1x8x1xi1> to vector<1x8x1xi1>
    %171 = vector.broadcast %170 : vector<1x8x1xi1> to vector<5x8x16xi1>
    %172 = vector.shape_cast %162 : vector<5x1x16xf32> to vector<5x1x16xf32>
    %173 = vector.broadcast %172 : vector<5x1x16xf32> to vector<5x8x16xf32>
    %174 = arith.select %171, %173, %169 : vector<5x8x16xi1>, vector<5x8x16xf32>
    %175 = vector.extract_strided_slice %174 {offsets = [0, 0, 8], sizes = [5, 8, 8], strides = [1, 1, 1]} : vector<5x8x16xf32> to vector<5x8x8xf32>
    %cst_11 = arith.constant dense<0.000000e+00> : vector<5x8x128xf32>
    %176 = tpu.matmul %175, %23, %cst_11 {dimension_numbers = #tpu.dot_dimension_numbers<[1], [1], [2], [2], [0, 0, 0, 2, 1, 2], [0], [0]>} : vector<5x8x8xf32>, vector<5x8x128xf32>, vector<5x8x128xf32> -> vector<5x8x128xf32>
    %177 = arith.subf %27, %176 : vector<5x8x128xf32>
    %cst_12 = arith.constant dense<0.000000e+00> : vector<5x8x8xf32>
    %178 = tpu.matmul %177, %29, %cst_12 {dimension_numbers = #tpu.dot_dimension_numbers<[2], [2], [1], [1], [0, 0, 0, 1, 1, 1], [0], [0]>} : vector<5x8x128xf32>, vector<5x8x128xf32>, vector<5x8x8xf32> -> vector<5x8x8xf32>
    %cst_13 = arith.constant 1.270000e+02 : f32
    %179 = vector.broadcast %cst_13 : f32 to vector<5x8x1xf32>
    %180 = arith.mulf %13, %179 : vector<5x8x1xf32>
    %cst_14 = arith.constant dense<0.000000e+00> : vector<5x8xf32>
    %181 = vector.multi_reduction <add>, %177, %cst_14 [2] : vector<5x8x128xf32> to vector<5x8xf32>
    %182 = vector.shape_cast %181 : vector<5x8xf32> to vector<5x8x1xf32>
    %183 = arith.mulf %177, %177 : vector<5x8x128xf32>
    %cst_15 = arith.constant dense<0.000000e+00> : vector<5x8xf32>
    %184 = vector.multi_reduction <add>, %183, %cst_15 [2] : vector<5x8x128xf32> to vector<5x8xf32>
    %185 = vector.shape_cast %184 : vector<5x8xf32> to vector<5x8x1xf32>
    %cst_16 = arith.constant 0.000000e+00 : f32
    %186 = vector.broadcast %cst_16 : f32 to vector<5x8x93xf32>
    %187 = tpu.concatenate %32, %175, %36, %178, %180, %182, %185, %186 in 2 : vector<5x8x8xf32>, vector<5x8x8xf32>, vector<5x8x8xf32>, vector<5x8x8xf32>, vector<5x8x1xf32>, vector<5x8x1xf32>, vector<5x8x1xf32>, vector<5x8x93xf32> -> vector<5x8x128xf32>
    %c0_17 = arith.constant 0 : index
    %c0_18 = arith.constant 0 : index
    %c0_19 = arith.constant 0 : index
    %188 = vector.load %arg2[%c0_17, %c0_18, %c0_19] : memref<5x8x128xf32, #tpu.memory_space<vmem>>, vector<5x8x128xf32>
    tpu.vector_store %arg2[%c0_17, %c0_18, %c0_19], %187 {strides = array<i32>} : memref<5x8x128xf32, #tpu.memory_space<vmem>>, vector<5x8x128xf32>,
    return
  }
  func.func @transform_0(%arg0: i32) -> (i32, i32, i32) {
    %c0_i32 = arith.constant 0 : i32
    %c0_i32_0 = arith.constant 0 : i32
    %c0_i32_1 = arith.constant 0 : i32
    return %arg0, %c0_i32, %c0_i32_0 : i32, i32, i32
  }
  func.func @transform_1(%arg0: i32) -> (i32, i32, i32) {
    %c0_i32 = arith.constant 0 : i32
    %c0_i32_0 = arith.constant 0 : i32
    %c0_i32_1 = arith.constant 0 : i32
    return %arg0, %c0_i32, %c0_i32_0 : i32, i32, i32
  }
}

</mosaic_0001>

<llo_original>
// kernel: liang_forward.1
$region0: #{liang_forward.1}
  #allocation0 [shape = 'u32[]', space=smem, size = 0x4, offset = 0x4, fixed_abs, tag = 'smem constant byte address 0x4 - core index']
  #allocation1 [shape = 'u32[144,128]{1,0:T(1,128)}', space=vmem, size = 0x12000, scoped, tag = 'internal scratch']
  %s0 = inlined_call_operand.vmem [shape: f32[5,8,128], index: 0, kind: input, shape index: {}]
  %s1 = inlined_call_operand.vmem [shape: f32[5,8,128], index: 1, kind: output, shape index: {}]
  %s2 = sld [smem:[#allocation0]]
  $region14: #{liang_forward.1} parent=0
    _
  %s4 = ssub.s32 1, %s2
  %s5 = scalar_select 0, %s4, %s2
  // Predicated region
  $region2: #{liang_forward.1} parent=0 // pred_check
    _
  $region3: #{liang_forward.1} parent=0 // pred_check_branch
    %7 = sbr.rel (0) target = $region5
  $region4: #{liang_forward.1} parent=0 // pred_region
    _
  $region5: #{liang_forward.1} parent=0 // pred_fallthru
    _
  %v8 = vld [vmem:[%s0] sm:$0xff]
  %v9 = vld [vmem:[%s0 + $0x8] sm:$0xff]
  %v10 = vld [vmem:[%s0 + $0x10] sm:$0xff]
  %v11 = vld [vmem:[%s0 + $0x18] sm:$0xff]
  %v12 = vld [vmem:[%s0 + $0x20] sm:$0xff]
  %v13 = vlaneseq
  %v14 = vand.u32 %v13, 127
  %vm15 = vcmp.lt.s32.totalorder %v14, 127
  %v16 = vsel %vm15, 1, 0
  %v17 = vcvt.s32.f32 %v16
  %18 = vrot.lane.b32.xlu0 %v8, 127
  %v19 = vpop.permute.xlu0 %18
  %20 = vrot.lane.b32.xlu0 %v9, 127
  %v21 = vpop.permute.xlu0 %20
  %22 = vrot.lane.b32.xlu0 %v10, 127
  %v23 = vpop.permute.xlu0 %22
  %24 = vrot.lane.b32.xlu0 %v11, 127
  %v25 = vpop.permute.xlu0 %24
  %26 = vrot.lane.b32.xlu0 %v12, 127
  %v27 = vpop.permute.xlu0 %26
  %v28 = vsub.f32 %v19, %v8
  %v29 = vsub.f32 %v21, %v9
  %v30 = vsub.f32 %v23, %v10
  %v31 = vsub.f32 %v25, %v11
  %v32 = vsub.f32 %v27, %v12
  %v33 = vmul.f32 %v8, %v17
  %v34 = vmul.f32 %v9, %v17
  %v35 = vmul.f32 %v10, %v17
  %v36 = vmul.f32 %v11, %v17
  %v37 = vmul.f32 %v12, %v17
  %38 = vadd.xlane.f32.xlu0 %v33
  %v39 = vpop.xlane.xlu0 %38
  %40 = vadd.xlane.f32.xlu0 %v34
  %v41 = vpop.xlane.xlu0 %40
  %42 = vadd.xlane.f32.xlu0 %v35
  %v43 = vpop.xlane.xlu0 %42
  %44 = vadd.xlane.f32.xlu0 %v36
  %v45 = vpop.xlane.xlu0 %44
  %46 = vadd.xlane.f32.xlu0 %v37
  %v47 = vpop.xlane.xlu0 %46
  %v48 = vmul.f32 %v39, 0.007874016
  %v49 = vmul.f32 %v41, 0.007874016
  %v50 = vmul.f32 %v43, 0.007874016
  %v51 = vmul.f32 %v45, 0.007874016
  %v52 = vmul.f32 %v47, 0.007874016
  %v53 = vmul.f32 %v28, %v17
  %v54 = vmul.f32 %v29, %v17
  %v55 = vmul.f32 %v30, %v17
  %v56 = vmul.f32 %v31, %v17
  %v57 = vmul.f32 %v32, %v17
  %58 = vadd.xlane.f32.xlu0 %v53
  %v59 = vpop.xlane.xlu0 %58
  %60 = vadd.xlane.f32.xlu0 %v54
  %v61 = vpop.xlane.xlu0 %60
  %62 = vadd.xlane.f32.xlu0 %v55
  %v63 = vpop.xlane.xlu0 %62
  %64 = vadd.xlane.f32.xlu0 %v56
  %v65 = vpop.xlane.xlu0 %64
  %66 = vadd.xlane.f32.xlu0 %v57
  %v67 = vpop.xlane.xlu0 %66
  %v68 = vmul.f32 %v59, 0.007874016
  %v69 = vmul.f32 %v61, 0.007874016
  %v70 = vmul.f32 %v63, 0.007874016
  %v71 = vmul.f32 %v65, 0.007874016
  %v72 = vmul.f32 %v67, 0.007874016
  %v73 = vsub.f32 %v8, %v48
  %v74 = vsub.f32 %v9, %v49
  %v75 = vsub.f32 %v10, %v50
  %v76 = vsub.f32 %v11, %v51
  %v77 = vsub.f32 %v12, %v52
  %v78 = vmul.f32 %v73, %v17
  %v79 = vmul.f32 %v74, %v17
  %v80 = vmul.f32 %v75, %v17
  %v81 = vmul.f32 %v76, %v17
  %v82 = vmul.f32 %v77, %v17
  %v83 = vsub.f32 %v28, %v68
  %v84 = vsub.f32 %v29, %v69
  %v85 = vsub.f32 %v30, %v70
  %v86 = vsub.f32 %v31, %v71
  %v87 = vsub.f32 %v32, %v72
  %v88 = vmul.f32 %v83, %v17
  %v89 = vmul.f32 %v84, %v17
  %v90 = vmul.f32 %v85, %v17
  %v91 = vmul.f32 %v86, %v17
  %v92 = vmul.f32 %v87, %v17
  %93 = vmatprep.subr.mxu0 0.0
  %94 = vmatpush1.xpose.msra.mxu0 %v78
  %95 = vmatprep.subr.mxu0 0.0
  %96 = vmatpush1.xpose.msra.mxu0 0.0
  %97 = vmatprep.subr.mxu0 0.0
  %98 = vmatpush1.xpose.msra.mxu0 0.0
  %99 = vmatprep.subr.mxu0 0.0
  %100 = vmatpush1.xpose.msra.mxu0 0.0
  %101 = vmatprep.subr.mxu0 0.0
  %102 = vmatpush1.xpose.msra.mxu0 0.0
  %103 = vmatprep.subr.mxu0 0.0
  %104 = vmatpush1.xpose.msra.mxu0 0.0
  %105 = vmatprep.subr.mxu0 0.0
  %106 = vmatpush1.xpose.msra.mxu0 0.0
  %107 = vmatprep.subr.mxu0 0.0
  %108 = vmatpush1.xpose.msra.mxu0 0.0
  %109 = vmatprep.subr.mxu0 0.0
  %110 = vmatpush1.xpose.msra.mxu0 0.0
  %111 = vmatprep.subr.mxu0 0.0
  %112 = vmatpush1.xpose.msra.mxu0 0.0
  %113 = vmatprep.subr.mxu0 0.0
  %114 = vmatpush1.xpose.msra.mxu0 0.0
  %115 = vmatprep.subr.mxu0 0.0
  %116 = vmatpush1.xpose.msra.mxu0 0.0
  %117 = vmatprep.subr.mxu0 0.0
  %118 = vmatpush1.xpose.msra.mxu0 0.0
  %119 = vmatprep.subr.mxu0 0.0
  %120 = vmatpush1.xpose.msra.mxu0 0.0
  %121 = vmatprep.subr.mxu0 0.0
  %122 = vmatpush1.xpose.msra.mxu0 0.0
  %123 = vmatprep.subr.mxu0 0.0
  %124 = vmatpush1.xpose.msra.mxu0 0.0
  %125 = vmatprep.subr.mxu0 0.0
  %126 = vmatpush1.xpose.msra.mxu0 0.0
  %127 = vmatprep.subr.mxu0 0.0
  %128 = vmatpush1.xpose.msra.mxu0 0.0
  %129 = vmatprep.subr.mxu0 0.0
  %130 = vmatpush1.xpose.msra.mxu0 0.0
  %131 = vmatprep.subr.mxu0 0.0
  %132 = vmatpush1.xpose.msra.mxu0 0.0
  %133 = vmatprep.subr.mxu0 0.0
  %134 = vmatpush1.xpose.msra.mxu0 0.0
  %135 = vmatprep.subr.mxu0 0.0
  %136 = vmatpush1.xpose.msra.mxu0 0.0
  %137 = vmatprep.subr.mxu0 0.0
  %138 = vmatpush1.xpose.msra.mxu0 0.0
  %139 = vmatprep.subr.mxu0 0.0
  %140 = vmatpush1.xpose.msra.mxu0 0.0
  %141 = vmatprep.subr.mxu0 0.0
  %142 = vmatpush1.xpose.msra.mxu0 0.0
  %143 = vmatprep.subr.mxu0 0.0
  %144 = vmatpush1.xpose.msra.mxu0 0.0
  %145 = vmatprep.subr.mxu0 0.0
  %146 = vmatpush1.xpose.msra.mxu0 0.0
  %147 = vmatprep.subr.mxu0 0.0
  %148 = vmatpush1.xpose.msra.mxu0 0.0
  %149 = vmatprep.subr.mxu0 0.0
  %150 = vmatpush1.xpose.msra.mxu0 0.0
  %151 = vmatprep.subr.mxu0 0.0
  %152 = vmatpush1.xpose.msra.mxu0 0.0
  %153 = vmatprep.subr.mxu0 0.0
  %154 = vmatpush1.xpose.msra.mxu0 0.0
  %155 = vmatprep.subr.mxu0 0.0
  %156 = vmatpush1.xpose.msra.mxu0 0.0
  %157 = vmatprep.mubr.f32.mxu0 0.0
  %158 = vmatmul.mubr.f32.gmra.mrb[0].mxu0 %v78
  %v159 = vpop.f32.mrb[0].mxu0
  %v160 = vadd.f32 0.0, %v159
  %v161 = vpop.f32.mrb[0].mxu0
  %162 = vdwg.mxu0
  %163 = vmatprep.subr.mxu0 0.0
  %164 = vmatpush1.xpose.msra.mxu0 %v79
  %165 = vmatprep.subr.mxu0 0.0
  %166 = vmatpush1.xpose.msra.mxu0 0.0
  %167 = vmatprep.subr.mxu0 0.0
  %168 = vmatpush1.xpose.msra.mxu0 0.0
  %169 = vmatprep.subr.mxu0 0.0
  %170 = vmatpush1.xpose.msra.mxu0 0.0
  %171 = vmatprep.subr.mxu0 0.0
  %172 = vmatpush1.xpose.msra.mxu0 0.0
  %173 = vmatprep.subr.mxu0 0.0
  %174 = vmatpush1.xpose.msra.mxu0 0.0
  %175 = vmatprep.subr.mxu0 0.0
  %176 = vmatpush1.xpose.msra.mxu0 0.0
  %177 = vmatprep.subr.mxu0 0.0
  %178 = vmatpush1.xpose.msra.mxu0 0.0
  %179 = vmatprep.subr.mxu0 0.0
  %180 = vmatpush1.xpose.msra.mxu0 0.0
  %181 = vmatprep.subr.mxu0 0.0
  %182 = vmatpush1.xpose.msra.mxu0 0.0
  %183 = vmatprep.subr.mxu0 0.0
  %184 = vmatpush1.xpose.msra.mxu0 0.0
  %185 = vmatprep.subr.mxu0 0.0
  %186 = vmatpush1.xpose.msra.mxu0 0.0
  %187 = vmatprep.subr.mxu0 0.0
  %188 = vmatpush1.xpose.msra.mxu0 0.0
  %189 = vmatprep.subr.mxu0 0.0
  %190 = vmatpush1.xpose.msra.mxu0 0.0
  %191 = vmatprep.subr.mxu0 0.0
  %192 = vmatpush1.xpose.msra.mxu0 0.0
  %193 = vmatprep.subr.mxu0 0.0
  %194 = vmatpush1.xpose.msra.mxu0 0.0
  %195 = vmatprep.subr.mxu0 0.0
  %196 = vmatpush1.xpose.msra.mxu0 0.0
  %197 = vmatprep.subr.mxu0 0.0
  %198 = vmatpush1.xpose.msra.mxu0 0.0
  %199 = vmatprep.subr.mxu0 0.0
  %200 = vmatpush1.xpose.msra.mxu0 0.0
  %201 = vmatprep.subr.mxu0 0.0
  %202 = vmatpush1.xpose.msra.mxu0 0.0
  %203 = vmatprep.subr.mxu0 0.0
  %204 = vmatpush1.xpose.msra.mxu0 0.0
  %205 = vmatprep.subr.mxu0 0.0
  %206 = vmatpush1.xpose.msra.mxu0 0.0
  %207 = vmatprep.subr.mxu0 0.0
  %208 = vmatpush1.xpose.msra.mxu0 0.0
  %209 = vmatprep.subr.mxu0 0.0
  %210 = vmatpush1.xpose.msra.mxu0 0.0
  %211 = vmatprep.subr.mxu0 0.0
  %212 = vmatpush1.xpose.msra.mxu0 0.0
  %213 = vmatprep.subr.mxu0 0.0
  %214 = vmatpush1.xpose.msra.mxu0 0.0
  %215 = vmatprep.subr.mxu0 0.0
  %216 = vmatpush1.xpose.msra.mxu0 0.0
  %217 = vmatprep.subr.mxu0 0.0
  %218 = vmatpush1.xpose.msra.mxu0 0.0
  %219 = vmatprep.subr.mxu0 0.0
  %220 = vmatpush1.xpose.msra.mxu0 0.0
  %221 = vmatprep.subr.mxu0 0.0
  %222 = vmatpush1.xpose.msra.mxu0 0.0
  %223 = vmatprep.subr.mxu0 0.0
  %224 = vmatpush1.xpose.msra.mxu0 0.0
  %225 = vmatprep.subr.mxu0 0.0
  %226 = vmatpush1.xpose.msra.mxu0 0.0
  %227 = vmatprep.mubr.f32.mxu0 0.0
  %228 = vmatmul.mubr.f32.gmra.mrb[0].mxu0 %v79
  %v229 = vpop.f32.mrb[0].mxu0
  %v230 = vadd.f32 0.0, %v229
  %v231 = vpop.f32.mrb[0].mxu0
  %232 = vdwg.mxu0
  %233 = vmatprep.subr.mxu0 0.0
  %234 = vmatpush1.xpose.msra.mxu0 %v80
  %235 = vmatprep.subr.mxu0 0.0
  %236 = vmatpush1.xpose.msra.mxu0 0.0
  %237 = vmatprep.subr.mxu0 0.0
  %238 = vmatpush1.xpose.msra.mxu0 0.0
  %239 = vmatprep.subr.mxu0 0.0
  %240 = vmatpush1.xpose.msra.mxu0 0.0
  %241 = vmatprep.subr.mxu0 0.0
  %242 = vmatpush1.xpose.msra.mxu0 0.0
  %243 = vmatprep.subr.mxu0 0.0
  %244 = vmatpush1.xpose.msra.mxu0 0.0
  %245 = vmatprep.subr.mxu0 0.0
  %246 = vmatpush1.xpose.msra.mxu0 0.0
  %247 = vmatprep.subr.mxu0 0.0
  %248 = vmatpush1.xpose.msra.mxu0 0.0
  %249 = vmatprep.subr.mxu0 0.0
  %250 = vmatpush1.xpose.msra.mxu0 0.0
  %251 = vmatprep.subr.mxu0 0.0
  %252 = vmatpush1.xpose.msra.mxu0 0.0
  %253 = vmatprep.subr.mxu0 0.0
  %254 = vmatpush1.xpose.msra.mxu0 0.0
  %255 = vmatprep.subr.mxu0 0.0
  %256 = vmatpush1.xpose.msra.mxu0 0.0
  %257 = vmatprep.subr.mxu0 0.0
  %258 = vmatpush1.xpose.msra.mxu0 0.0
  %259 = vmatprep.subr.mxu0 0.0
  %260 = vmatpush1.xpose.msra.mxu0 0.0
  %261 = vmatprep.subr.mxu0 0.0
  %262 = vmatpush1.xpose.msra.mxu0 0.0
  %263 = vmatprep.subr.mxu0 0.0
  %264 = vmatpush1.xpose.msra.mxu0 0.0
  %265 = vmatprep.subr.mxu0 0.0
  %266 = vmatpush1.xpose.msra.mxu0 0.0
  %267 = vmatprep.subr.mxu0 0.0
  %268 = vmatpush1.xpose.msra.mxu0 0.0
  %269 = vmatprep.subr.mxu0 0.0
  %270 = vmatpush1.xpose.msra.mxu0 0.0
  %271 = vmatprep.subr.mxu0 0.0
  %272 = vmatpush1.xpose.msra.mxu0 0.0
  %273 = vmatprep.subr.mxu0 0.0
  %274 = vmatpush1.xpose.msra.mxu0 0.0
  %275 = vmatprep.subr.mxu0 0.0
  %276 = vmatpush1.xpose.msra.mxu0 0.0
  %277 = vmatprep.subr.mxu0 0.0
  %278 = vmatpush1.xpose.msra.mxu0 0.0
  %279 = vmatprep.subr.mxu0 0.0
  %280 = vmatpush1.xpose.msra.mxu0 0.0
  %281 = vmatprep.subr.mxu0 0.0
  %282 = vmatpush1.xpose.msra.mxu0 0.0
  %283 = vmatprep.subr.mxu0 0.0
  %284 = vmatpush1.xpose.msra.mxu0 0.0
  %285 = vmatprep.subr.mxu0 0.0
  %286 = vmatpush1.xpose.msra.mxu0 0.0
  %287 = vmatprep.subr.mxu0 0.0
  %288 = vmatpush1.xpose.msra.mxu0 0.0
  %289 = vmatprep.subr.mxu0 0.0
  %290 = vmatpush1.xpose.msra.mxu0 0.0
  %291 = vmatprep.subr.mxu0 0.0
  %292 = vmatpush1.xpose.msra.mxu0 0.0
  %293 = vmatprep.subr.mxu0 0.0
  %294 = vmatpush1.xpose.msra.mxu0 0.0
  %295 = vmatprep.subr.mxu0 0.0
  %296 = vmatpush1.xpose.msra.mxu0 0.0
  %297 = vmatprep.mubr.f32.mxu0 0.0
  %298 = vmatmul.mubr.f32.gmra.mrb[0].mxu0 %v80
  %v299 = vpop.f32.mrb[0].mxu0
  %v300 = vadd.f32 0.0, %v299
  %v301 = vpop.f32.mrb[0].mxu0
  %302 = vdwg.mxu0
  %303 = vmatprep.subr.mxu0 0.0
  %304 = vmatpush1.xpose.msra.mxu0 %v81
  %305 = vmatprep.subr.mxu0 0.0
  %306 = vmatpush1.xpose.msra.mxu0 0.0
  %307 = vmatprep.subr.mxu0 0.0
  %308 = vmatpush1.xpose.msra.mxu0 0.0
  %309 = vmatprep.subr.mxu0 0.0
  %310 = vmatpush1.xpose.msra.mxu0 0.0
  %311 = vmatprep.subr.mxu0 0.0
  %312 = vmatpush1.xpose.msra.mxu0 0.0
  %313 = vmatprep.subr.mxu0 0.0
  %314 = vmatpush1.xpose.msra.mxu0 0.0
  %315 = vmatprep.subr.mxu0 0.0
  %316 = vmatpush1.xpose.msra.mxu0 0.0
  %317 = vmatprep.subr.mxu0 0.0
  %318 = vmatpush1.xpose.msra.mxu0 0.0
  %319 = vmatprep.subr.mxu0 0.0
  %320 = vmatpush1.xpose.msra.mxu0 0.0
  %321 = vmatprep.subr.mxu0 0.0
  %322 = vmatpush1.xpose.msra.mxu0 0.0
  %323 = vmatprep.subr.mxu0 0.0
  %324 = vmatpush1.xpose.msra.mxu0 0.0
  %325 = vmatprep.subr.mxu0 0.0
  %326 = vmatpush1.xpose.msra.mxu0 0.0
  %327 = vmatprep.subr.mxu0 0.0
  %328 = vmatpush1.xpose.msra.mxu0 0.0
  %329 = vmatprep.subr.mxu0 0.0
  %330 = vmatpush1.xpose.msra.mxu0 0.0
  %331 = vmatprep.subr.mxu0 0.0
  %332 = vmatpush1.xpose.msra.mxu0 0.0
  %333 = vmatprep.subr.mxu0 0.0
  %334 = vmatpush1.xpose.msra.mxu0 0.0
  %335 = vmatprep.subr.mxu0 0.0
  %336 = vmatpush1.xpose.msra.mxu0 0.0
  %337 = vmatprep.subr.mxu0 0.0
  %338 = vmatpush1.xpose.msra.mxu0 0.0
  %339 = vmatprep.subr.mxu0 0.0
  %340 = vmatpush1.xpose.msra.mxu0 0.0
  %341 = vmatprep.subr.mxu0 0.0
  %342 = vmatpush1.xpose.msra.mxu0 0.0
  %343 = vmatprep.subr.mxu0 0.0
  %344 = vmatpush1.xpose.msra.mxu0 0.0
  %345 = vmatprep.subr.mxu0 0.0
  %346 = vmatpush1.xpose.msra.mxu0 0.0
  %347 = vmatprep.subr.mxu0 0.0
  %348 = vmatpush1.xpose.msra.mxu0 0.0
  %349 = vmatprep.subr.mxu0 0.0
  %350 = vmatpush1.xpose.msra.mxu0 0.0
  %351 = vmatprep.subr.mxu0 0.0
  %352 = vmatpush1.xpose.msra.mxu0 0.0
  %353 = vmatprep.subr.mxu0 0.0
  %354 = vmatpush1.xpose.msra.mxu0 0.0
  %355 = vmatprep.subr.mxu0 0.0
  %356 = vmatpush1.xpose.msra.mxu0 0.0
  %357 = vmatprep.subr.mxu0 0.0
  %358 = vmatpush1.xpose.msra.mxu0 0.0
  %359 = vmatprep.subr.mxu0 0.0
  %360 = vmatpush1.xpose.msra.mxu0 0.0
  %361 = vmatprep.subr.mxu0 0.0
  %362 = vmatpush1.xpose.msra.mxu0 0.0
  %363 = vmatprep.subr.mxu0 0.0
  %364 = vmatpush1.xpose.msra.mxu0 0.0
  %365 = vmatprep.subr.mxu0 0.0
  %366 = vmatpush1.xpose.msra.mxu0 0.0
  %367 = vmatprep.mubr.f32.mxu0 0.0
  %368 = vmatmul.mubr.f32.gmra.mrb[0].mxu0 %v81
  %v369 = vpop.f32.mrb[0].mxu0
  %v370 = vadd.f32 0.0, %v369
  %v371 = vpop.f32.mrb[0].mxu0
  %372 = vdwg.mxu0
  %373 = vmatprep.subr.mxu0 0.0
  %374 = vmatpush1.xpose.msra.mxu0 %v82
  %375 = vmatprep.subr.mxu0 0.0
  %376 = vmatpush1.xpose.msra.mxu0 0.0
  %377 = vmatprep.subr.mxu0 0.0
  %378 = vmatpush1.xpose.msra.mxu0 0.0
  %379 = vmatprep.subr.mxu0 0.0
  %380 = vmatpush1.xpose.msra.mxu0 0.0
  %381 = vmatprep.subr.mxu0 0.0
  %382 = vmatpush1.xpose.msra.mxu0 0.0
  %383 = vmatprep.subr.mxu0 0.0
  %384 = vmatpush1.xpose.msra.mxu0 0.0
  %385 = vmatprep.subr.mxu0 0.0
  %386 = vmatpush1.xpose.msra.mxu0 0.0
  %387 = vmatprep.subr.mxu0 0.0
  %388 = vmatpush1.xpose.msra.mxu0 0.0
  %389 = vmatprep.subr.mxu0 0.0
  %390 = vmatpush1.xpose.msra.mxu0 0.0
  %391 = vmatprep.subr.mxu0 0.0
  %392 = vmatpush1.xpose.msra.mxu0 0.0
  %393 = vmatprep.subr.mxu0 0.0
  %394 = vmatpush1.xpose.msra.mxu0 0.0
  %395 = vmatprep.subr.mxu0 0.0
  %396 = vmatpush1.xpose.msra.mxu0 0.0
  %397 = vmatprep.subr.mxu0 0.0
  %398 = vmatpush1.xpose.msra.mxu0 0.0
  %399 = vmatprep.subr.mxu0 0.0
  %400 = vmatpush1.xpose.msra.mxu0 0.0
  %401 = vmatprep.subr.mxu0 0.0
  %402 = vmatpush1.xpose.msra.mxu0 0.0
  %403 = vmatprep.subr.mxu0 0.0
  %404 = vmatpush1.xpose.msra.mxu0 0.0
  %405 = vmatprep.subr.mxu0 0.0
  %406 = vmatpush1.xpose.msra.mxu0 0.0
  %407 = vmatprep.subr.mxu0 0.0
  %408 = vmatpush1.xpose.msra.mxu0 0.0
  %409 = vmatprep.subr.mxu0 0.0
  %410 = vmatpush1.xpose.msra.mxu0 0.0
  %411 = vmatprep.subr.mxu0 0.0
  %412 = vmatpush1.xpose.msra.mxu0 0.0
  %413 = vmatprep.subr.mxu0 0.0
  %414 = vmatpush1.xpose.msra.mxu0 0.0
  %415 = vmatprep.subr.mxu0 0.0
  %416 = vmatpush1.xpose.msra.mxu0 0.0
  %417 = vmatprep.subr.mxu0 0.0
  %418 = vmatpush1.xpose.msra.mxu0 0.0
  %419 = vmatprep.subr.mxu0 0.0
  %420 = vmatpush1.xpose.msra.mxu0 0.0
  %421 = vmatprep.subr.mxu0 0.0
  %422 = vmatpush1.xpose.msra.mxu0 0.0
  %423 = vmatprep.subr.mxu0 0.0
  %424 = vmatpush1.xpose.msra.mxu0 0.0
  %425 = vmatprep.subr.mxu0 0.0
  %426 = vmatpush1.xpose.msra.mxu0 0.0
  %427 = vmatprep.subr.mxu0 0.0
  %428 = vmatpush1.xpose.msra.mxu0 0.0
  %429 = vmatprep.subr.mxu0 0.0
  %430 = vmatpush1.xpose.msra.mxu0 0.0
  %431 = vmatprep.subr.mxu0 0.0
  %432 = vmatpush1.xpose.msra.mxu0 0.0
  %433 = vmatprep.subr.mxu0 0.0
  %434 = vmatpush1.xpose.msra.mxu0 0.0
  %435 = vmatprep.subr.mxu0 0.0
  %436 = vmatpush1.xpose.msra.mxu0 0.0
  %437 = vmatprep.mubr.f32.mxu0 0.0
  %438 = vmatmul.mubr.f32.gmra.mrb[0].mxu0 %v82
  %v439 = vpop.f32.mrb[0].mxu0
  %v440 = vadd.f32 0.0, %v439
  %v441 = vpop.f32.mrb[0].mxu0
  %442 = vdwg.mxu0
  %v443 = vmul.f32 %v160, 0.007936508
  %v444 = vmul.f32 %v230, 0.007936508
  %v445 = vmul.f32 %v300, 0.007936508
  %v446 = vmul.f32 %v370, 0.007936508
  %v447 = vmul.f32 %v440, 0.007936508
  %448 = vmatprep.subr.mxu0 0.0
  %449 = vmatpush1.xpose.msra.mxu0 %v88
  %450 = vmatprep.subr.mxu0 0.0
  %451 = vmatpush1.xpose.msra.mxu0 0.0
  %452 = vmatprep.subr.mxu0 0.0
  %453 = vmatpush1.xpose.msra.mxu0 0.0
  %454 = vmatprep.subr.mxu0 0.0
  %455 = vmatpush1.xpose.msra.mxu0 0.0
  %456 = vmatprep.subr.mxu0 0.0
  %457 = vmatpush1.xpose.msra.mxu0 0.0
  %458 = vmatprep.subr.mxu0 0.0
  %459 = vmatpush1.xpose.msra.mxu0 0.0
  %460 = vmatprep.subr.mxu0 0.0
  %461 = vmatpush1.xpose.msra.mxu0 0.0
  %462 = vmatprep.subr.mxu0 0.0
  %463 = vmatpush1.xpose.msra.mxu0 0.0
  %464 = vmatprep.subr.mxu0 0.0
  %465 = vmatpush1.xpose.msra.mxu0 0.0
  %466 = vmatprep.subr.mxu0 0.0
  %467 = vmatpush1.xpose.msra.mxu0 0.0
  %468 = vmatprep.subr.mxu0 0.0
  %469 = vmatpush1.xpose.msra.mxu0 0.0
  %470 = vmatprep.subr.mxu0 0.0
  %471 = vmatpush1.xpose.msra.mxu0 0.0
  %472 = vmatprep.subr.mxu0 0.0
  %473 = vmatpush1.xpose.msra.mxu0 0.0
  %474 = vmatprep.subr.mxu0 0.0
  %475 = vmatpush1.xpose.msra.mxu0 0.0
  %476 = vmatprep.subr.mxu0 0.0
  %477 = vmatpush1.xpose.msra.mxu0 0.0
  %478 = vmatprep.subr.mxu0 0.0
  %479 = vmatpush1.xpose.msra.mxu0 0.0
  %480 = vmatprep.subr.mxu0 0.0
  %481 = vmatpush1.xpose.msra.mxu0 0.0
  %482 = vmatprep.subr.mxu0 0.0
  %483 = vmatpush1.xpose.msra.mxu0 0.0
  %484 = vmatprep.subr.mxu0 0.0
  %485 = vmatpush1.xpose.msra.mxu0 0.0
  %486 = vmatprep.subr.mxu0 0.0
  %487 = vmatpush1.xpose.msra.mxu0 0.0
  %488 = vmatprep.subr.mxu0 0.0
  %489 = vmatpush1.xpose.msra.mxu0 0.0
  %490 = vmatprep.subr.mxu0 0.0
  %491 = vmatpush1.xpose.msra.mxu0 0.0
  %492 = vmatprep.subr.mxu0 0.0
  %493 = vmatpush1.xpose.msra.mxu0 0.0
  %494 = vmatprep.subr.mxu0 0.0
  %495 = vmatpush1.xpose.msra.mxu0 0.0
  %496 = vmatprep.subr.mxu0 0.0
  %497 = vmatpush1.xpose.msra.mxu0 0.0
  %498 = vmatprep.subr.mxu0 0.0
  %499 = vmatpush1.xpose.msra.mxu0 0.0
  %500 = vmatprep.subr.mxu0 0.0
  %501 = vmatpush1.xpose.msra.mxu0 0.0
  %502 = vmatprep.subr.mxu0 0.0
  %503 = vmatpush1.xpose.msra.mxu0 0.0
  %504 = vmatprep.subr.mxu0 0.0
  %505 = vmatpush1.xpose.msra.mxu0 0.0
  %506 = vmatprep.subr.mxu0 0.0
  %507 = vmatpush1.xpose.msra.mxu0 0.0
  %508 = vmatprep.subr.mxu0 0.0
  %509 = vmatpush1.xpose.msra.mxu0 0.0
  %510 = vmatprep.subr.mxu0 0.0
  %511 = vmatpush1.xpose.msra.mxu0 0.0
  %512 = vmatprep.mubr.f32.mxu0 0.0
  %513 = vmatmul.mubr.f32.gmra.mrb[0].mxu0 %v78
  %v514 = vpop.f32.mrb[0].mxu0
  %v515 = vadd.f32 0.0, %v514
  %v516 = vpop.f32.mrb[0].mxu0
  %517 = vdwg.mxu0
  %518 = vmatprep.subr.mxu0 0.0
  %519 = vmatpush1.xpose.msra.mxu0 %v89
  %520 = vmatprep.subr.mxu0 0.0
  %521 = vmatpush1.xpose.msra.mxu0 0.0
  %522 = vmatprep.subr.mxu0 0.0
  %523 = vmatpush1.xpose.msra.mxu0 0.0
  %524 = vmatprep.subr.mxu0 0.0
  %525 = vmatpush1.xpose.msra.mxu0 0.0
  %526 = vmatprep.subr.mxu0 0.0
  %527 = vmatpush1.xpose.msra.mxu0 0.0
  %528 = vmatprep.subr.mxu0 0.0
  %529 = vmatpush1.xpose.msra.mxu0 0.0
  %530 = vmatprep.subr.mxu0 0.0
  %531 = vmatpush1.xpose.msra.mxu0 0.0
  %532 = vmatprep.subr.mxu0 0.0
  %533 = vmatpush1.xpose.msra.mxu0 0.0
  %534 = vmatprep.subr.mxu0 0.0
  %535 = vmatpush1.xpose.msra.mxu0 0.0
  %536 = vmatprep.subr.mxu0 0.0
  %537 = vmatpush1.xpose.msra.mxu0 0.0
  %538 = vmatprep.subr.mxu0 0.0
  %539 = vmatpush1.xpose.msra.mxu0 0.0
  %540 = vmatprep.subr.mxu0 0.0
  %541 = vmatpush1.xpose.msra.mxu0 0.0
  %542 = vmatprep.subr.mxu0 0.0
  %543 = vmatpush1.xpose.msra.mxu0 0.0
  %544 = vmatprep.subr.mxu0 0.0
  %545 = vmatpush1.xpose.msra.mxu0 0.0
  %546 = vmatprep.subr.mxu0 0.0
  %547 = vmatpush1.xpose.msra.mxu0 0.0
  %548 = vmatprep.subr.mxu0 0.0
  %549 = vmatpush1.xpose.msra.mxu0 0.0
  %550 = vmatprep.subr.mxu0 0.0
  %551 = vmatpush1.xpose.msra.mxu0 0.0
  %552 = vmatprep.subr.mxu0 0.0
  %553 = vmatpush1.xpose.msra.mxu0 0.0
  %554 = vmatprep.subr.mxu0 0.0
  %555 = vmatpush1.xpose.msra.mxu0 0.0
  %556 = vmatprep.subr.mxu0 0.0
  %557 = vmatpush1.xpose.msra.mxu0 0.0
  %558 = vmatprep.subr.mxu0 0.0
  %559 = vmatpush1.xpose.msra.mxu0 0.0
  %560 = vmatprep.subr.mxu0 0.0
  %561 = vmatpush1.xpose.msra.mxu0 0.0
  %562 = vmatprep.subr.mxu0 0.0
  %563 = vmatpush1.xpose.msra.mxu0 0.0
  %564 = vmatprep.subr.mxu0 0.0
  %565 = vmatpush1.xpose.msra.mxu0 0.0
  %566 = vmatprep.subr.mxu0 0.0
  %567 = vmatpush1.xpose.msra.mxu0 0.0
  %568 = vmatprep.subr.mxu0 0.0
  %569 = vmatpush1.xpose.msra.mxu0 0.0
  %570 = vmatprep.subr.mxu0 0.0
  %571 = vmatpush1.xpose.msra.mxu0 0.0
  %572 = vmatprep.subr.mxu0 0.0
  %573 = vmatpush1.xpose.msra.mxu0 0.0
  %574 = vmatprep.subr.mxu0 0.0
  %575 = vmatpush1.xpose.msra.mxu0 0.0
  %576 = vmatprep.subr.mxu0 0.0
  %577 = vmatpush1.xpose.msra.mxu0 0.0
  %578 = vmatprep.subr.mxu0 0.0
  %579 = vmatpush1.xpose.msra.mxu0 0.0
  %580 = vmatprep.subr.mxu0 0.0
  %581 = vmatpush1.xpose.msra.mxu0 0.0
  %582 = vmatprep.mubr.f32.mxu0 0.0
  %583 = vmatmul.mubr.f32.gmra.mrb[0].mxu0 %v79
  %v584 = vpop.f32.mrb[0].mxu0
  %v585 = vadd.f32 0.0, %v584
  %v586 = vpop.f32.mrb[0].mxu0
  %587 = vdwg.mxu0
  %588 = vmatprep.subr.mxu0 0.0
  %589 = vmatpush1.xpose.msra.mxu0 %v90
  %590 = vmatprep.subr.mxu0 0.0
  %591 = vmatpush1.xpose.msra.mxu0 0.0
  %592 = vmatprep.subr.mxu0 0.0
  %593 = vmatpush1.xpose.msra.mxu0 0.0
  %594 = vmatprep.subr.mxu0 0.0
  %595 = vmatpush1.xpose.msra.mxu0 0.0
  %596 = vmatprep.subr.mxu0 0.0
  %597 = vmatpush1.xpose.msra.mxu0 0.0
  %598 = vmatprep.subr.mxu0 0.0
  %599 = vmatpush1.xpose.msra.mxu0 0.0
  %600 = vmatprep.subr.mxu0 0.0
  %601 = vmatpush1.xpose.msra.mxu0 0.0
  %602 = vmatprep.subr.mxu0 0.0
  %603 = vmatpush1.xpose.msra.mxu0 0.0
  %604 = vmatprep.subr.mxu0 0.0
  %605 = vmatpush1.xpose.msra.mxu0 0.0
  %606 = vmatprep.subr.mxu0 0.0
  %607 = vmatpush1.xpose.msra.mxu0 0.0
  %608 = vmatprep.subr.mxu0 0.0
  %609 = vmatpush1.xpose.msra.mxu0 0.0
  %610 = vmatprep.subr.mxu0 0.0
  %611 = vmatpush1.xpose.msra.mxu0 0.0
  %612 = vmatprep.subr.mxu0 0.0
  %613 = vmatpush1.xpose.msra.mxu0 0.0
  %614 = vmatprep.subr.mxu0 0.0
  %615 = vmatpush1.xpose.msra.mxu0 0.0
  %616 = vmatprep.subr.mxu0 0.0
  %617 = vmatpush1.xpose.msra.mxu0 0.0
  %618 = vmatprep.subr.mxu0 0.0
  %619 = vmatpush1.xpose.msra.mxu0 0.0
  %620 = vmatprep.subr.mxu0 0.0
  %621 = vmatpush1.xpose.msra.mxu0 0.0
  %622 = vmatprep.subr.mxu0 0.0
  %623 = vmatpush1.xpose.msra.mxu0 0.0
  %624 = vmatprep.subr.mxu0 0.0
  %625 = vmatpush1.xpose.msra.mxu0 0.0
  %626 = vmatprep.subr.mxu0 0.0
  %627 = vmatpush1.xpose.msra.mxu0 0.0
  %628 = vmatprep.subr.mxu0 0.0
  %629 = vmatpush1.xpose.msra.mxu0 0.0
  %630 = vmatprep.subr.mxu0 0.0
  %631 = vmatpush1.xpose.msra.mxu0 0.0
  %632 = vmatprep.subr.mxu0 0.0
  %633 = vmatpush1.xpose.msra.mxu0 0.0
  %634 = vmatprep.subr.mxu0 0.0
  %635 = vmatpush1.xpose.msra.mxu0 0.0
  %636 = vmatprep.subr.mxu0 0.0
  %637 = vmatpush1.xpose.msra.mxu0 0.0
  %638 = vmatprep.subr.mxu0 0.0
  %639 = vmatpush1.xpose.msra.mxu0 0.0
  %640 = vmatprep.subr.mxu0 0.0
  %641 = vmatpush1.xpose.msra.mxu0 0.0
  %642 = vmatprep.subr.mxu0 0.0
  %643 = vmatpush1.xpose.msra.mxu0 0.0
  %644 = vmatprep.subr.mxu0 0.0
  %645 = vmatpush1.xpose.msra.mxu0 0.0
  %646 = vmatprep.subr.mxu0 0.0
  %647 = vmatpush1.xpose.msra.mxu0 0.0
  %648 = vmatprep.subr.mxu0 0.0
  %649 = vmatpush1.xpose.msra.mxu0 0.0
  %650 = vmatprep.subr.mxu0 0.0
  %651 = vmatpush1.xpose.msra.mxu0 0.0
  %652 = vmatprep.mubr.f32.mxu0 0.0
  %653 = vmatmul.mubr.f32.gmra.mrb[0].mxu0 %v80
  %v654 = vpop.f32.mrb[0].mxu0
  %v655 = vadd.f32 0.0, %v654
  %v656 = vpop.f32.mrb[0].mxu0
  %657 = vdwg.mxu0
  %658 = vmatprep.subr.mxu0 0.0
  %659 = vmatpush1.xpose.msra.mxu0 %v91
  %660 = vmatprep.subr.mxu0 0.0
  %661 = vmatpush1.xpose.msra.mxu0 0.0
  %662 = vmatprep.subr.mxu0 0.0
  %663 = vmatpush1.xpose.msra.mxu0 0.0
  %664 = vmatprep.subr.mxu0 0.0
  %665 = vmatpush1.xpose.msra.mxu0 0.0
  %666 = vmatprep.subr.mxu0 0.0
  %667 = vmatpush1.xpose.msra.mxu0 0.0
  %668 = vmatprep.subr.mxu0 0.0
  %669 = vmatpush1.xpose.msra.mxu0 0.0
  %670 = vmatprep.subr.mxu0 0.0
  %671 = vmatpush1.xpose.msra.mxu0 0.0
  %672 = vmatprep.subr.mxu0 0.0
  %673 = vmatpush1.xpose.msra.mxu0 0.0
  %674 = vmatprep.subr.mxu0 0.0
  %675 = vmatpush1.xpose.msra.mxu0 0.0
  %676 = vmatprep.subr.mxu0 0.0
  %677 = vmatpush1.xpose.msra.mxu0 0.0
  %678 = vmatprep.subr.mxu0 0.0
  %679 = vmatpush1.xpose.msra.mxu0 0.0
  %680 = vmatprep.subr.mxu0 0.0
  %681 = vmatpush1.xpose.msra.mxu0 0.0
  %682 = vmatprep.subr.mxu0 0.0
  %683 = vmatpush1.xpose.msra.mxu0 0.0
  %684 = vmatprep.subr.mxu0 0.0
  %685 = vmatpush1.xpose.msra.mxu0 0.0
  %686 = vmatprep.subr.mxu0 0.0
  %687 = vmatpush1.xpose.msra.mxu0 0.0
  %688 = vmatprep.subr.mxu0 0.0
  %689 = vmatpush1.xpose.msra.mxu0 0.0
  %690 = vmatprep.subr.mxu0 0.0
  %691 = vmatpush1.xpose.msra.mxu0 0.0
  %692 = vmatprep.subr.mxu0 0.0
  %693 = vmatpush1.xpose.msra.mxu0 0.0
  %694 = vmatprep.subr.mxu0 0.0
  %695 = vmatpush1.xpose.msra.mxu0 0.0
  %696 = vmatprep.subr.mxu0 0.0
  %697 = vmatpush1.xpose.msra.mxu0 0.0
  %698 = vmatprep.subr.mxu0 0.0
  %699 = vmatpush1.xpose.msra.mxu0 0.0
  %700 = vmatprep.subr.mxu0 0.0
  %701 = vmatpush1.xpose.msra.mxu0 0.0
  %702 = vmatprep.subr.mxu0 0.0
  %703 = vmatpush1.xpose.msra.mxu0 0.0
  %704 = vmatprep.subr.mxu0 0.0
  %705 = vmatpush1.xpose.msra.mxu0 0.0
  %706 = vmatprep.subr.mxu0 0.0
  %707 = vmatpush1.xpose.msra.mxu0 0.0
  %708 = vmatprep.subr.mxu0 0.0
  %709 = vmatpush1.xpose.msra.mxu0 0.0
  %710 = vmatprep.subr.mxu0 0.0
  %711 = vmatpush1.xpose.msra.mxu0 0.0
  %712 = vmatprep.subr.mxu0 0.0
  %713 = vmatpush1.xpose.msra.mxu0 0.0
  %714 = vmatprep.subr.mxu0 0.0
  %715 = vmatpush1.xpose.msra.mxu0 0.0
  %716 = vmatprep.subr.mxu0 0.0
  %717 = vmatpush1.xpose.msra.mxu0 0.0
  %718 = vmatprep.subr.mxu0 0.0
  %719 = vmatpush1.xpose.msra.mxu0 0.0
  %720 = vmatprep.subr.mxu0 0.0
  %721 = vmatpush1.xpose.msra.mxu0 0.0
  %722 = vmatprep.mubr.f32.mxu0 0.0
  %723 = vmatmul.mubr.f32.gmra.mrb[0].mxu0 %v81
  %v724 = vpop.f32.mrb[0].mxu0
  %v725 = vadd.f32 0.0, %v724
  %v726 = vpop.f32.mrb[0].mxu0
  %727 = vdwg.mxu0
  %728 = vmatprep.subr.mxu0 0.0
  %729 = vmatpush1.xpose.msra.mxu0 %v92
  %730 = vmatprep.subr.mxu0 0.0
  %731 = vmatpush1.xpose.msra.mxu0 0.0
  %732 = vmatprep.subr.mxu0 0.0
  %733 = vmatpush1.xpose.msra.mxu0 0.0
  %734 = vmatprep.subr.mxu0 0.0
  %735 = vmatpush1.xpose.msra.mxu0 0.0
  %736 = vmatprep.subr.mxu0 0.0
  %737 = vmatpush1.xpose.msra.mxu0 0.0
  %738 = vmatprep.subr.mxu0 0.0
  %739 = vmatpush1.xpose.msra.mxu0 0.0
  %740 = vmatprep.subr.mxu0 0.0
  %741 = vmatpush1.xpose.msra.mxu0 0.0
  %742 = vmatprep.subr.mxu0 0.0
  %743 = vmatpush1.xpose.msra.mxu0 0.0
  %744 = vmatprep.subr.mxu0 0.0
  %745 = vmatpush1.xpose.msra.mxu0 0.0
  %746 = vmatprep.subr.mxu0 0.0
  %747 = vmatpush1.xpose.msra.mxu0 0.0
  %748 = vmatprep.subr.mxu0 0.0
  %749 = vmatpush1.xpose.msra.mxu0 0.0
  %750 = vmatprep.subr.mxu0 0.0
  %751 = vmatpush1.xpose.msra.mxu0 0.0
  %752 = vmatprep.subr.mxu0 0.0
  %753 = vmatpush1.xpose.msra.mxu0 0.0
  %754 = vmatprep.subr.mxu0 0.0
  %755 = vmatpush1.xpose.msra.mxu0 0.0
  %756 = vmatprep.subr.mxu0 0.0
  %757 = vmatpush1.xpose.msra.mxu0 0.0
  %758 = vmatprep.subr.mxu0 0.0
  %759 = vmatpush1.xpose.msra.mxu0 0.0
  %760 = vmatprep.subr.mxu0 0.0
  %761 = vmatpush1.xpose.msra.mxu0 0.0
  %762 = vmatprep.subr.mxu0 0.0
  %763 = vmatpush1.xpose.msra.mxu0 0.0
  %764 = vmatprep.subr.mxu0 0.0
  %765 = vmatpush1.xpose.msra.mxu0 0.0
  %766 = vmatprep.subr.mxu0 0.0
  %767 = vmatpush1.xpose.msra.mxu0 0.0
  %768 = vmatprep.subr.mxu0 0.0
  %769 = vmatpush1.xpose.msra.mxu0 0.0
  %770 = vmatprep.subr.mxu0 0.0
  %771 = vmatpush1.xpose.msra.mxu0 0.0
  %772 = vmatprep.subr.mxu0 0.0
  %773 = vmatpush1.xpose.msra.mxu0 0.0
  %774 = vmatprep.subr.mxu0 0.0
  %775 = vmatpush1.xpose.msra.mxu0 0.0
  %776 = vmatprep.subr.mxu0 0.0
  %777 = vmatpush1.xpose.msra.mxu0 0.0
  %778 = vmatprep.subr.mxu0 0.0
  %779 = vmatpush1.xpose.msra.mxu0 0.0
  %780 = vmatprep.subr.mxu0 0.0
  %781 = vmatpush1.xpose.msra.mxu0 0.0
  %782 = vmatprep.subr.mxu0 0.0
  %783 = vmatpush1.xpose.msra.mxu0 0.0
  %784 = vmatprep.subr.mxu0 0.0
  %785 = vmatpush1.xpose.msra.mxu0 0.0
  %786 = vmatprep.subr.mxu0 0.0
  %787 = vmatpush1.xpose.msra.mxu0 0.0
  %788 = vmatprep.subr.mxu0 0.0
  %789 = vmatpush1.xpose.msra.mxu0 0.0
  %790 = vmatprep.subr.mxu0 0.0
  %791 = vmatpush1.xpose.msra.mxu0 0.0
  %792 = vmatprep.mubr.f32.mxu0 0.0
  %793 = vmatmul.mubr.f32.gmra.mrb[0].mxu0 %v82
  %v794 = vpop.f32.mrb[0].mxu0
  %v795 = vadd.f32 0.0, %v794
  %v796 = vpop.f32.mrb[0].mxu0
  %797 = vdwg.mxu0
  %v798 = vmul.f32 %v515, 0.007936508
  %v799 = vmul.f32 %v585, 0.007936508
  %v800 = vmul.f32 %v655, 0.007936508
  %v801 = vmul.f32 %v725, 0.007936508
  %v802 = vmul.f32 %v795, 0.007936508
  %803 = vmatprep.subr.mxu0 0.0
  %804 = vmatpush1.xpose.msra.mxu0 %v33
  %805 = vmatprep.subr.mxu0 0.0
  %806 = vmatpush1.xpose.msra.mxu0 0.0
  %807 = vmatprep.subr.mxu0 0.0
  %808 = vmatpush1.xpose.msra.mxu0 0.0
  %809 = vmatprep.subr.mxu0 0.0
  %810 = vmatpush1.xpose.msra.mxu0 0.0
  %811 = vmatprep.subr.mxu0 0.0
  %812 = vmatpush1.xpose.msra.mxu0 0.0
  %813 = vmatprep.subr.mxu0 0.0
  %814 = vmatpush1.xpose.msra.mxu0 0.0
  %815 = vmatprep.subr.mxu0 0.0
  %816 = vmatpush1.xpose.msra.mxu0 0.0
  %817 = vmatprep.subr.mxu0 0.0
  %818 = vmatpush1.xpose.msra.mxu0 0.0
  %819 = vmatprep.subr.mxu0 0.0
  %820 = vmatpush1.xpose.msra.mxu0 0.0
  %821 = vmatprep.subr.mxu0 0.0
  %822 = vmatpush1.xpose.msra.mxu0 0.0
  %823 = vmatprep.subr.mxu0 0.0
  %824 = vmatpush1.xpose.msra.mxu0 0.0
  %825 = vmatprep.subr.mxu0 0.0
  %826 = vmatpush1.xpose.msra.mxu0 0.0
  %827 = vmatprep.subr.mxu0 0.0
  %828 = vmatpush1.xpose.msra.mxu0 0.0
  %829 = vmatprep.subr.mxu0 0.0
  %830 = vmatpush1.xpose.msra.mxu0 0.0
  %831 = vmatprep.subr.mxu0 0.0
  %832 = vmatpush1.xpose.msra.mxu0 0.0
  %833 = vmatprep.subr.mxu0 0.0
  %834 = vmatpush1.xpose.msra.mxu0 0.0
  %835 = vmatprep.subr.mxu0 0.0
  %836 = vmatpush1.xpose.msra.mxu0 0.0
  %837 = vmatprep.subr.mxu0 0.0
  %838 = vmatpush1.xpose.msra.mxu0 0.0
  %839 = vmatprep.subr.mxu0 0.0
  %840 = vmatpush1.xpose.msra.mxu0 0.0
  %841 = vmatprep.subr.mxu0 0.0
  %842 = vmatpush1.xpose.msra.mxu0 0.0
  %843 = vmatprep.subr.mxu0 0.0
  %844 = vmatpush1.xpose.msra.mxu0 0.0
  %845 = vmatprep.subr.mxu0 0.0
  %846 = vmatpush1.xpose.msra.mxu0 0.0
  %847 = vmatprep.subr.mxu0 0.0
  %848 = vmatpush1.xpose.msra.mxu0 0.0
  %849 = vmatprep.subr.mxu0 0.0
  %850 = vmatpush1.xpose.msra.mxu0 0.0
  %851 = vmatprep.subr.mxu0 0.0
  %852 = vmatpush1.xpose.msra.mxu0 0.0
  %853 = vmatprep.subr.mxu0 0.0
  %854 = vmatpush1.xpose.msra.mxu0 0.0
  %855 = vmatprep.subr.mxu0 0.0
  %856 = vmatpush1.xpose.msra.mxu0 0.0
  %857 = vmatprep.subr.mxu0 0.0
  %858 = vmatpush1.xpose.msra.mxu0 0.0
  %859 = vmatprep.subr.mxu0 0.0
  %860 = vmatpush1.xpose.msra.mxu0 0.0
  %861 = vmatprep.subr.mxu0 0.0
  %862 = vmatpush1.xpose.msra.mxu0 0.0
  %863 = vmatprep.subr.mxu0 0.0
  %864 = vmatpush1.xpose.msra.mxu0 0.0
  %865 = vmatprep.subr.mxu0 0.0
  %866 = vmatpush1.xpose.msra.mxu0 0.0
  %867 = vmatprep.mubr.f32.mxu0 0.0
  %868 = vmatmul.mubr.f32.gmra.mrb[0].mxu0 %v33
  %v869 = vpop.f32.mrb[0].mxu0
  %v870 = vadd.f32 0.0, %v869
  %v871 = vpop.f32.mrb[0].mxu0
  %872 = vdwg.mxu0
  %873 = vmatprep.subr.mxu0 0.0
  %874 = vmatpush1.xpose.msra.mxu0 %v34
  %875 = vmatprep.subr.mxu0 0.0
  %876 = vmatpush1.xpose.msra.mxu0 0.0
  %877 = vmatprep.subr.mxu0 0.0
  %878 = vmatpush1.xpose.msra.mxu0 0.0
  %879 = vmatprep.subr.mxu0 0.0
  %880 = vmatpush1.xpose.msra.mxu0 0.0
  %881 = vmatprep.subr.mxu0 0.0
  %882 = vmatpush1.xpose.msra.mxu0 0.0
  %883 = vmatprep.subr.mxu0 0.0
  %884 = vmatpush1.xpose.msra.mxu0 0.0
  %885 = vmatprep.subr.mxu0 0.0
  %886 = vmatpush1.xpose.msra.mxu0 0.0
  %887 = vmatprep.subr.mxu0 0.0
  %888 = vmatpush1.xpose.msra.mxu0 0.0
  %889 = vmatprep.subr.mxu0 0.0
  %890 = vmatpush1.xpose.msra.mxu0 0.0
  %891 = vmatprep.subr.mxu0 0.0
  %892 = vmatpush1.xpose.msra.mxu0 0.0
  %893 = vmatprep.subr.mxu0 0.0
  %894 = vmatpush1.xpose.msra.mxu0 0.0
  %895 = vmatprep.subr.mxu0 0.0
  %896 = vmatpush1.xpose.msra.mxu0 0.0
  %897 = vmatprep.subr.mxu0 0.0
  %898 = vmatpush1.xpose.msra.mxu0 0.0
  %899 = vmatprep.subr.mxu0 0.0
  %900 = vmatpush1.xpose.msra.mxu0 0.0
  %901 = vmatprep.subr.mxu0 0.0
  %902 = vmatpush1.xpose.msra.mxu0 0.0
  %903 = vmatprep.subr.mxu0 0.0
  %904 = vmatpush1.xpose.msra.mxu0 0.0
  %905 = vmatprep.subr.mxu0 0.0
  %906 = vmatpush1.xpose.msra.mxu0 0.0
  %907 = vmatprep.subr.mxu0 0.0
  %908 = vmatpush1.xpose.msra.mxu0 0.0
  %909 = vmatprep.subr.mxu0 0.0
  %910 = vmatpush1.xpose.msra.mxu0 0.0
  %911 = vmatprep.subr.mxu0 0.0
  %912 = vmatpush1.xpose.msra.mxu0 0.0
  %913 = vmatprep.subr.mxu0 0.0
  %914 = vmatpush1.xpose.msra.mxu0 0.0
  %915 = vmatprep.subr.mxu0 0.0
  %916 = vmatpush1.xpose.msra.mxu0 0.0
  %917 = vmatprep.subr.mxu0 0.0
  %918 = vmatpush1.xpose.msra.mxu0 0.0
  %919 = vmatprep.subr.mxu0 0.0
  %920 = vmatpush1.xpose.msra.mxu0 0.0
  %921 = vmatprep.subr.mxu0 0.0
  %922 = vmatpush1.xpose.msra.mxu0 0.0
  %923 = vmatprep.subr.mxu0 0.0
  %924 = vmatpush1.xpose.msra.mxu0 0.0
  %925 = vmatprep.subr.mxu0 0.0
  %926 = vmatpush1.xpose.msra.mxu0 0.0
  %927 = vmatprep.subr.mxu0 0.0
  %928 = vmatpush1.xpose.msra.mxu0 0.0
  %929 = vmatprep.subr.mxu0 0.0
  %930 = vmatpush1.xpose.msra.mxu0 0.0
  %931 = vmatprep.subr.mxu0 0.0
  %932 = vmatpush1.xpose.msra.mxu0 0.0
  %933 = vmatprep.subr.mxu0 0.0
  %934 = vmatpush1.xpose.msra.mxu0 0.0
  %935 = vmatprep.subr.mxu0 0.0
  %936 = vmatpush1.xpose.msra.mxu0 0.0
  %937 = vmatprep.mubr.f32.mxu0 0.0
  %938 = vmatmul.mubr.f32.gmra.mrb[0].mxu0 %v34
  %v939 = vpop.f32.mrb[0].mxu0
  %v940 = vadd.f32 0.0, %v939
  %v941 = vpop.f32.mrb[0].mxu0
  %942 = vdwg.mxu0
  %943 = vmatprep.subr.mxu0 0.0
  %944 = vmatpush1.xpose.msra.mxu0 %v35
  %945 = vmatprep.subr.mxu0 0.0
  %946 = vmatpush1.xpose.msra.mxu0 0.0
  %947 = vmatprep.subr.mxu0 0.0
  %948 = vmatpush1.xpose.msra.mxu0 0.0
  %949 = vmatprep.subr.mxu0 0.0
  %950 = vmatpush1.xpose.msra.mxu0 0.0
  %951 = vmatprep.subr.mxu0 0.0
  %952 = vmatpush1.xpose.msra.mxu0 0.0
  %953 = vmatprep.subr.mxu0 0.0
  %954 = vmatpush1.xpose.msra.mxu0 0.0
  %955 = vmatprep.subr.mxu0 0.0
  %956 = vmatpush1.xpose.msra.mxu0 0.0
  %957 = vmatprep.subr.mxu0 0.0
  %958 = vmatpush1.xpose.msra.mxu0 0.0
  %959 = vmatprep.subr.mxu0 0.0
  %960 = vmatpush1.xpose.msra.mxu0 0.0
  %961 = vmatprep.subr.mxu0 0.0
  %962 = vmatpush1.xpose.msra.mxu0 0.0
  %963 = vmatprep.subr.mxu0 0.0
  %964 = vmatpush1.xpose.msra.mxu0 0.0
  %965 = vmatprep.subr.mxu0 0.0
  %966 = vmatpush1.xpose.msra.mxu0 0.0
  %967 = vmatprep.subr.mxu0 0.0
  %968 = vmatpush1.xpose.msra.mxu0 0.0
  %969 = vmatprep.subr.mxu0 0.0
  %970 = vmatpush1.xpose.msra.mxu0 0.0
  %971 = vmatprep.subr.mxu0 0.0
  %972 = vmatpush1.xpose.msra.mxu0 0.0
  %973 = vmatprep.subr.mxu0 0.0
  %974 = vmatpush1.xpose.msra.mxu0 0.0
  %975 = vmatprep.subr.mxu0 0.0
  %976 = vmatpush1.xpose.msra.mxu0 0.0
  %977 = vmatprep.subr.mxu0 0.0
  %978 = vmatpush1.xpose.msra.mxu0 0.0
  %979 = vmatprep.subr.mxu0 0.0
  %980 = vmatpush1.xpose.msra.mxu0 0.0
  %981 = vmatprep.subr.mxu0 0.0
  %982 = vmatpush1.xpose.msra.mxu0 0.0
  %983 = vmatprep.subr.mxu0 0.0
  %984 = vmatpush1.xpose.msra.mxu0 0.0
  %985 = vmatprep.subr.mxu0 0.0
  %986 = vmatpush1.xpose.msra.mxu0 0.0
  %987 = vmatprep.subr.mxu0 0.0
  %988 = vmatpush1.xpose.msra.mxu0 0.0
  %989 = vmatprep.subr.mxu0 0.0
  %990 = vmatpush1.xpose.msra.mxu0 0.0
  %991 = vmatprep.subr.mxu0 0.0
  %992 = vmatpush1.xpose.msra.mxu0 0.0
  %993 = vmatprep.subr.mxu0 0.0
  %994 = vmatpush1.xpose.msra.mxu0 0.0
  %995 = vmatprep.subr.mxu0 0.0
  %996 = vmatpush1.xpose.msra.mxu0 0.0
  %997 = vmatprep.subr.mxu0 0.0
  %998 = vmatpush1.xpose.msra.mxu0 0.0
  %999 = vmatprep.subr.mxu0 0.0
  %1000 = vmatpush1.xpose.msra.mxu0 0.0
  %1001 = vmatprep.subr.mxu0 0.0
  %1002 = vmatpush1.xpose.msra.mxu0 0.0
  %1003 = vmatprep.subr.mxu0 0.0
  %1004 = vmatpush1.xpose.msra.mxu0 0.0
  %1005 = vmatprep.subr.mxu0 0.0
  %1006 = vmatpush1.xpose.msra.mxu0 0.0
  %1007 = vmatprep.mubr.f32.mxu0 0.0
  %1008 = vmatmul.mubr.f32.gmra.mrb[0].mxu0 %v35
  %v1009 = vpop.f32.mrb[0].mxu0
  %v1010 = vadd.f32 0.0, %v1009
  %v1011 = vpop.f32.mrb[0].mxu0
  %1012 = vdwg.mxu0
  %1013 = vmatprep.subr.mxu0 0.0
  %1014 = vmatpush1.xpose.msra.mxu0 %v36
  %1015 = vmatprep.subr.mxu0 0.0
  %1016 = vmatpush1.xpose.msra.mxu0 0.0
  %1017 = vmatprep.subr.mxu0 0.0
  %1018 = vmatpush1.xpose.msra.mxu0 0.0
  %1019 = vmatprep.subr.mxu0 0.0
  %1020 = vmatpush1.xpose.msra.mxu0 0.0
  %1021 = vmatprep.subr.mxu0 0.0
  %1022 = vmatpush1.xpose.msra.mxu0 0.0
  %1023 = vmatprep.subr.mxu0 0.0
  %1024 = vmatpush1.xpose.msra.mxu0 0.0
  %1025 = vmatprep.subr.mxu0 0.0
  %1026 = vmatpush1.xpose.msra.mxu0 0.0
  %1027 = vmatprep.subr.mxu0 0.0
  %1028 = vmatpush1.xpose.msra.mxu0 0.0
  %1029 = vmatprep.subr.mxu0 0.0
  %1030 = vmatpush1.xpose.msra.mxu0 0.0
  %1031 = vmatprep.subr.mxu0 0.0
  %1032 = vmatpush1.xpose.msra.mxu0 0.0
  %1033 = vmatprep.subr.mxu0 0.0
  %1034 = vmatpush1.xpose.msra.mxu0 0.0
  %1035 = vmatprep.subr.mxu0 0.0
  %1036 = vmatpush1.xpose.msra.mxu0 0.0
  %1037 = vmatprep.subr.mxu0 0.0
  %1038 = vmatpush1.xpose.msra.mxu0 0.0
  %1039 = vmatprep.subr.mxu0 0.0
  %1040 = vmatpush1.xpose.msra.mxu0 0.0
  %1041 = vmatprep.subr.mxu0 0.0
  %1042 = vmatpush1.xpose.msra.mxu0 0.0
  %1043 = vmatprep.subr.mxu0 0.0
  %1044 = vmatpush1.xpose.msra.mxu0 0.0
  %1045 = vmatprep.subr.mxu0 0.0
  %1046 = vmatpush1.xpose.msra.mxu0 0.0
  %1047 = vmatprep.subr.mxu0 0.0
  %1048 = vmatpush1.xpose.msra.mxu0 0.0
  %1049 = vmatprep.subr.mxu0 0.0
  %1050 = vmatpush1.xpose.msra.mxu0 0.0
  %1051 = vmatprep.subr.mxu0 0.0
  %1052 = vmatpush1.xpose.msra.mxu0 0.0
  %1053 = vmatprep.subr.mxu0 0.0
  %1054 = vmatpush1.xpose.msra.mxu0 0.0
  %1055 = vmatprep.subr.mxu0 0.0
  %1056 = vmatpush1.xpose.msra.mxu0 0.0
  %1057 = vmatprep.subr.mxu0 0.0
  %1058 = vmatpush1.xpose.msra.mxu0 0.0
  %1059 = vmatprep.subr.mxu0 0.0
  %1060 = vmatpush1.xpose.msra.mxu0 0.0
  %1061 = vmatprep.subr.mxu0 0.0
  %1062 = vmatpush1.xpose.msra.mxu0 0.0
  %1063 = vmatprep.subr.mxu0 0.0
  %1064 = vmatpush1.xpose.msra.mxu0 0.0
  %1065 = vmatprep.subr.mxu0 0.0
  %1066 = vmatpush1.xpose.msra.mxu0 0.0
  %1067 = vmatprep.subr.mxu0 0.0
  %1068 = vmatpush1.xpose.msra.mxu0 0.0
  %1069 = vmatprep.subr.mxu0 0.0
  %1070 = vmatpush1.xpose.msra.mxu0 0.0
  %1071 = vmatprep.subr.mxu0 0.0
  %1072 = vmatpush1.xpose.msra.mxu0 0.0
  %1073 = vmatprep.subr.mxu0 0.0
  %1074 = vmatpush1.xpose.msra.mxu0 0.0
  %1075 = vmatprep.subr.mxu0 0.0
  %1076 = vmatpush1.xpose.msra.mxu0 0.0
  %1077 = vmatprep.mubr.f32.mxu0 0.0
  %1078 = vmatmul.mubr.f32.gmra.mrb[0].mxu0 %v36
  %v1079 = vpop.f32.mrb[0].mxu0
  %v1080 = vadd.f32 0.0, %v1079
  %v1081 = vpop.f32.mrb[0].mxu0
  %1082 = vdwg.mxu0
  %1083 = vmatprep.subr.mxu0 0.0
  %1084 = vmatpush1.xpose.msra.mxu0 %v37
  %1085 = vmatprep.subr.mxu0 0.0
  %1086 = vmatpush1.xpose.msra.mxu0 0.0
  %1087 = vmatprep.subr.mxu0 0.0
  %1088 = vmatpush1.xpose.msra.mxu0 0.0
  %1089 = vmatprep.subr.mxu0 0.0
  %1090 = vmatpush1.xpose.msra.mxu0 0.0
  %1091 = vmatprep.subr.mxu0 0.0
  %1092 = vmatpush1.xpose.msra.mxu0 0.0
  %1093 = vmatprep.subr.mxu0 0.0
  %1094 = vmatpush1.xpose.msra.mxu0 0.0
  %1095 = vmatprep.subr.mxu0 0.0
  %1096 = vmatpush1.xpose.msra.mxu0 0.0
  %1097 = vmatprep.subr.mxu0 0.0
  %1098 = vmatpush1.xpose.msra.mxu0 0.0
  %1099 = vmatprep.subr.mxu0 0.0
  %1100 = vmatpush1.xpose.msra.mxu0 0.0
  %1101 = vmatprep.subr.mxu0 0.0
  %1102 = vmatpush1.xpose.msra.mxu0 0.0
  %1103 = vmatprep.subr.mxu0 0.0
  %1104 = vmatpush1.xpose.msra.mxu0 0.0
  %1105 = vmatprep.subr.mxu0 0.0
  %1106 = vmatpush1.xpose.msra.mxu0 0.0
  %1107 = vmatprep.subr.mxu0 0.0
  %1108 = vmatpush1.xpose.msra.mxu0 0.0
  %1109 = vmatprep.subr.mxu0 0.0
  %1110 = vmatpush1.xpose.msra.mxu0 0.0
  %1111 = vmatprep.subr.mxu0 0.0
  %1112 = vmatpush1.xpose.msra.mxu0 0.0
  %1113 = vmatprep.subr.mxu0 0.0
  %1114 = vmatpush1.xpose.msra.mxu0 0.0
  %1115 = vmatprep.subr.mxu0 0.0
  %1116 = vmatpush1.xpose.msra.mxu0 0.0
  %1117 = vmatprep.subr.mxu0 0.0
  %1118 = vmatpush1.xpose.msra.mxu0 0.0
  %1119 = vmatprep.subr.mxu0 0.0
  %1120 = vmatpush1.xpose.msra.mxu0 0.0
  %1121 = vmatprep.subr.mxu0 0.0
  %1122 = vmatpush1.xpose.msra.mxu0 0.0
  %1123 = vmatprep.subr.mxu0 0.0
  %1124 = vmatpush1.xpose.msra.mxu0 0.0
  %1125 = vmatprep.subr.mxu0 0.0
  %1126 = vmatpush1.xpose.msra.mxu0 0.0
  %1127 = vmatprep.subr.mxu0 0.0
  %1128 = vmatpush1.xpose.msra.mxu0 0.0
  %1129 = vmatprep.subr.mxu0 0.0
  %1130 = vmatpush1.xpose.msra.mxu0 0.0
  %1131 = vmatprep.subr.mxu0 0.0
  %1132 = vmatpush1.xpose.msra.mxu0 0.0
  %1133 = vmatprep.subr.mxu0 0.0
  %1134 = vmatpush1.xpose.msra.mxu0 0.0
  %1135 = vmatprep.subr.mxu0 0.0
  %1136 = vmatpush1.xpose.msra.mxu0 0.0
  %1137 = vmatprep.subr.mxu0 0.0
  %1138 = vmatpush1.xpose.msra.mxu0 0.0
  %1139 = vmatprep.subr.mxu0 0.0
  %1140 = vmatpush1.xpose.msra.mxu0 0.0
  %1141 = vmatprep.subr.mxu0 0.0
  %1142 = vmatpush1.xpose.msra.mxu0 0.0
  %1143 = vmatprep.subr.mxu0 0.0
  %1144 = vmatpush1.xpose.msra.mxu0 0.0
  %1145 = vmatprep.subr.mxu0 0.0
  %1146 = vmatpush1.xpose.msra.mxu0 0.0
  %1147 = vmatprep.mubr.f32.mxu0 0.0
  %1148 = vmatmul.mubr.f32.gmra.mrb[0].mxu0 %v37
  %v1149 = vpop.f32.mrb[0].mxu0
  %v1150 = vadd.f32 0.0, %v1149
  %v1151 = vpop.f32.mrb[0].mxu0
  %1152 = vdwg.mxu0
  %1158 = vrot.lane.b32.xlu0 %v798, 8
  %v1159 = vpop.permute.xlu0 %1158
  %1160 = vrot.lane.b32.xlu0 %v799, 8
  %v1161 = vpop.permute.xlu0 %1160
  %1162 = vrot.lane.b32.xlu0 %v800, 8
  %v1163 = vpop.permute.xlu0 %1162
  %1164 = vrot.lane.b32.xlu0 %v801, 8
  %v1165 = vpop.permute.xlu0 %1164
  %1166 = vrot.lane.b32.xlu0 %v802, 8
  %v1167 = vpop.permute.xlu0 %1166
  %vm1173 = vcmask 64512
  %v1174 = vsel %vm1173, %v443, %v1159
  %v1175 = vsel %vm1173, %v444, %v1161
  %v1176 = vsel %vm1173, %v445, %v1163
  %v1177 = vsel %vm1173, %v446, %v1165
  %v1178 = vsel %vm1173, %v447, %v1167
  %v1179 = vlaneseq
  %v1180 = vshrl.u32 %v1179, 7
  %v1181 = vrcp.pop %v1174
  %v1182 = vrcp.pop %v1175
  %v1183 = vrcp.pop %v1176
  %v1184 = vrcp.pop %v1177
  %v1185 = vrcp.pop %v1178
  %1187 = vset.pattern.permute.xlu0 0
  %1188 = vperm.xlu0 %1187, %v1181
  %v1189 = vpop.permute.xlu0 %1188
  %1192 = vset.pattern.permute.xlu0 0
  %1193 = vperm.xlu0 %1192, %v1182
  %v1194 = vpop.permute.xlu0 %1193
  %1197 = vset.pattern.permute.xlu0 0
  %1198 = vperm.xlu0 %1197, %v1183
  %v1199 = vpop.permute.xlu0 %1198
  %1202 = vset.pattern.permute.xlu0 0
  %1203 = vperm.xlu0 %1202, %v1184
  %v1204 = vpop.permute.xlu0 %1203
  %1207 = vset.pattern.permute.xlu0 0
  %1208 = vperm.xlu0 %1207, %v1185
  %v1209 = vpop.permute.xlu0 %1208
  %v1211 = vmul.f32 %v1174, %v1189
  %v1212 = vmul.f32 %v1175, %v1194
  %v1213 = vmul.f32 %v1176, %v1199
  %v1214 = vmul.f32 %v1177, %v1204
  %v1215 = vmul.f32 %v1178, %v1209
  %vm1216 = vcmp.eq.s32.totalorder %v1180, 0
  %1218 = vset.pattern.permute.xlu0 0
  %1219 = vperm.xlu0 %1218, %v1174
  %v1220 = vpop.permute.xlu0 %1219
  %1223 = vset.pattern.permute.xlu0 0
  %1224 = vperm.xlu0 %1223, %v1175
  %v1225 = vpop.permute.xlu0 %1224
  %1228 = vset.pattern.permute.xlu0 0
  %1229 = vperm.xlu0 %1228, %v1176
  %v1230 = vpop.permute.xlu0 %1229
  %1233 = vset.pattern.permute.xlu0 0
  %1234 = vperm.xlu0 %1233, %v1177
  %v1235 = vpop.permute.xlu0 %1234
  %1238 = vset.pattern.permute.xlu0 0
  %1239 = vperm.xlu0 %1238, %v1178
  %v1240 = vpop.permute.xlu0 %1239
  %v1242 = vlaneseq
  %v1243 = vshrl.u32 %v1242, 7
  %v1244 = vsub.s32 0, %v1243
  %v1245 = vrot.slane %v1211, %v1244
  %v1246 = vlaneseq
  %v1247 = vshrl.u32 %v1246, 7
  %v1248 = vsub.s32 0, %v1247
  %v1249 = vrot.slane %v1212, %v1248
  %v1250 = vlaneseq
  %v1251 = vshrl.u32 %v1250, 7
  %v1252 = vsub.s32 0, %v1251
  %v1253 = vrot.slane %v1213, %v1252
  %v1254 = vlaneseq
  %v1255 = vshrl.u32 %v1254, 7
  %v1256 = vsub.s32 0, %v1255
  %v1257 = vrot.slane %v1214, %v1256
  %v1258 = vlaneseq
  %v1259 = vshrl.u32 %v1258, 7
  %v1260 = vsub.s32 0, %v1259
  %v1261 = vrot.slane %v1215, %v1260
  %v1262 = vmul.f32 %v1220, %v1245
  %v1263 = vmul.f32 %v1225, %v1249
  %v1264 = vmul.f32 %v1230, %v1253
  %v1265 = vmul.f32 %v1235, %v1257
  %v1266 = vmul.f32 %v1240, %v1261
  %v1267 = vsub.f32 %v1174, %v1262
  %v1268 = vsub.f32 %v1175, %v1263
  %v1269 = vsub.f32 %v1176, %v1264
  %v1270 = vsub.f32 %v1177, %v1265
  %v1271 = vsub.f32 %v1178, %v1266
  %v1272 = vsel %vm1216, 1, 0
  %vm1273 = vcmp.eq.s32.totalorder %v1272, 1
  %v1274 = vsel %vm1273, %v1245, %v1267
  %v1275 = vsel %vm1273, %v1249, %v1268
  %v1276 = vsel %vm1273, %v1253, %v1269
  %v1277 = vsel %vm1273, %v1257, %v1270
  %v1278 = vsel %vm1273, %v1261, %v1271
  %v1279 = vrcp.pop %v1274
  %v1280 = vrcp.pop %v1275
  %v1281 = vrcp.pop %v1276
  %v1282 = vrcp.pop %v1277
  %v1283 = vrcp.pop %v1278
  %1285 = vset.pattern.permute.xlu0 1
  %1286 = vperm.xlu0 %1285, %v1279
  %v1287 = vpop.permute.xlu0 %1286
  %1290 = vset.pattern.permute.xlu0 1
  %1291 = vperm.xlu0 %1290, %v1280
  %v1292 = vpop.permute.xlu0 %1291
  %1295 = vset.pattern.permute.xlu0 1
  %1296 = vperm.xlu0 %1295, %v1281
  %v1297 = vpop.permute.xlu0 %1296
  %1300 = vset.pattern.permute.xlu0 1
  %1301 = vperm.xlu0 %1300, %v1282
  %v1302 = vpop.permute.xlu0 %1301
  %1305 = vset.pattern.permute.xlu0 1
  %1306 = vperm.xlu0 %1305, %v1283
  %v1307 = vpop.permute.xlu0 %1306
  %v1309 = vmul.f32 %v1274, %v1287
  %v1310 = vmul.f32 %v1275, %v1292
  %v1311 = vmul.f32 %v1276, %v1297
  %v1312 = vmul.f32 %v1277, %v1302
  %v1313 = vmul.f32 %v1278, %v1307
  %vm1314 = vcmp.eq.s32.totalorder %v1180, 1
  %1316 = vset.pattern.permute.xlu0 1
  %1317 = vperm.xlu0 %1316, %v1274
  %v1318 = vpop.permute.xlu0 %1317
  %1321 = vset.pattern.permute.xlu0 1
  %1322 = vperm.xlu0 %1321, %v1275
  %v1323 = vpop.permute.xlu0 %1322
  %1326 = vset.pattern.permute.xlu0 1
  %1327 = vperm.xlu0 %1326, %v1276
  %v1328 = vpop.permute.xlu0 %1327
  %1331 = vset.pattern.permute.xlu0 1
  %1332 = vperm.xlu0 %1331, %v1277
  %v1333 = vpop.permute.xlu0 %1332
  %1336 = vset.pattern.permute.xlu0 1
  %1337 = vperm.xlu0 %1336, %v1278
  %v1338 = vpop.permute.xlu0 %1337
  %v1340 = vlaneseq
  %v1341 = vshrl.u32 %v1340, 7
  %v1342 = vsub.s32 1, %v1341
  %v1343 = vrot.slane %v1309, %v1342
  %v1344 = vlaneseq
  %v1345 = vshrl.u32 %v1344, 7
  %v1346 = vsub.s32 1, %v1345
  %v1347 = vrot.slane %v1310, %v1346
  %v1348 = vlaneseq
  %v1349 = vshrl.u32 %v1348, 7
  %v1350 = vsub.s32 1, %v1349
  %v1351 = vrot.slane %v1311, %v1350
  %v1352 = vlaneseq
  %v1353 = vshrl.u32 %v1352, 7
  %v1354 = vsub.s32 1, %v1353
  %v1355 = vrot.slane %v1312, %v1354
  %v1356 = vlaneseq
  %v1357 = vshrl.u32 %v1356, 7
  %v1358 = vsub.s32 1, %v1357
  %v1359 = vrot.slane %v1313, %v1358
  %v1360 = vmul.f32 %v1318, %v1343
  %v1361 = vmul.f32 %v1323, %v1347
  %v1362 = vmul.f32 %v1328, %v1351
  %v1363 = vmul.f32 %v1333, %v1355
  %v1364 = vmul.f32 %v1338, %v1359
  %v1365 = vsub.f32 %v1274, %v1360
  %v1366 = vsub.f32 %v1275, %v1361
  %v1367 = vsub.f32 %v1276, %v1362
  %v1368 = vsub.f32 %v1277, %v1363
  %v1369 = vsub.f32 %v1278, %v1364
  %v1370 = vsel %vm1314, 1, 0
  %vm1371 = vcmp.eq.s32.totalorder %v1370, 1
  %v1372 = vsel %vm1371, %v1343, %v1365
  %v1373 = vsel %vm1371, %v1347, %v1366
  %v1374 = vsel %vm1371, %v1351, %v1367
  %v1375 = vsel %vm1371, %v1355, %v1368
  %v1376 = vsel %vm1371, %v1359, %v1369
  %v1377 = vrcp.pop %v1372
  %v1378 = vrcp.pop %v1373
  %v1379 = vrcp.pop %v1374
  %v1380 = vrcp.pop %v1375
  %v1381 = vrcp.pop %v1376
  %1383 = vset.pattern.permute.xlu0 2
  %1384 = vperm.xlu0 %1383, %v1377
  %v1385 = vpop.permute.xlu0 %1384
  %1388 = vset.pattern.permute.xlu0 2
  %1389 = vperm.xlu0 %1388, %v1378
  %v1390 = vpop.permute.xlu0 %1389
  %1393 = vset.pattern.permute.xlu0 2
  %1394 = vperm.xlu0 %1393, %v1379
  %v1395 = vpop.permute.xlu0 %1394
  %1398 = vset.pattern.permute.xlu0 2
  %1399 = vperm.xlu0 %1398, %v1380
  %v1400 = vpop.permute.xlu0 %1399
  %1403 = vset.pattern.permute.xlu0 2
  %1404 = vperm.xlu0 %1403, %v1381
  %v1405 = vpop.permute.xlu0 %1404
  %v1407 = vmul.f32 %v1372, %v1385
  %v1408 = vmul.f32 %v1373, %v1390
  %v1409 = vmul.f32 %v1374, %v1395
  %v1410 = vmul.f32 %v1375, %v1400
  %v1411 = vmul.f32 %v1376, %v1405
  %vm1412 = vcmp.eq.s32.totalorder %v1180, 2
  %1414 = vset.pattern.permute.xlu0 2
  %1415 = vperm.xlu0 %1414, %v1372
  %v1416 = vpop.permute.xlu0 %1415
  %1419 = vset.pattern.permute.xlu0 2
  %1420 = vperm.xlu0 %1419, %v1373
  %v1421 = vpop.permute.xlu0 %1420
  %1424 = vset.pattern.permute.xlu0 2
  %1425 = vperm.xlu0 %1424, %v1374
  %v1426 = vpop.permute.xlu0 %1425
  %1429 = vset.pattern.permute.xlu0 2
  %1430 = vperm.xlu0 %1429, %v1375
  %v1431 = vpop.permute.xlu0 %1430
  %1434 = vset.pattern.permute.xlu0 2
  %1435 = vperm.xlu0 %1434, %v1376
  %v1436 = vpop.permute.xlu0 %1435
  %v1438 = vlaneseq
  %v1439 = vshrl.u32 %v1438, 7
  %v1440 = vsub.s32 2, %v1439
  %v1441 = vrot.slane %v1407, %v1440
  %v1442 = vlaneseq
  %v1443 = vshrl.u32 %v1442, 7
  %v1444 = vsub.s32 2, %v1443
  %v1445 = vrot.slane %v1408, %v1444
  %v1446 = vlaneseq
  %v1447 = vshrl.u32 %v1446, 7
  %v1448 = vsub.s32 2, %v1447
  %v1449 = vrot.slane %v1409, %v1448
  %v1450 = vlaneseq
  %v1451 = vshrl.u32 %v1450, 7
  %v1452 = vsub.s32 2, %v1451
  %v1453 = vrot.slane %v1410, %v1452
  %v1454 = vlaneseq
  %v1455 = vshrl.u32 %v1454, 7
  %v1456 = vsub.s32 2, %v1455
  %v1457 = vrot.slane %v1411, %v1456
  %v1458 = vmul.f32 %v1416, %v1441
  %v1459 = vmul.f32 %v1421, %v1445
  %v1460 = vmul.f32 %v1426, %v1449
  %v1461 = vmul.f32 %v1431, %v1453
  %v1462 = vmul.f32 %v1436, %v1457
  %v1463 = vsub.f32 %v1372, %v1458
  %v1464 = vsub.f32 %v1373, %v1459
  %v1465 = vsub.f32 %v1374, %v1460
  %v1466 = vsub.f32 %v1375, %v1461
  %v1467 = vsub.f32 %v1376, %v1462
  %v1468 = vsel %vm1412, 1, 0
  %vm1469 = vcmp.eq.s32.totalorder %v1468, 1
  %v1470 = vsel %vm1469, %v1441, %v1463
  %v1471 = vsel %vm1469, %v1445, %v1464
  %v1472 = vsel %vm1469, %v1449, %v1465
  %v1473 = vsel %vm1469, %v1453, %v1466
  %v1474 = vsel %vm1469, %v1457, %v1467
  %v1475 = vrcp.pop %v1470
  %v1476 = vrcp.pop %v1471
  %v1477 = vrcp.pop %v1472
  %v1478 = vrcp.pop %v1473
  %v1479 = vrcp.pop %v1474
  %1481 = vset.pattern.permute.xlu0 3
  %1482 = vperm.xlu0 %1481, %v1475
  %v1483 = vpop.permute.xlu0 %1482
  %1486 = vset.pattern.permute.xlu0 3
  %1487 = vperm.xlu0 %1486, %v1476
  %v1488 = vpop.permute.xlu0 %1487
  %1491 = vset.pattern.permute.xlu0 3
  %1492 = vperm.xlu0 %1491, %v1477
  %v1493 = vpop.permute.xlu0 %1492
  %1496 = vset.pattern.permute.xlu0 3
  %1497 = vperm.xlu0 %1496, %v1478
  %v1498 = vpop.permute.xlu0 %1497
  %1501 = vset.pattern.permute.xlu0 3
  %1502 = vperm.xlu0 %1501, %v1479
  %v1503 = vpop.permute.xlu0 %1502
  %v1505 = vmul.f32 %v1470, %v1483
  %v1506 = vmul.f32 %v1471, %v1488
  %v1507 = vmul.f32 %v1472, %v1493
  %v1508 = vmul.f32 %v1473, %v1498
  %v1509 = vmul.f32 %v1474, %v1503
  %vm1510 = vcmp.eq.s32.totalorder %v1180, 3
  %1512 = vset.pattern.permute.xlu0 3
  %1513 = vperm.xlu0 %1512, %v1470
  %v1514 = vpop.permute.xlu0 %1513
  %1517 = vset.pattern.permute.xlu0 3
  %1518 = vperm.xlu0 %1517, %v1471
  %v1519 = vpop.permute.xlu0 %1518
  %1522 = vset.pattern.permute.xlu0 3
  %1523 = vperm.xlu0 %1522, %v1472
  %v1524 = vpop.permute.xlu0 %1523
  %1527 = vset.pattern.permute.xlu0 3
  %1528 = vperm.xlu0 %1527, %v1473
  %v1529 = vpop.permute.xlu0 %1528
  %1532 = vset.pattern.permute.xlu0 3
  %1533 = vperm.xlu0 %1532, %v1474
  %v1534 = vpop.permute.xlu0 %1533
  %v1536 = vlaneseq
  %v1537 = vshrl.u32 %v1536, 7
  %v1538 = vsub.s32 3, %v1537
  %v1539 = vrot.slane %v1505, %v1538
  %v1540 = vlaneseq
  %v1541 = vshrl.u32 %v1540, 7
  %v1542 = vsub.s32 3, %v1541
  %v1543 = vrot.slane %v1506, %v1542
  %v1544 = vlaneseq
  %v1545 = vshrl.u32 %v1544, 7
  %v1546 = vsub.s32 3, %v1545
  %v1547 = vrot.slane %v1507, %v1546
  %v1548 = vlaneseq
  %v1549 = vshrl.u32 %v1548, 7
  %v1550 = vsub.s32 3, %v1549
  %v1551 = vrot.slane %v1508, %v1550
  %v1552 = vlaneseq
  %v1553 = vshrl.u32 %v1552, 7
  %v1554 = vsub.s32 3, %v1553
  %v1555 = vrot.slane %v1509, %v1554
  %v1556 = vmul.f32 %v1514, %v1539
  %v1557 = vmul.f32 %v1519, %v1543
  %v1558 = vmul.f32 %v1524, %v1547
  %v1559 = vmul.f32 %v1529, %v1551
  %v1560 = vmul.f32 %v1534, %v1555
  %v1561 = vsub.f32 %v1470, %v1556
  %v1562 = vsub.f32 %v1471, %v1557
  %v1563 = vsub.f32 %v1472, %v1558
  %v1564 = vsub.f32 %v1473, %v1559
  %v1565 = vsub.f32 %v1474, %v1560
  %v1566 = vsel %vm1510, 1, 0
  %vm1567 = vcmp.eq.s32.totalorder %v1566, 1
  %v1568 = vsel %vm1567, %v1539, %v1561
  %v1569 = vsel %vm1567, %v1543, %v1562
  %v1570 = vsel %vm1567, %v1547, %v1563
  %v1571 = vsel %vm1567, %v1551, %v1564
  %v1572 = vsel %vm1567, %v1555, %v1565
  %v1573 = vrcp.pop %v1568
  %v1574 = vrcp.pop %v1569
  %v1575 = vrcp.pop %v1570
  %v1576 = vrcp.pop %v1571
  %v1577 = vrcp.pop %v1572
  %1579 = vset.pattern.permute.xlu0 4
  %1580 = vperm.xlu0 %1579, %v1573
  %v1581 = vpop.permute.xlu0 %1580
  %1584 = vset.pattern.permute.xlu0 4
  %1585 = vperm.xlu0 %1584, %v1574
  %v1586 = vpop.permute.xlu0 %1585
  %1589 = vset.pattern.permute.xlu0 4
  %1590 = vperm.xlu0 %1589, %v1575
  %v1591 = vpop.permute.xlu0 %1590
  %1594 = vset.pattern.permute.xlu0 4
  %1595 = vperm.xlu0 %1594, %v1576
  %v1596 = vpop.permute.xlu0 %1595
  %1599 = vset.pattern.permute.xlu0 4
  %1600 = vperm.xlu0 %1599, %v1577
  %v1601 = vpop.permute.xlu0 %1600
  %v1603 = vmul.f32 %v1568, %v1581
  %v1604 = vmul.f32 %v1569, %v1586
  %v1605 = vmul.f32 %v1570, %v1591
  %v1606 = vmul.f32 %v1571, %v1596
  %v1607 = vmul.f32 %v1572, %v1601
  %vm1608 = vcmp.eq.s32.totalorder %v1180, 4
  %1610 = vset.pattern.permute.xlu0 4
  %1611 = vperm.xlu0 %1610, %v1568
  %v1612 = vpop.permute.xlu0 %1611
  %1615 = vset.pattern.permute.xlu0 4
  %1616 = vperm.xlu0 %1615, %v1569
  %v1617 = vpop.permute.xlu0 %1616
  %1620 = vset.pattern.permute.xlu0 4
  %1621 = vperm.xlu0 %1620, %v1570
  %v1622 = vpop.permute.xlu0 %1621
  %1625 = vset.pattern.permute.xlu0 4
  %1626 = vperm.xlu0 %1625, %v1571
  %v1627 = vpop.permute.xlu0 %1626
  %1630 = vset.pattern.permute.xlu0 4
  %1631 = vperm.xlu0 %1630, %v1572
  %v1632 = vpop.permute.xlu0 %1631
  %v1634 = vlaneseq
  %v1635 = vshrl.u32 %v1634, 7
  %v1636 = vsub.s32 4, %v1635
  %v1637 = vrot.slane %v1603, %v1636
  %v1638 = vlaneseq
  %v1639 = vshrl.u32 %v1638, 7
  %v1640 = vsub.s32 4, %v1639
  %v1641 = vrot.slane %v1604, %v1640
  %v1642 = vlaneseq
  %v1643 = vshrl.u32 %v1642, 7
  %v1644 = vsub.s32 4, %v1643
  %v1645 = vrot.slane %v1605, %v1644
  %v1646 = vlaneseq
  %v1647 = vshrl.u32 %v1646, 7
  %v1648 = vsub.s32 4, %v1647
  %v1649 = vrot.slane %v1606, %v1648
  %v1650 = vlaneseq
  %v1651 = vshrl.u32 %v1650, 7
  %v1652 = vsub.s32 4, %v1651
  %v1653 = vrot.slane %v1607, %v1652
  %v1654 = vmul.f32 %v1612, %v1637
  %v1655 = vmul.f32 %v1617, %v1641
  %v1656 = vmul.f32 %v1622, %v1645
  %v1657 = vmul.f32 %v1627, %v1649
  %v1658 = vmul.f32 %v1632, %v1653
  %v1659 = vsub.f32 %v1568, %v1654
  %v1660 = vsub.f32 %v1569, %v1655
  %v1661 = vsub.f32 %v1570, %v1656
  %v1662 = vsub.f32 %v1571, %v1657
  %v1663 = vsub.f32 %v1572, %v1658
  %v1664 = vsel %vm1608, 1, 0
  %vm1665 = vcmp.eq.s32.totalorder %v1664, 1
  %v1666 = vsel %vm1665, %v1637, %v1659
  %v1667 = vsel %vm1665, %v1641, %v1660
  %v1668 = vsel %vm1665, %v1645, %v1661
  %v1669 = vsel %vm1665, %v1649, %v1662
  %v1670 = vsel %vm1665, %v1653, %v1663
  %v1671 = vrcp.pop %v1666
  %v1672 = vrcp.pop %v1667
  %v1673 = vrcp.pop %v1668
  %v1674 = vrcp.pop %v1669
  %v1675 = vrcp.pop %v1670
  %1677 = vset.pattern.permute.xlu0 5
  %1678 = vperm.xlu0 %1677, %v1671
  %v1679 = vpop.permute.xlu0 %1678
  %1682 = vset.pattern.permute.xlu0 5
  %1683 = vperm.xlu0 %1682, %v1672
  %v1684 = vpop.permute.xlu0 %1683
  %1687 = vset.pattern.permute.xlu0 5
  %1688 = vperm.xlu0 %1687, %v1673
  %v1689 = vpop.permute.xlu0 %1688
  %1692 = vset.pattern.permute.xlu0 5
  %1693 = vperm.xlu0 %1692, %v1674
  %v1694 = vpop.permute.xlu0 %1693
  %1697 = vset.pattern.permute.xlu0 5
  %1698 = vperm.xlu0 %1697, %v1675
  %v1699 = vpop.permute.xlu0 %1698
  %v1701 = vmul.f32 %v1666, %v1679
  %v1702 = vmul.f32 %v1667, %v1684
  %v1703 = vmul.f32 %v1668, %v1689
  %v1704 = vmul.f32 %v1669, %v1694
  %v1705 = vmul.f32 %v1670, %v1699
  %vm1706 = vcmp.eq.s32.totalorder %v1180, 5
  %1708 = vset.pattern.permute.xlu0 5
  %1709 = vperm.xlu0 %1708, %v1666
  %v1710 = vpop.permute.xlu0 %1709
  %1713 = vset.pattern.permute.xlu0 5
  %1714 = vperm.xlu0 %1713, %v1667
  %v1715 = vpop.permute.xlu0 %1714
  %1718 = vset.pattern.permute.xlu0 5
  %1719 = vperm.xlu0 %1718, %v1668
  %v1720 = vpop.permute.xlu0 %1719
  %1723 = vset.pattern.permute.xlu0 5
  %1724 = vperm.xlu0 %1723, %v1669
  %v1725 = vpop.permute.xlu0 %1724
  %1728 = vset.pattern.permute.xlu0 5
  %1729 = vperm.xlu0 %1728, %v1670
  %v1730 = vpop.permute.xlu0 %1729
  %v1732 = vlaneseq
  %v1733 = vshrl.u32 %v1732, 7
  %v1734 = vsub.s32 5, %v1733
  %v1735 = vrot.slane %v1701, %v1734
  %v1736 = vlaneseq
  %v1737 = vshrl.u32 %v1736, 7
  %v1738 = vsub.s32 5, %v1737
  %v1739 = vrot.slane %v1702, %v1738
  %v1740 = vlaneseq
  %v1741 = vshrl.u32 %v1740, 7
  %v1742 = vsub.s32 5, %v1741
  %v1743 = vrot.slane %v1703, %v1742
  %v1744 = vlaneseq
  %v1745 = vshrl.u32 %v1744, 7
  %v1746 = vsub.s32 5, %v1745
  %v1747 = vrot.slane %v1704, %v1746
  %v1748 = vlaneseq
  %v1749 = vshrl.u32 %v1748, 7
  %v1750 = vsub.s32 5, %v1749
  %v1751 = vrot.slane %v1705, %v1750
  %v1752 = vmul.f32 %v1710, %v1735
  %v1753 = vmul.f32 %v1715, %v1739
  %v1754 = vmul.f32 %v1720, %v1743
  %v1755 = vmul.f32 %v1725, %v1747
  %v1756 = vmul.f32 %v1730, %v1751
  %v1757 = vsub.f32 %v1666, %v1752
  %v1758 = vsub.f32 %v1667, %v1753
  %v1759 = vsub.f32 %v1668, %v1754
  %v1760 = vsub.f32 %v1669, %v1755
  %v1761 = vsub.f32 %v1670, %v1756
  %v1762 = vsel %vm1706, 1, 0
  %vm1763 = vcmp.eq.s32.totalorder %v1762, 1
  %v1764 = vsel %vm1763, %v1735, %v1757
  %v1765 = vsel %vm1763, %v1739, %v1758
  %v1766 = vsel %vm1763, %v1743, %v1759
  %v1767 = vsel %vm1763, %v1747, %v1760
  %v1768 = vsel %vm1763, %v1751, %v1761
  %v1769 = vrcp.pop %v1764
  %v1770 = vrcp.pop %v1765
  %v1771 = vrcp.pop %v1766
  %v1772 = vrcp.pop %v1767
  %v1773 = vrcp.pop %v1768
  %1775 = vset.pattern.permute.xlu0 6
  %1776 = vperm.xlu0 %1775, %v1769
  %v1777 = vpop.permute.xlu0 %1776
  %1780 = vset.pattern.permute.xlu0 6
  %1781 = vperm.xlu0 %1780, %v1770
  %v1782 = vpop.permute.xlu0 %1781
  %1785 = vset.pattern.permute.xlu0 6
  %1786 = vperm.xlu0 %1785, %v1771
  %v1787 = vpop.permute.xlu0 %1786
  %1790 = vset.pattern.permute.xlu0 6
  %1791 = vperm.xlu0 %1790, %v1772
  %v1792 = vpop.permute.xlu0 %1791
  %1795 = vset.pattern.permute.xlu0 6
  %1796 = vperm.xlu0 %1795, %v1773
  %v1797 = vpop.permute.xlu0 %1796
  %v1799 = vmul.f32 %v1764, %v1777
  %v1800 = vmul.f32 %v1765, %v1782
  %v1801 = vmul.f32 %v1766, %v1787
  %v1802 = vmul.f32 %v1767, %v1792
  %v1803 = vmul.f32 %v1768, %v1797
  %vm1804 = vcmp.eq.s32.totalorder %v1180, 6
  %1806 = vset.pattern.permute.xlu0 6
  %1807 = vperm.xlu0 %1806, %v1764
  %v1808 = vpop.permute.xlu0 %1807
  %1811 = vset.pattern.permute.xlu0 6
  %1812 = vperm.xlu0 %1811, %v1765
  %v1813 = vpop.permute.xlu0 %1812
  %1816 = vset.pattern.permute.xlu0 6
  %1817 = vperm.xlu0 %1816, %v1766
  %v1818 = vpop.permute.xlu0 %1817
  %1821 = vset.pattern.permute.xlu0 6
  %1822 = vperm.xlu0 %1821, %v1767
  %v1823 = vpop.permute.xlu0 %1822
  %1826 = vset.pattern.permute.xlu0 6
  %1827 = vperm.xlu0 %1826, %v1768
  %v1828 = vpop.permute.xlu0 %1827
  %v1830 = vlaneseq
  %v1831 = vshrl.u32 %v1830, 7
  %v1832 = vsub.s32 6, %v1831
  %v1833 = vrot.slane %v1799, %v1832
  %v1834 = vlaneseq
  %v1835 = vshrl.u32 %v1834, 7
  %v1836 = vsub.s32 6, %v1835
  %v1837 = vrot.slane %v1800, %v1836
  %v1838 = vlaneseq
  %v1839 = vshrl.u32 %v1838, 7
  %v1840 = vsub.s32 6, %v1839
  %v1841 = vrot.slane %v1801, %v1840
  %v1842 = vlaneseq
  %v1843 = vshrl.u32 %v1842, 7
  %v1844 = vsub.s32 6, %v1843
  %v1845 = vrot.slane %v1802, %v1844
  %v1846 = vlaneseq
  %v1847 = vshrl.u32 %v1846, 7
  %v1848 = vsub.s32 6, %v1847
  %v1849 = vrot.slane %v1803, %v1848
  %v1850 = vmul.f32 %v1808, %v1833
  %v1851 = vmul.f32 %v1813, %v1837
  %v1852 = vmul.f32 %v1818, %v1841
  %v1853 = vmul.f32 %v1823, %v1845
  %v1854 = vmul.f32 %v1828, %v1849
  %v1855 = vsub.f32 %v1764, %v1850
  %v1856 = vsub.f32 %v1765, %v1851
  %v1857 = vsub.f32 %v1766, %v1852
  %v1858 = vsub.f32 %v1767, %v1853
  %v1859 = vsub.f32 %v1768, %v1854
  %v1860 = vsel %vm1804, 1, 0
  %vm1861 = vcmp.eq.s32.totalorder %v1860, 1
  %v1862 = vsel %vm1861, %v1833, %v1855
  %v1863 = vsel %vm1861, %v1837, %v1856
  %v1864 = vsel %vm1861, %v1841, %v1857
  %v1865 = vsel %vm1861, %v1845, %v1858
  %v1866 = vsel %vm1861, %v1849, %v1859
  %v1867 = vrcp.pop %v1862
  %v1868 = vrcp.pop %v1863
  %v1869 = vrcp.pop %v1864
  %v1870 = vrcp.pop %v1865
  %v1871 = vrcp.pop %v1866
  %1873 = vset.pattern.permute.xlu0 7
  %1874 = vperm.xlu0 %1873, %v1867
  %v1875 = vpop.permute.xlu0 %1874
  %1878 = vset.pattern.permute.xlu0 7
  %1879 = vperm.xlu0 %1878, %v1868
  %v1880 = vpop.permute.xlu0 %1879
  %1883 = vset.pattern.permute.xlu0 7
  %1884 = vperm.xlu0 %1883, %v1869
  %v1885 = vpop.permute.xlu0 %1884
  %1888 = vset.pattern.permute.xlu0 7
  %1889 = vperm.xlu0 %1888, %v1870
  %v1890 = vpop.permute.xlu0 %1889
  %1893 = vset.pattern.permute.xlu0 7
  %1894 = vperm.xlu0 %1893, %v1871
  %v1895 = vpop.permute.xlu0 %1894
  %v1897 = vmul.f32 %v1862, %v1875
  %v1898 = vmul.f32 %v1863, %v1880
  %v1899 = vmul.f32 %v1864, %v1885
  %v1900 = vmul.f32 %v1865, %v1890
  %v1901 = vmul.f32 %v1866, %v1895
  %vm1902 = vcmp.eq.s32.totalorder %v1180, 7
  %1904 = vset.pattern.permute.xlu0 7
  %1905 = vperm.xlu0 %1904, %v1862
  %v1906 = vpop.permute.xlu0 %1905
  %1909 = vset.pattern.permute.xlu0 7
  %1910 = vperm.xlu0 %1909, %v1863
  %v1911 = vpop.permute.xlu0 %1910
  %1914 = vset.pattern.permute.xlu0 7
  %1915 = vperm.xlu0 %1914, %v1864
  %v1916 = vpop.permute.xlu0 %1915
  %1919 = vset.pattern.permute.xlu0 7
  %1920 = vperm.xlu0 %1919, %v1865
  %v1921 = vpop.permute.xlu0 %1920
  %1924 = vset.pattern.permute.xlu0 7
  %1925 = vperm.xlu0 %1924, %v1866
  %v1926 = vpop.permute.xlu0 %1925
  %v1928 = vlaneseq
  %v1929 = vshrl.u32 %v1928, 7
  %v1930 = vsub.s32 7, %v1929
  %v1931 = vrot.slane %v1897, %v1930
  %v1932 = vlaneseq
  %v1933 = vshrl.u32 %v1932, 7
  %v1934 = vsub.s32 7, %v1933
  %v1935 = vrot.slane %v1898, %v1934
  %v1936 = vlaneseq
  %v1937 = vshrl.u32 %v1936, 7
  %v1938 = vsub.s32 7, %v1937
  %v1939 = vrot.slane %v1899, %v1938
  %v1940 = vlaneseq
  %v1941 = vshrl.u32 %v1940, 7
  %v1942 = vsub.s32 7, %v1941
  %v1943 = vrot.slane %v1900, %v1942
  %v1944 = vlaneseq
  %v1945 = vshrl.u32 %v1944, 7
  %v1946 = vsub.s32 7, %v1945
  %v1947 = vrot.slane %v1901, %v1946
  %v1948 = vmul.f32 %v1906, %v1931
  %v1949 = vmul.f32 %v1911, %v1935
  %v1950 = vmul.f32 %v1916, %v1939
  %v1951 = vmul.f32 %v1921, %v1943
  %v1952 = vmul.f32 %v1926, %v1947
  %v1953 = vsub.f32 %v1862, %v1948
  %v1954 = vsub.f32 %v1863, %v1949
  %v1955 = vsub.f32 %v1864, %v1950
  %v1956 = vsub.f32 %v1865, %v1951
  %v1957 = vsub.f32 %v1866, %v1952
  %v1958 = vsel %vm1902, 1, 0
  %vm1959 = vcmp.eq.s32.totalorder %v1958, 1
  %v1960 = vsel %vm1959, %v1931, %v1953
  %v1961 = vsel %vm1959, %v1935, %v1954
  %v1962 = vsel %vm1959, %v1939, %v1955
  %v1963 = vsel %vm1959, %v1943, %v1956
  %v1964 = vsel %vm1959, %v1947, %v1957
  %1966 = vrot.lane.b32.xlu0 %v1960, 120
  %v1967 = vpop.permute.xlu0 %1966
  %1969 = vxpose.xlu0.b32.start [1/16] %v1967, 128
  %1970 = vxpose.xlu0.b32.cont [2/16] 0.0, 128
  %1971 = vxpose.xlu0.b32.cont [3/16] 0.0, 128
  %1972 = vxpose.xlu0.b32.cont [4/16] 0.0, 128
  %1973 = vxpose.xlu0.b32.cont [5/16] 0.0, 128
  %1974 = vxpose.xlu0.b32.cont [6/16] 0.0, 128
  %1975 = vxpose.xlu0.b32.cont [7/16] 0.0, 128
  %1976 = vxpose.xlu0.b32.cont [8/16] 0.0, 128
  %1977 = vxpose.xlu0.b32.cont [9/16] 0.0, 128
  %1978 = vxpose.xlu0.b32.cont [10/16] 0.0, 128
  %1979 = vxpose.xlu0.b32.cont [11/16] 0.0, 128
  %1980 = vxpose.xlu0.b32.cont [12/16] 0.0, 128
  %1981 = vxpose.xlu0.b32.cont [13/16] 0.0, 128
  %1982 = vxpose.xlu0.b32.cont [14/16] 0.0, 128
  %1983 = vxpose.xlu0.b32.cont [15/16] 0.0, 128
  %1984 = vxpose.xlu0.b32.end [16/16] 0.0, 128
  %v1985 = vpop.trf.xlu0
  %v1986 = vpop.trf.xlu0
  %v1987 = vpop.trf.xlu0
  %v1988 = vpop.trf.xlu0
  %v1989 = vpop.trf.xlu0
  %v1990 = vpop.trf.xlu0
  %v1991 = vpop.trf.xlu0
  %v1992 = vpop.trf.xlu0
  %v1993 = vpop.trf.xlu0
  %v1994 = vpop.trf.xlu0
  %v1995 = vpop.trf.xlu0
  %v1996 = vpop.trf.xlu0
  %v1997 = vpop.trf.xlu0
  %v1998 = vpop.trf.xlu0
  %v1999 = vpop.trf.xlu0
  %v2000 = vpop.trf.xlu0
  %v2002 = vsel %vm1173, %v1985, 0
  %2004 = vmatprep.subr.mxu0 0.0
  %2005 = vmatpush1.msra.mxu0 %v78
  %2006 = vmatprep.subr.mxu0 0.0
  %2007 = vmatpush1.msra.mxu0 0.0
  %2008 = vmatprep.subr.mxu0 0.0
  %2009 = vmatpush1.msra.mxu0 0.0
  %2010 = vmatprep.subr.mxu0 0.0
  %2011 = vmatpush1.msra.mxu0 0.0
  %2012 = vmatprep.subr.mxu0 0.0
  %2013 = vmatpush1.msra.mxu0 0.0
  %2014 = vmatprep.subr.mxu0 0.0
  %2015 = vmatpush1.msra.mxu0 0.0
  %2016 = vmatprep.subr.mxu0 0.0
  %2017 = vmatpush1.msra.mxu0 0.0
  %2018 = vmatprep.subr.mxu0 0.0
  %2019 = vmatpush1.msra.mxu0 0.0
  %2020 = vmatprep.subr.mxu0 0.0
  %2021 = vmatpush1.msra.mxu0 0.0
  %2022 = vmatprep.subr.mxu0 0.0
  %2023 = vmatpush1.msra.mxu0 0.0
  %2024 = vmatprep.subr.mxu0 0.0
  %2025 = vmatpush1.msra.mxu0 0.0
  %2026 = vmatprep.subr.mxu0 0.0
  %2027 = vmatpush1.msra.mxu0 0.0
  %2028 = vmatprep.subr.mxu0 0.0
  %2029 = vmatpush1.msra.mxu0 0.0
  %2030 = vmatprep.subr.mxu0 0.0
  %2031 = vmatpush1.msra.mxu0 0.0
  %2032 = vmatprep.subr.mxu0 0.0
  %2033 = vmatpush1.msra.mxu0 0.0
  %2034 = vmatprep.subr.mxu0 0.0
  %2035 = vmatpush1.msra.mxu0 0.0
  %2036 = vmatprep.subr.mxu0 0.0
  %2037 = vmatpush1.msra.mxu0 0.0
  %2038 = vmatprep.subr.mxu0 0.0
  %2039 = vmatpush1.msra.mxu0 0.0
  %2040 = vmatprep.subr.mxu0 0.0
  %2041 = vmatpush1.msra.mxu0 0.0
  %2042 = vmatprep.subr.mxu0 0.0
  %2043 = vmatpush1.msra.mxu0 0.0
  %2044 = vmatprep.subr.mxu0 0.0
  %2045 = vmatpush1.msra.mxu0 0.0
  %2046 = vmatprep.subr.mxu0 0.0
  %2047 = vmatpush1.msra.mxu0 0.0
  %2048 = vmatprep.subr.mxu0 0.0
  %2049 = vmatpush1.msra.mxu0 0.0
  %2050 = vmatprep.subr.mxu0 0.0
  %2051 = vmatpush1.msra.mxu0 0.0
  %2052 = vmatprep.subr.mxu0 0.0
  %2053 = vmatpush1.msra.mxu0 0.0
  %2054 = vmatprep.subr.mxu0 0.0
  %2055 = vmatpush1.msra.mxu0 0.0
  %2056 = vmatprep.subr.mxu0 0.0
  %2057 = vmatpush1.msra.mxu0 0.0
  %2058 = vmatprep.subr.mxu0 0.0
  %2059 = vmatpush1.msra.mxu0 0.0
  %2060 = vmatprep.subr.mxu0 0.0
  %2061 = vmatpush1.msra.mxu0 0.0
  %2062 = vmatprep.subr.mxu0 0.0
  %2063 = vmatpush1.msra.mxu0 0.0
  %2064 = vmatprep.subr.mxu0 0.0
  %2065 = vmatpush1.msra.mxu0 0.0
  %2066 = vmatprep.subr.mxu0 0.0
  %2067 = vmatpush1.msra.mxu0 0.0
  %2068 = vmatprep.mubr.f32.mxu0 0.0
  %2069 = vmatmul.mubr.f32.gmra.mrb[0].mxu0 %v2002
  %v2070 = vpop.f32.mrb[0].mxu0
  %v2071 = vadd.f32 0.0, %v2070
  %v2072 = vpop.f32.mrb[0].mxu0
  %2073 = vdwg.mxu0
  %2075 = vrot.lane.b32.xlu0 %v1961, 120
  %v2076 = vpop.permute.xlu0 %2075
  %2078 = vxpose.xlu0.b32.start [1/16] %v2076, 128
  %2079 = vxpose.xlu0.b32.cont [2/16] 0.0, 128
  %2080 = vxpose.xlu0.b32.cont [3/16] 0.0, 128
  %2081 = vxpose.xlu0.b32.cont [4/16] 0.0, 128
  %2082 = vxpose.xlu0.b32.cont [5/16] 0.0, 128
  %2083 = vxpose.xlu0.b32.cont [6/16] 0.0, 128
  %2084 = vxpose.xlu0.b32.cont [7/16] 0.0, 128
  %2085 = vxpose.xlu0.b32.cont [8/16] 0.0, 128
  %2086 = vxpose.xlu0.b32.cont [9/16] 0.0, 128
  %2087 = vxpose.xlu0.b32.cont [10/16] 0.0, 128
  %2088 = vxpose.xlu0.b32.cont [11/16] 0.0, 128
  %2089 = vxpose.xlu0.b32.cont [12/16] 0.0, 128
  %2090 = vxpose.xlu0.b32.cont [13/16] 0.0, 128
  %2091 = vxpose.xlu0.b32.cont [14/16] 0.0, 128
  %2092 = vxpose.xlu0.b32.cont [15/16] 0.0, 128
  %2093 = vxpose.xlu0.b32.end [16/16] 0.0, 128
  %v2094 = vpop.trf.xlu0
  %v2095 = vpop.trf.xlu0
  %v2096 = vpop.trf.xlu0
  %v2097 = vpop.trf.xlu0
  %v2098 = vpop.trf.xlu0
  %v2099 = vpop.trf.xlu0
  %v2100 = vpop.trf.xlu0
  %v2101 = vpop.trf.xlu0
  %v2102 = vpop.trf.xlu0
  %v2103 = vpop.trf.xlu0
  %v2104 = vpop.trf.xlu0
  %v2105 = vpop.trf.xlu0
  %v2106 = vpop.trf.xlu0
  %v2107 = vpop.trf.xlu0
  %v2108 = vpop.trf.xlu0
  %v2109 = vpop.trf.xlu0
  %v2111 = vsel %vm1173, %v2094, 0
  %2113 = vmatprep.subr.mxu0 0.0
  %2114 = vmatpush1.msra.mxu0 %v79
  %2115 = vmatprep.subr.mxu0 0.0
  %2116 = vmatpush1.msra.mxu0 0.0
  %2117 = vmatprep.subr.mxu0 0.0
  %2118 = vmatpush1.msra.mxu0 0.0
  %2119 = vmatprep.subr.mxu0 0.0
  %2120 = vmatpush1.msra.mxu0 0.0
  %2121 = vmatprep.subr.mxu0 0.0
  %2122 = vmatpush1.msra.mxu0 0.0
  %2123 = vmatprep.subr.mxu0 0.0
  %2124 = vmatpush1.msra.mxu0 0.0
  %2125 = vmatprep.subr.mxu0 0.0
  %2126 = vmatpush1.msra.mxu0 0.0
  %2127 = vmatprep.subr.mxu0 0.0
  %2128 = vmatpush1.msra.mxu0 0.0
  %2129 = vmatprep.subr.mxu0 0.0
  %2130 = vmatpush1.msra.mxu0 0.0
  %2131 = vmatprep.subr.mxu0 0.0
  %2132 = vmatpush1.msra.mxu0 0.0
  %2133 = vmatprep.subr.mxu0 0.0
  %2134 = vmatpush1.msra.mxu0 0.0
  %2135 = vmatprep.subr.mxu0 0.0
  %2136 = vmatpush1.msra.mxu0 0.0
  %2137 = vmatprep.subr.mxu0 0.0
  %2138 = vmatpush1.msra.mxu0 0.0
  %2139 = vmatprep.subr.mxu0 0.0
  %2140 = vmatpush1.msra.mxu0 0.0
  %2141 = vmatprep.subr.mxu0 0.0
  %2142 = vmatpush1.msra.mxu0 0.0
  %2143 = vmatprep.subr.mxu0 0.0
  %2144 = vmatpush1.msra.mxu0 0.0
  %2145 = vmatprep.subr.mxu0 0.0
  %2146 = vmatpush1.msra.mxu0 0.0
  %2147 = vmatprep.subr.mxu0 0.0
  %2148 = vmatpush1.msra.mxu0 0.0
  %2149 = vmatprep.subr.mxu0 0.0
  %2150 = vmatpush1.msra.mxu0 0.0
  %2151 = vmatprep.subr.mxu0 0.0
  %2152 = vmatpush1.msra.mxu0 0.0
  %2153 = vmatprep.subr.mxu0 0.0
  %2154 = vmatpush1.msra.mxu0 0.0
  %2155 = vmatprep.subr.mxu0 0.0
  %2156 = vmatpush1.msra.mxu0 0.0
  %2157 = vmatprep.subr.mxu0 0.0
  %2158 = vmatpush1.msra.mxu0 0.0
  %2159 = vmatprep.subr.mxu0 0.0
  %2160 = vmatpush1.msra.mxu0 0.0
  %2161 = vmatprep.subr.mxu0 0.0
  %2162 = vmatpush1.msra.mxu0 0.0
  %2163 = vmatprep.subr.mxu0 0.0
  %2164 = vmatpush1.msra.mxu0 0.0
  %2165 = vmatprep.subr.mxu0 0.0
  %2166 = vmatpush1.msra.mxu0 0.0
  %2167 = vmatprep.subr.mxu0 0.0
  %2168 = vmatpush1.msra.mxu0 0.0
  %2169 = vmatprep.subr.mxu0 0.0
  %2170 = vmatpush1.msra.mxu0 0.0
  %2171 = vmatprep.subr.mxu0 0.0
  %2172 = vmatpush1.msra.mxu0 0.0
  %2173 = vmatprep.subr.mxu0 0.0
  %2174 = vmatpush1.msra.mxu0 0.0
  %2175 = vmatprep.subr.mxu0 0.0
  %2176 = vmatpush1.msra.mxu0 0.0
  %2177 = vmatprep.mubr.f32.mxu0 0.0
  %2178 = vmatmul.mubr.f32.gmra.mrb[0].mxu0 %v2111
  %v2179 = vpop.f32.mrb[0].mxu0
  %v2180 = vadd.f32 0.0, %v2179
  %v2181 = vpop.f32.mrb[0].mxu0
  %2182 = vdwg.mxu0
  %2184 = vrot.lane.b32.xlu0 %v1962, 120
  %v2185 = vpop.permute.xlu0 %2184
  %2187 = vxpose.xlu0.b32.start [1/16] %v2185, 128
  %2188 = vxpose.xlu0.b32.cont [2/16] 0.0, 128
  %2189 = vxpose.xlu0.b32.cont [3/16] 0.0, 128
  %2190 = vxpose.xlu0.b32.cont [4/16] 0.0, 128
  %2191 = vxpose.xlu0.b32.cont [5/16] 0.0, 128
  %2192 = vxpose.xlu0.b32.cont [6/16] 0.0, 128
  %2193 = vxpose.xlu0.b32.cont [7/16] 0.0, 128
  %2194 = vxpose.xlu0.b32.cont [8/16] 0.0, 128
  %2195 = vxpose.xlu0.b32.cont [9/16] 0.0, 128
  %2196 = vxpose.xlu0.b32.cont [10/16] 0.0, 128
  %2197 = vxpose.xlu0.b32.cont [11/16] 0.0, 128
  %2198 = vxpose.xlu0.b32.cont [12/16] 0.0, 128
  %2199 = vxpose.xlu0.b32.cont [13/16] 0.0, 128
  %2200 = vxpose.xlu0.b32.cont [14/16] 0.0, 128
  %2201 = vxpose.xlu0.b32.cont [15/16] 0.0, 128
  %2202 = vxpose.xlu0.b32.end [16/16] 0.0, 128
  %v2203 = vpop.trf.xlu0
  %v2204 = vpop.trf.xlu0
  %v2205 = vpop.trf.xlu0
  %v2206 = vpop.trf.xlu0
  %v2207 = vpop.trf.xlu0
  %v2208 = vpop.trf.xlu0
  %v2209 = vpop.trf.xlu0
  %v2210 = vpop.trf.xlu0
  %v2211 = vpop.trf.xlu0
  %v2212 = vpop.trf.xlu0
  %v2213 = vpop.trf.xlu0
  %v2214 = vpop.trf.xlu0
  %v2215 = vpop.trf.xlu0
  %v2216 = vpop.trf.xlu0
  %v2217 = vpop.trf.xlu0
  %v2218 = vpop.trf.xlu0
  %v2220 = vsel %vm1173, %v2203, 0
  %2222 = vmatprep.subr.mxu0 0.0
  %2223 = vmatpush1.msra.mxu0 %v80
  %2224 = vmatprep.subr.mxu0 0.0
  %2225 = vmatpush1.msra.mxu0 0.0
  %2226 = vmatprep.subr.mxu0 0.0
  %2227 = vmatpush1.msra.mxu0 0.0
  %2228 = vmatprep.subr.mxu0 0.0
  %2229 = vmatpush1.msra.mxu0 0.0
  %2230 = vmatprep.subr.mxu0 0.0
  %2231 = vmatpush1.msra.mxu0 0.0
  %2232 = vmatprep.subr.mxu0 0.0
  %2233 = vmatpush1.msra.mxu0 0.0
  %2234 = vmatprep.subr.mxu0 0.0
  %2235 = vmatpush1.msra.mxu0 0.0
  %2236 = vmatprep.subr.mxu0 0.0
  %2237 = vmatpush1.msra.mxu0 0.0
  %2238 = vmatprep.subr.mxu0 0.0
  %2239 = vmatpush1.msra.mxu0 0.0
  %2240 = vmatprep.subr.mxu0 0.0
  %2241 = vmatpush1.msra.mxu0 0.0
  %2242 = vmatprep.subr.mxu0 0.0
  %2243 = vmatpush1.msra.mxu0 0.0
  %2244 = vmatprep.subr.mxu0 0.0
  %2245 = vmatpush1.msra.mxu0 0.0
  %2246 = vmatprep.subr.mxu0 0.0
  %2247 = vmatpush1.msra.mxu0 0.0
  %2248 = vmatprep.subr.mxu0 0.0
  %2249 = vmatpush1.msra.mxu0 0.0
  %2250 = vmatprep.subr.mxu0 0.0
  %2251 = vmatpush1.msra.mxu0 0.0
  %2252 = vmatprep.subr.mxu0 0.0
  %2253 = vmatpush1.msra.mxu0 0.0
  %2254 = vmatprep.subr.mxu0 0.0
  %2255 = vmatpush1.msra.mxu0 0.0
  %2256 = vmatprep.subr.mxu0 0.0
  %2257 = vmatpush1.msra.mxu0 0.0
  %2258 = vmatprep.subr.mxu0 0.0
  %2259 = vmatpush1.msra.mxu0 0.0
  %2260 = vmatprep.subr.mxu0 0.0
  %2261 = vmatpush1.msra.mxu0 0.0
  %2262 = vmatprep.subr.mxu0 0.0
  %2263 = vmatpush1.msra.mxu0 0.0
  %2264 = vmatprep.subr.mxu0 0.0
  %2265 = vmatpush1.msra.mxu0 0.0
  %2266 = vmatprep.subr.mxu0 0.0
  %2267 = vmatpush1.msra.mxu0 0.0
  %2268 = vmatprep.subr.mxu0 0.0
  %2269 = vmatpush1.msra.mxu0 0.0
  %2270 = vmatprep.subr.mxu0 0.0
  %2271 = vmatpush1.msra.mxu0 0.0
  %2272 = vmatprep.subr.mxu0 0.0
  %2273 = vmatpush1.msra.mxu0 0.0
  %2274 = vmatprep.subr.mxu0 0.0
  %2275 = vmatpush1.msra.mxu0 0.0
  %2276 = vmatprep.subr.mxu0 0.0
  %2277 = vmatpush1.msra.mxu0 0.0
  %2278 = vmatprep.subr.mxu0 0.0
  %2279 = vmatpush1.msra.mxu0 0.0
  %2280 = vmatprep.subr.mxu0 0.0
  %2281 = vmatpush1.msra.mxu0 0.0
  %2282 = vmatprep.subr.mxu0 0.0
  %2283 = vmatpush1.msra.mxu0 0.0
  %2284 = vmatprep.subr.mxu0 0.0
  %2285 = vmatpush1.msra.mxu0 0.0
  %2286 = vmatprep.mubr.f32.mxu0 0.0
  %2287 = vmatmul.mubr.f32.gmra.mrb[0].mxu0 %v2220
  %v2288 = vpop.f32.mrb[0].mxu0
  %v2289 = vadd.f32 0.0, %v2288
  %v2290 = vpop.f32.mrb[0].mxu0
  %2291 = vdwg.mxu0
  %2293 = vrot.lane.b32.xlu0 %v1963, 120
  %v2294 = vpop.permute.xlu0 %2293
  %2296 = vxpose.xlu0.b32.start [1/16] %v2294, 128
  %2297 = vxpose.xlu0.b32.cont [2/16] 0.0, 128
  %2298 = vxpose.xlu0.b32.cont [3/16] 0.0, 128
  %2299 = vxpose.xlu0.b32.cont [4/16] 0.0, 128
  %2300 = vxpose.xlu0.b32.cont [5/16] 0.0, 128
  %2301 = vxpose.xlu0.b32.cont [6/16] 0.0, 128
  %2302 = vxpose.xlu0.b32.cont [7/16] 0.0, 128
  %2303 = vxpose.xlu0.b32.cont [8/16] 0.0, 128
  %2304 = vxpose.xlu0.b32.cont [9/16] 0.0, 128
  %2305 = vxpose.xlu0.b32.cont [10/16] 0.0, 128
  %2306 = vxpose.xlu0.b32.cont [11/16] 0.0, 128
  %2307 = vxpose.xlu0.b32.cont [12/16] 0.0, 128
  %2308 = vxpose.xlu0.b32.cont [13/16] 0.0, 128
  %2309 = vxpose.xlu0.b32.cont [14/16] 0.0, 128
  %2310 = vxpose.xlu0.b32.cont [15/16] 0.0, 128
  %2311 = vxpose.xlu0.b32.end [16/16] 0.0, 128
  %v2312 = vpop.trf.xlu0
  %v2313 = vpop.trf.xlu0
  %v2314 = vpop.trf.xlu0
  %v2315 = vpop.trf.xlu0
  %v2316 = vpop.trf.xlu0
  %v2317 = vpop.trf.xlu0
  %v2318 = vpop.trf.xlu0
  %v2319 = vpop.trf.xlu0
  %v2320 = vpop.trf.xlu0
  %v2321 = vpop.trf.xlu0
  %v2322 = vpop.trf.xlu0
  %v2323 = vpop.trf.xlu0
  %v2324 = vpop.trf.xlu0
  %v2325 = vpop.trf.xlu0
  %v2326 = vpop.trf.xlu0
  %v2327 = vpop.trf.xlu0
  %v2329 = vsel %vm1173, %v2312, 0
  %2331 = vmatprep.subr.mxu0 0.0
  %2332 = vmatpush1.msra.mxu0 %v81
  %2333 = vmatprep.subr.mxu0 0.0
  %2334 = vmatpush1.msra.mxu0 0.0
  %2335 = vmatprep.subr.mxu0 0.0
  %2336 = vmatpush1.msra.mxu0 0.0
  %2337 = vmatprep.subr.mxu0 0.0
  %2338 = vmatpush1.msra.mxu0 0.0
  %2339 = vmatprep.subr.mxu0 0.0
  %2340 = vmatpush1.msra.mxu0 0.0
  %2341 = vmatprep.subr.mxu0 0.0
  %2342 = vmatpush1.msra.mxu0 0.0
  %2343 = vmatprep.subr.mxu0 0.0
  %2344 = vmatpush1.msra.mxu0 0.0
  %2345 = vmatprep.subr.mxu0 0.0
  %2346 = vmatpush1.msra.mxu0 0.0
  %2347 = vmatprep.subr.mxu0 0.0
  %2348 = vmatpush1.msra.mxu0 0.0
  %2349 = vmatprep.subr.mxu0 0.0
  %2350 = vmatpush1.msra.mxu0 0.0
  %2351 = vmatprep.subr.mxu0 0.0
  %2352 = vmatpush1.msra.mxu0 0.0
  %2353 = vmatprep.subr.mxu0 0.0
  %2354 = vmatpush1.msra.mxu0 0.0
  %2355 = vmatprep.subr.mxu0 0.0
  %2356 = vmatpush1.msra.mxu0 0.0
  %2357 = vmatprep.subr.mxu0 0.0
  %2358 = vmatpush1.msra.mxu0 0.0
  %2359 = vmatprep.subr.mxu0 0.0
  %2360 = vmatpush1.msra.mxu0 0.0
  %2361 = vmatprep.subr.mxu0 0.0
  %2362 = vmatpush1.msra.mxu0 0.0
  %2363 = vmatprep.subr.mxu0 0.0
  %2364 = vmatpush1.msra.mxu0 0.0
  %2365 = vmatprep.subr.mxu0 0.0
  %2366 = vmatpush1.msra.mxu0 0.0
  %2367 = vmatprep.subr.mxu0 0.0
  %2368 = vmatpush1.msra.mxu0 0.0
  %2369 = vmatprep.subr.mxu0 0.0
  %2370 = vmatpush1.msra.mxu0 0.0
  %2371 = vmatprep.subr.mxu0 0.0
  %2372 = vmatpush1.msra.mxu0 0.0
  %2373 = vmatprep.subr.mxu0 0.0
  %2374 = vmatpush1.msra.mxu0 0.0
  %2375 = vmatprep.subr.mxu0 0.0
  %2376 = vmatpush1.msra.mxu0 0.0
  %2377 = vmatprep.subr.mxu0 0.0
  %2378 = vmatpush1.msra.mxu0 0.0
  %2379 = vmatprep.subr.mxu0 0.0
  %2380 = vmatpush1.msra.mxu0 0.0
  %2381 = vmatprep.subr.mxu0 0.0
  %2382 = vmatpush1.msra.mxu0 0.0
  %2383 = vmatprep.subr.mxu0 0.0
  %2384 = vmatpush1.msra.mxu0 0.0
  %2385 = vmatprep.subr.mxu0 0.0
  %2386 = vmatpush1.msra.mxu0 0.0
  %2387 = vmatprep.subr.mxu0 0.0
  %2388 = vmatpush1.msra.mxu0 0.0
  %2389 = vmatprep.subr.mxu0 0.0
  %2390 = vmatpush1.msra.mxu0 0.0
  %2391 = vmatprep.subr.mxu0 0.0
  %2392 = vmatpush1.msra.mxu0 0.0
  %2393 = vmatprep.subr.mxu0 0.0
  %2394 = vmatpush1.msra.mxu0 0.0
  %2395 = vmatprep.mubr.f32.mxu0 0.0
  %2396 = vmatmul.mubr.f32.gmra.mrb[0].mxu0 %v2329
  %v2397 = vpop.f32.mrb[0].mxu0
  %v2398 = vadd.f32 0.0, %v2397
  %v2399 = vpop.f32.mrb[0].mxu0
  %2400 = vdwg.mxu0
  %2402 = vrot.lane.b32.xlu0 %v1964, 120
  %v2403 = vpop.permute.xlu0 %2402
  %2405 = vxpose.xlu0.b32.start [1/16] %v2403, 128
  %2406 = vxpose.xlu0.b32.cont [2/16] 0.0, 128
  %2407 = vxpose.xlu0.b32.cont [3/16] 0.0, 128
  %2408 = vxpose.xlu0.b32.cont [4/16] 0.0, 128
  %2409 = vxpose.xlu0.b32.cont [5/16] 0.0, 128
  %2410 = vxpose.xlu0.b32.cont [6/16] 0.0, 128
  %2411 = vxpose.xlu0.b32.cont [7/16] 0.0, 128
  %2412 = vxpose.xlu0.b32.cont [8/16] 0.0, 128
  %2413 = vxpose.xlu0.b32.cont [9/16] 0.0, 128
  %2414 = vxpose.xlu0.b32.cont [10/16] 0.0, 128
  %2415 = vxpose.xlu0.b32.cont [11/16] 0.0, 128
  %2416 = vxpose.xlu0.b32.cont [12/16] 0.0, 128
  %2417 = vxpose.xlu0.b32.cont [13/16] 0.0, 128
  %2418 = vxpose.xlu0.b32.cont [14/16] 0.0, 128
  %2419 = vxpose.xlu0.b32.cont [15/16] 0.0, 128
  %2420 = vxpose.xlu0.b32.end [16/16] 0.0, 128
  %v2421 = vpop.trf.xlu0
  %v2422 = vpop.trf.xlu0
  %v2423 = vpop.trf.xlu0
  %v2424 = vpop.trf.xlu0
  %v2425 = vpop.trf.xlu0
  %v2426 = vpop.trf.xlu0
  %v2427 = vpop.trf.xlu0
  %v2428 = vpop.trf.xlu0
  %v2429 = vpop.trf.xlu0
  %v2430 = vpop.trf.xlu0
  %v2431 = vpop.trf.xlu0
  %v2432 = vpop.trf.xlu0
  %v2433 = vpop.trf.xlu0
  %v2434 = vpop.trf.xlu0
  %v2435 = vpop.trf.xlu0
  %v2436 = vpop.trf.xlu0
  %v2438 = vsel %vm1173, %v2421, 0
  %2440 = vmatprep.subr.mxu0 0.0
  %2441 = vmatpush1.msra.mxu0 %v82
  %2442 = vmatprep.subr.mxu0 0.0
  %2443 = vmatpush1.msra.mxu0 0.0
  %2444 = vmatprep.subr.mxu0 0.0
  %2445 = vmatpush1.msra.mxu0 0.0
  %2446 = vmatprep.subr.mxu0 0.0
  %2447 = vmatpush1.msra.mxu0 0.0
  %2448 = vmatprep.subr.mxu0 0.0
  %2449 = vmatpush1.msra.mxu0 0.0
  %2450 = vmatprep.subr.mxu0 0.0
  %2451 = vmatpush1.msra.mxu0 0.0
  %2452 = vmatprep.subr.mxu0 0.0
  %2453 = vmatpush1.msra.mxu0 0.0
  %2454 = vmatprep.subr.mxu0 0.0
  %2455 = vmatpush1.msra.mxu0 0.0
  %2456 = vmatprep.subr.mxu0 0.0
  %2457 = vmatpush1.msra.mxu0 0.0
  %2458 = vmatprep.subr.mxu0 0.0
  %2459 = vmatpush1.msra.mxu0 0.0
  %2460 = vmatprep.subr.mxu0 0.0
  %2461 = vmatpush1.msra.mxu0 0.0
  %2462 = vmatprep.subr.mxu0 0.0
  %2463 = vmatpush1.msra.mxu0 0.0
  %2464 = vmatprep.subr.mxu0 0.0
  %2465 = vmatpush1.msra.mxu0 0.0
  %2466 = vmatprep.subr.mxu0 0.0
  %2467 = vmatpush1.msra.mxu0 0.0
  %2468 = vmatprep.subr.mxu0 0.0
  %2469 = vmatpush1.msra.mxu0 0.0
  %2470 = vmatprep.subr.mxu0 0.0
  %2471 = vmatpush1.msra.mxu0 0.0
  %2472 = vmatprep.subr.mxu0 0.0
  %2473 = vmatpush1.msra.mxu0 0.0
  %2474 = vmatprep.subr.mxu0 0.0
  %2475 = vmatpush1.msra.mxu0 0.0
  %2476 = vmatprep.subr.mxu0 0.0
  %2477 = vmatpush1.msra.mxu0 0.0
  %2478 = vmatprep.subr.mxu0 0.0
  %2479 = vmatpush1.msra.mxu0 0.0
  %2480 = vmatprep.subr.mxu0 0.0
  %2481 = vmatpush1.msra.mxu0 0.0
  %2482 = vmatprep.subr.mxu0 0.0
  %2483 = vmatpush1.msra.mxu0 0.0
  %2484 = vmatprep.subr.mxu0 0.0
  %2485 = vmatpush1.msra.mxu0 0.0
  %2486 = vmatprep.subr.mxu0 0.0
  %2487 = vmatpush1.msra.mxu0 0.0
  %2488 = vmatprep.subr.mxu0 0.0
  %2489 = vmatpush1.msra.mxu0 0.0
  %2490 = vmatprep.subr.mxu0 0.0
  %2491 = vmatpush1.msra.mxu0 0.0
  %2492 = vmatprep.subr.mxu0 0.0
  %2493 = vmatpush1.msra.mxu0 0.0
  %2494 = vmatprep.subr.mxu0 0.0
  %2495 = vmatpush1.msra.mxu0 0.0
  %2496 = vmatprep.subr.mxu0 0.0
  %2497 = vmatpush1.msra.mxu0 0.0
  %2498 = vmatprep.subr.mxu0 0.0
  %2499 = vmatpush1.msra.mxu0 0.0
  %2500 = vmatprep.subr.mxu0 0.0
  %2501 = vmatpush1.msra.mxu0 0.0
  %2502 = vmatprep.subr.mxu0 0.0
  %2503 = vmatpush1.msra.mxu0 0.0
  %2504 = vmatprep.mubr.f32.mxu0 0.0
  %2505 = vmatmul.mubr.f32.gmra.mrb[0].mxu0 %v2438
  %v2506 = vpop.f32.mrb[0].mxu0
  %v2507 = vadd.f32 0.0, %v2506
  %v2508 = vpop.f32.mrb[0].mxu0
  %2509 = vdwg.mxu0
  %v2510 = vsub.f32 %v88, %v2071
  %v2511 = vsub.f32 %v89, %v2180
  %v2512 = vsub.f32 %v90, %v2289
  %v2513 = vsub.f32 %v91, %v2398
  %v2514 = vsub.f32 %v92, %v2507
  %2515 = vmatprep.subr.mxu0 0.0
  %2516 = vmatpush1.xpose.msra.mxu0 %v33
  %2517 = vmatprep.subr.mxu0 0.0
  %2518 = vmatpush1.xpose.msra.mxu0 0.0
  %2519 = vmatprep.subr.mxu0 0.0
  %2520 = vmatpush1.xpose.msra.mxu0 0.0
  %2521 = vmatprep.subr.mxu0 0.0
  %2522 = vmatpush1.xpose.msra.mxu0 0.0
  %2523 = vmatprep.subr.mxu0 0.0
  %2524 = vmatpush1.xpose.msra.mxu0 0.0
  %2525 = vmatprep.subr.mxu0 0.0
  %2526 = vmatpush1.xpose.msra.mxu0 0.0
  %2527 = vmatprep.subr.mxu0 0.0
  %2528 = vmatpush1.xpose.msra.mxu0 0.0
  %2529 = vmatprep.subr.mxu0 0.0
  %2530 = vmatpush1.xpose.msra.mxu0 0.0
  %2531 = vmatprep.subr.mxu0 0.0
  %2532 = vmatpush1.xpose.msra.mxu0 0.0
  %2533 = vmatprep.subr.mxu0 0.0
  %2534 = vmatpush1.xpose.msra.mxu0 0.0
  %2535 = vmatprep.subr.mxu0 0.0
  %2536 = vmatpush1.xpose.msra.mxu0 0.0
  %2537 = vmatprep.subr.mxu0 0.0
  %2538 = vmatpush1.xpose.msra.mxu0 0.0
  %2539 = vmatprep.subr.mxu0 0.0
  %2540 = vmatpush1.xpose.msra.mxu0 0.0
  %2541 = vmatprep.subr.mxu0 0.0
  %2542 = vmatpush1.xpose.msra.mxu0 0.0
  %2543 = vmatprep.subr.mxu0 0.0
  %2544 = vmatpush1.xpose.msra.mxu0 0.0
  %2545 = vmatprep.subr.mxu0 0.0
  %2546 = vmatpush1.xpose.msra.mxu0 0.0
  %2547 = vmatprep.subr.mxu0 0.0
  %2548 = vmatpush1.xpose.msra.mxu0 0.0
  %2549 = vmatprep.subr.mxu0 0.0
  %2550 = vmatpush1.xpose.msra.mxu0 0.0
  %2551 = vmatprep.subr.mxu0 0.0
  %2552 = vmatpush1.xpose.msra.mxu0 0.0
  %2553 = vmatprep.subr.mxu0 0.0
  %2554 = vmatpush1.xpose.msra.mxu0 0.0
  %2555 = vmatprep.subr.mxu0 0.0
  %2556 = vmatpush1.xpose.msra.mxu0 0.0
  %2557 = vmatprep.subr.mxu0 0.0
  %2558 = vmatpush1.xpose.msra.mxu0 0.0
  %2559 = vmatprep.subr.mxu0 0.0
  %2560 = vmatpush1.xpose.msra.mxu0 0.0
  %2561 = vmatprep.subr.mxu0 0.0
  %2562 = vmatpush1.xpose.msra.mxu0 0.0
  %2563 = vmatprep.subr.mxu0 0.0
  %2564 = vmatpush1.xpose.msra.mxu0 0.0
  %2565 = vmatprep.subr.mxu0 0.0
  %2566 = vmatpush1.xpose.msra.mxu0 0.0
  %2567 = vmatprep.subr.mxu0 0.0
  %2568 = vmatpush1.xpose.msra.mxu0 0.0
  %2569 = vmatprep.subr.mxu0 0.0
  %2570 = vmatpush1.xpose.msra.mxu0 0.0
  %2571 = vmatprep.subr.mxu0 0.0
  %2572 = vmatpush1.xpose.msra.mxu0 0.0
  %2573 = vmatprep.subr.mxu0 0.0
  %2574 = vmatpush1.xpose.msra.mxu0 0.0
  %2575 = vmatprep.subr.mxu0 0.0
  %2576 = vmatpush1.xpose.msra.mxu0 0.0
  %2577 = vmatprep.subr.mxu0 0.0
  %2578 = vmatpush1.xpose.msra.mxu0 0.0
  %2579 = vmatprep.mubr.f32.mxu0 0.0
  %2580 = vmatmul.mubr.f32.gmra.mrb[0].mxu0 %v2510
  %v2581 = vpop.f32.mrb[0].mxu0
  %v2582 = vadd.f32 0.0, %v2581
  %v2583 = vpop.f32.mrb[0].mxu0
  %2584 = vdwg.mxu0
  %2585 = vmatprep.subr.mxu0 0.0
  %2586 = vmatpush1.xpose.msra.mxu0 %v34
  %2587 = vmatprep.subr.mxu0 0.0
  %2588 = vmatpush1.xpose.msra.mxu0 0.0
  %2589 = vmatprep.subr.mxu0 0.0
  %2590 = vmatpush1.xpose.msra.mxu0 0.0
  %2591 = vmatprep.subr.mxu0 0.0
  %2592 = vmatpush1.xpose.msra.mxu0 0.0
  %2593 = vmatprep.subr.mxu0 0.0
  %2594 = vmatpush1.xpose.msra.mxu0 0.0
  %2595 = vmatprep.subr.mxu0 0.0
  %2596 = vmatpush1.xpose.msra.mxu0 0.0
  %2597 = vmatprep.subr.mxu0 0.0
  %2598 = vmatpush1.xpose.msra.mxu0 0.0
  %2599 = vmatprep.subr.mxu0 0.0
  %2600 = vmatpush1.xpose.msra.mxu0 0.0
  %2601 = vmatprep.subr.mxu0 0.0
  %2602 = vmatpush1.xpose.msra.mxu0 0.0
  %2603 = vmatprep.subr.mxu0 0.0
  %2604 = vmatpush1.xpose.msra.mxu0 0.0
  %2605 = vmatprep.subr.mxu0 0.0
  %2606 = vmatpush1.xpose.msra.mxu0 0.0
  %2607 = vmatprep.subr.mxu0 0.0
  %2608 = vmatpush1.xpose.msra.mxu0 0.0
  %2609 = vmatprep.subr.mxu0 0.0
  %2610 = vmatpush1.xpose.msra.mxu0 0.0
  %2611 = vmatprep.subr.mxu0 0.0
  %2612 = vmatpush1.xpose.msra.mxu0 0.0
  %2613 = vmatprep.subr.mxu0 0.0
  %2614 = vmatpush1.xpose.msra.mxu0 0.0
  %2615 = vmatprep.subr.mxu0 0.0
  %2616 = vmatpush1.xpose.msra.mxu0 0.0
  %2617 = vmatprep.subr.mxu0 0.0
  %2618 = vmatpush1.xpose.msra.mxu0 0.0
  %2619 = vmatprep.subr.mxu0 0.0
  %2620 = vmatpush1.xpose.msra.mxu0 0.0
  %2621 = vmatprep.subr.mxu0 0.0
  %2622 = vmatpush1.xpose.msra.mxu0 0.0
  %2623 = vmatprep.subr.mxu0 0.0
  %2624 = vmatpush1.xpose.msra.mxu0 0.0
  %2625 = vmatprep.subr.mxu0 0.0
  %2626 = vmatpush1.xpose.msra.mxu0 0.0
  %2627 = vmatprep.subr.mxu0 0.0
  %2628 = vmatpush1.xpose.msra.mxu0 0.0
  %2629 = vmatprep.subr.mxu0 0.0
  %2630 = vmatpush1.xpose.msra.mxu0 0.0
  %2631 = vmatprep.subr.mxu0 0.0
  %2632 = vmatpush1.xpose.msra.mxu0 0.0
  %2633 = vmatprep.subr.mxu0 0.0
  %2634 = vmatpush1.xpose.msra.mxu0 0.0
  %2635 = vmatprep.subr.mxu0 0.0
  %2636 = vmatpush1.xpose.msra.mxu0 0.0
  %2637 = vmatprep.subr.mxu0 0.0
  %2638 = vmatpush1.xpose.msra.mxu0 0.0
  %2639 = vmatprep.subr.mxu0 0.0
  %2640 = vmatpush1.xpose.msra.mxu0 0.0
  %2641 = vmatprep.subr.mxu0 0.0
  %2642 = vmatpush1.xpose.msra.mxu0 0.0
  %2643 = vmatprep.subr.mxu0 0.0
  %2644 = vmatpush1.xpose.msra.mxu0 0.0
  %2645 = vmatprep.subr.mxu0 0.0
  %2646 = vmatpush1.xpose.msra.mxu0 0.0
  %2647 = vmatprep.subr.mxu0 0.0
  %2648 = vmatpush1.xpose.msra.mxu0 0.0
  %2649 = vmatprep.mubr.f32.mxu0 0.0
  %2650 = vmatmul.mubr.f32.gmra.mrb[0].mxu0 %v2511
  %v2651 = vpop.f32.mrb[0].mxu0
  %v2652 = vadd.f32 0.0, %v2651
  %v2653 = vpop.f32.mrb[0].mxu0
  %2654 = vdwg.mxu0
  %2655 = vmatprep.subr.mxu0 0.0
  %2656 = vmatpush1.xpose.msra.mxu0 %v35
  %2657 = vmatprep.subr.mxu0 0.0
  %2658 = vmatpush1.xpose.msra.mxu0 0.0
  %2659 = vmatprep.subr.mxu0 0.0
  %2660 = vmatpush1.xpose.msra.mxu0 0.0
  %2661 = vmatprep.subr.mxu0 0.0
  %2662 = vmatpush1.xpose.msra.mxu0 0.0
  %2663 = vmatprep.subr.mxu0 0.0
  %2664 = vmatpush1.xpose.msra.mxu0 0.0
  %2665 = vmatprep.subr.mxu0 0.0
  %2666 = vmatpush1.xpose.msra.mxu0 0.0
  %2667 = vmatprep.subr.mxu0 0.0
  %2668 = vmatpush1.xpose.msra.mxu0 0.0
  %2669 = vmatprep.subr.mxu0 0.0
  %2670 = vmatpush1.xpose.msra.mxu0 0.0
  %2671 = vmatprep.subr.mxu0 0.0
  %2672 = vmatpush1.xpose.msra.mxu0 0.0
  %2673 = vmatprep.subr.mxu0 0.0
  %2674 = vmatpush1.xpose.msra.mxu0 0.0
  %2675 = vmatprep.subr.mxu0 0.0
  %2676 = vmatpush1.xpose.msra.mxu0 0.0
  %2677 = vmatprep.subr.mxu0 0.0
  %2678 = vmatpush1.xpose.msra.mxu0 0.0
  %2679 = vmatprep.subr.mxu0 0.0
  %2680 = vmatpush1.xpose.msra.mxu0 0.0
  %2681 = vmatprep.subr.mxu0 0.0
  %2682 = vmatpush1.xpose.msra.mxu0 0.0
  %2683 = vmatprep.subr.mxu0 0.0
  %2684 = vmatpush1.xpose.msra.mxu0 0.0
  %2685 = vmatprep.subr.mxu0 0.0
  %2686 = vmatpush1.xpose.msra.mxu0 0.0
  %2687 = vmatprep.subr.mxu0 0.0
  %2688 = vmatpush1.xpose.msra.mxu0 0.0
  %2689 = vmatprep.subr.mxu0 0.0
  %2690 = vmatpush1.xpose.msra.mxu0 0.0
  %2691 = vmatprep.subr.mxu0 0.0
  %2692 = vmatpush1.xpose.msra.mxu0 0.0
  %2693 = vmatprep.subr.mxu0 0.0
  %2694 = vmatpush1.xpose.msra.mxu0 0.0
  %2695 = vmatprep.subr.mxu0 0.0
  %2696 = vmatpush1.xpose.msra.mxu0 0.0
  %2697 = vmatprep.subr.mxu0 0.0
  %2698 = vmatpush1.xpose.msra.mxu0 0.0
  %2699 = vmatprep.subr.mxu0 0.0
  %2700 = vmatpush1.xpose.msra.mxu0 0.0
  %2701 = vmatprep.subr.mxu0 0.0
  %2702 = vmatpush1.xpose.msra.mxu0 0.0
  %2703 = vmatprep.subr.mxu0 0.0
  %2704 = vmatpush1.xpose.msra.mxu0 0.0
  %2705 = vmatprep.subr.mxu0 0.0
  %2706 = vmatpush1.xpose.msra.mxu0 0.0
  %2707 = vmatprep.subr.mxu0 0.0
  %2708 = vmatpush1.xpose.msra.mxu0 0.0
  %2709 = vmatprep.subr.mxu0 0.0
  %2710 = vmatpush1.xpose.msra.mxu0 0.0
  %2711 = vmatprep.subr.mxu0 0.0
  %2712 = vmatpush1.xpose.msra.mxu0 0.0
  %2713 = vmatprep.subr.mxu0 0.0
  %2714 = vmatpush1.xpose.msra.mxu0 0.0
  %2715 = vmatprep.subr.mxu0 0.0
  %2716 = vmatpush1.xpose.msra.mxu0 0.0
  %2717 = vmatprep.subr.mxu0 0.0
  %2718 = vmatpush1.xpose.msra.mxu0 0.0
  %2719 = vmatprep.mubr.f32.mxu0 0.0
  %2720 = vmatmul.mubr.f32.gmra.mrb[0].mxu0 %v2512
  %v2721 = vpop.f32.mrb[0].mxu0
  %v2722 = vadd.f32 0.0, %v2721
  %v2723 = vpop.f32.mrb[0].mxu0
  %2724 = vdwg.mxu0
  %2725 = vmatprep.subr.mxu0 0.0
  %2726 = vmatpush1.xpose.msra.mxu0 %v36
  %2727 = vmatprep.subr.mxu0 0.0
  %2728 = vmatpush1.xpose.msra.mxu0 0.0
  %2729 = vmatprep.subr.mxu0 0.0
  %2730 = vmatpush1.xpose.msra.mxu0 0.0
  %2731 = vmatprep.subr.mxu0 0.0
  %2732 = vmatpush1.xpose.msra.mxu0 0.0
  %2733 = vmatprep.subr.mxu0 0.0
  %2734 = vmatpush1.xpose.msra.mxu0 0.0
  %2735 = vmatprep.subr.mxu0 0.0
  %2736 = vmatpush1.xpose.msra.mxu0 0.0
  %2737 = vmatprep.subr.mxu0 0.0
  %2738 = vmatpush1.xpose.msra.mxu0 0.0
  %2739 = vmatprep.subr.mxu0 0.0
  %2740 = vmatpush1.xpose.msra.mxu0 0.0
  %2741 = vmatprep.subr.mxu0 0.0
  %2742 = vmatpush1.xpose.msra.mxu0 0.0
  %2743 = vmatprep.subr.mxu0 0.0
  %2744 = vmatpush1.xpose.msra.mxu0 0.0
  %2745 = vmatprep.subr.mxu0 0.0
  %2746 = vmatpush1.xpose.msra.mxu0 0.0
  %2747 = vmatprep.subr.mxu0 0.0
  %2748 = vmatpush1.xpose.msra.mxu0 0.0
  %2749 = vmatprep.subr.mxu0 0.0
  %2750 = vmatpush1.xpose.msra.mxu0 0.0
  %2751 = vmatprep.subr.mxu0 0.0
  %2752 = vmatpush1.xpose.msra.mxu0 0.0
  %2753 = vmatprep.subr.mxu0 0.0
  %2754 = vmatpush1.xpose.msra.mxu0 0.0
  %2755 = vmatprep.subr.mxu0 0.0
  %2756 = vmatpush1.xpose.msra.mxu0 0.0
  %2757 = vmatprep.subr.mxu0 0.0
  %2758 = vmatpush1.xpose.msra.mxu0 0.0
  %2759 = vmatprep.subr.mxu0 0.0
  %2760 = vmatpush1.xpose.msra.mxu0 0.0
  %2761 = vmatprep.subr.mxu0 0.0
  %2762 = vmatpush1.xpose.msra.mxu0 0.0
  %2763 = vmatprep.subr.mxu0 0.0
  %2764 = vmatpush1.xpose.msra.mxu0 0.0
  %2765 = vmatprep.subr.mxu0 0.0
  %2766 = vmatpush1.xpose.msra.mxu0 0.0
  %2767 = vmatprep.subr.mxu0 0.0
  %2768 = vmatpush1.xpose.msra.mxu0 0.0
  %2769 = vmatprep.subr.mxu0 0.0
  %2770 = vmatpush1.xpose.msra.mxu0 0.0
  %2771 = vmatprep.subr.mxu0 0.0
  %2772 = vmatpush1.xpose.msra.mxu0 0.0
  %2773 = vmatprep.subr.mxu0 0.0
  %2774 = vmatpush1.xpose.msra.mxu0 0.0
  %2775 = vmatprep.subr.mxu0 0.0
  %2776 = vmatpush1.xpose.msra.mxu0 0.0
  %2777 = vmatprep.subr.mxu0 0.0
  %2778 = vmatpush1.xpose.msra.mxu0 0.0
  %2779 = vmatprep.subr.mxu0 0.0
  %2780 = vmatpush1.xpose.msra.mxu0 0.0
  %2781 = vmatprep.subr.mxu0 0.0
  %2782 = vmatpush1.xpose.msra.mxu0 0.0
  %2783 = vmatprep.subr.mxu0 0.0
  %2784 = vmatpush1.xpose.msra.mxu0 0.0
  %2785 = vmatprep.subr.mxu0 0.0
  %2786 = vmatpush1.xpose.msra.mxu0 0.0
  %2787 = vmatprep.subr.mxu0 0.0
  %2788 = vmatpush1.xpose.msra.mxu0 0.0
  %2789 = vmatprep.mubr.f32.mxu0 0.0
  %2790 = vmatmul.mubr.f32.gmra.mrb[0].mxu0 %v2513
  %v2791 = vpop.f32.mrb[0].mxu0
  %v2792 = vadd.f32 0.0, %v2791
  %v2793 = vpop.f32.mrb[0].mxu0
  %2794 = vdwg.mxu0
  %2795 = vmatprep.subr.mxu0 0.0
  %2796 = vmatpush1.xpose.msra.mxu0 %v37
  %2797 = vmatprep.subr.mxu0 0.0
  %2798 = vmatpush1.xpose.msra.mxu0 0.0
  %2799 = vmatprep.subr.mxu0 0.0
  %2800 = vmatpush1.xpose.msra.mxu0 0.0
  %2801 = vmatprep.subr.mxu0 0.0
  %2802 = vmatpush1.xpose.msra.mxu0 0.0
  %2803 = vmatprep.subr.mxu0 0.0
  %2804 = vmatpush1.xpose.msra.mxu0 0.0
  %2805 = vmatprep.subr.mxu0 0.0
  %2806 = vmatpush1.xpose.msra.mxu0 0.0
  %2807 = vmatprep.subr.mxu0 0.0
  %2808 = vmatpush1.xpose.msra.mxu0 0.0
  %2809 = vmatprep.subr.mxu0 0.0
  %2810 = vmatpush1.xpose.msra.mxu0 0.0
  %2811 = vmatprep.subr.mxu0 0.0
  %2812 = vmatpush1.xpose.msra.mxu0 0.0
  %2813 = vmatprep.subr.mxu0 0.0
  %2814 = vmatpush1.xpose.msra.mxu0 0.0
  %2815 = vmatprep.subr.mxu0 0.0
  %2816 = vmatpush1.xpose.msra.mxu0 0.0
  %2817 = vmatprep.subr.mxu0 0.0
  %2818 = vmatpush1.xpose.msra.mxu0 0.0
  %2819 = vmatprep.subr.mxu0 0.0
  %2820 = vmatpush1.xpose.msra.mxu0 0.0
  %2821 = vmatprep.subr.mxu0 0.0
  %2822 = vmatpush1.xpose.msra.mxu0 0.0
  %2823 = vmatprep.subr.mxu0 0.0
  %2824 = vmatpush1.xpose.msra.mxu0 0.0
  %2825 = vmatprep.subr.mxu0 0.0
  %2826 = vmatpush1.xpose.msra.mxu0 0.0
  %2827 = vmatprep.subr.mxu0 0.0
  %2828 = vmatpush1.xpose.msra.mxu0 0.0
  %2829 = vmatprep.subr.mxu0 0.0
  %2830 = vmatpush1.xpose.msra.mxu0 0.0
  %2831 = vmatprep.subr.mxu0 0.0
  %2832 = vmatpush1.xpose.msra.mxu0 0.0
  %2833 = vmatprep.subr.mxu0 0.0
  %2834 = vmatpush1.xpose.msra.mxu0 0.0
  %2835 = vmatprep.subr.mxu0 0.0
  %2836 = vmatpush1.xpose.msra.mxu0 0.0
  %2837 = vmatprep.subr.mxu0 0.0
  %2838 = vmatpush1.xpose.msra.mxu0 0.0
  %2839 = vmatprep.subr.mxu0 0.0
  %2840 = vmatpush1.xpose.msra.mxu0 0.0
  %2841 = vmatprep.subr.mxu0 0.0
  %2842 = vmatpush1.xpose.msra.mxu0 0.0
  %2843 = vmatprep.subr.mxu0 0.0
  %2844 = vmatpush1.xpose.msra.mxu0 0.0
  %2845 = vmatprep.subr.mxu0 0.0
  %2846 = vmatpush1.xpose.msra.mxu0 0.0
  %2847 = vmatprep.subr.mxu0 0.0
  %2848 = vmatpush1.xpose.msra.mxu0 0.0
  %2849 = vmatprep.subr.mxu0 0.0
  %2850 = vmatpush1.xpose.msra.mxu0 0.0
  %2851 = vmatprep.subr.mxu0 0.0
  %2852 = vmatpush1.xpose.msra.mxu0 0.0
  %2853 = vmatprep.subr.mxu0 0.0
  %2854 = vmatpush1.xpose.msra.mxu0 0.0
  %2855 = vmatprep.subr.mxu0 0.0
  %2856 = vmatpush1.xpose.msra.mxu0 0.0
  %2857 = vmatprep.subr.mxu0 0.0
  %2858 = vmatpush1.xpose.msra.mxu0 0.0
  %2859 = vmatprep.mubr.f32.mxu0 0.0
  %2860 = vmatmul.mubr.f32.gmra.mrb[0].mxu0 %v2514
  %v2861 = vpop.f32.mrb[0].mxu0
  %v2862 = vadd.f32 0.0, %v2861
  %v2863 = vpop.f32.mrb[0].mxu0
  %2864 = vdwg.mxu0
  %v2865 = vmul.f32 %v48, 127.0
  %v2866 = vmul.f32 %v49, 127.0
  %v2867 = vmul.f32 %v50, 127.0
  %v2868 = vmul.f32 %v51, 127.0
  %v2869 = vmul.f32 %v52, 127.0
  %2870 = vadd.xlane.f32.xlu0 %v2510
  %v2871 = vpop.xlane.xlu0 %2870
  %2872 = vadd.xlane.f32.xlu0 %v2511
  %v2873 = vpop.xlane.xlu0 %2872
  %2874 = vadd.xlane.f32.xlu0 %v2512
  %v2875 = vpop.xlane.xlu0 %2874
  %2876 = vadd.xlane.f32.xlu0 %v2513
  %v2877 = vpop.xlane.xlu0 %2876
  %2878 = vadd.xlane.f32.xlu0 %v2514
  %v2879 = vpop.xlane.xlu0 %2878
  %v2880 = vmul.f32 %v2510, %v2510
  %v2881 = vmul.f32 %v2511, %v2511
  %v2882 = vmul.f32 %v2512, %v2512
  %v2883 = vmul.f32 %v2513, %v2513
  %v2884 = vmul.f32 %v2514, %v2514
  %2885 = vadd.xlane.f32.xlu0 %v2880
  %v2886 = vpop.xlane.xlu0 %2885
  %2887 = vadd.xlane.f32.xlu0 %v2881
  %v2888 = vpop.xlane.xlu0 %2887
  %2889 = vadd.xlane.f32.xlu0 %v2882
  %v2890 = vpop.xlane.xlu0 %2889
  %2891 = vadd.xlane.f32.xlu0 %v2883
  %v2892 = vpop.xlane.xlu0 %2891
  %2893 = vadd.xlane.f32.xlu0 %v2884
  %v2894 = vpop.xlane.xlu0 %2893
  %2900 = vrot.lane.b32.xlu0 %v870, 16
  %v2901 = vpop.permute.xlu0 %2900
  %2902 = vrot.lane.b32.xlu0 %v940, 16
  %v2903 = vpop.permute.xlu0 %2902
  %2904 = vrot.lane.b32.xlu0 %v1010, 16
  %v2905 = vpop.permute.xlu0 %2904
  %2906 = vrot.lane.b32.xlu0 %v1080, 16
  %v2907 = vpop.permute.xlu0 %2906
  %2908 = vrot.lane.b32.xlu0 %v1150, 16
  %v2909 = vpop.permute.xlu0 %2908
  %2920 = vrot.lane.b32.xlu0 %v2582, 24
  %v2921 = vpop.permute.xlu0 %2920
  %2922 = vrot.lane.b32.xlu0 %v2652, 24
  %v2923 = vpop.permute.xlu0 %2922
  %2924 = vrot.lane.b32.xlu0 %v2722, 24
  %v2925 = vpop.permute.xlu0 %2924
  %2926 = vrot.lane.b32.xlu0 %v2792, 24
  %v2927 = vpop.permute.xlu0 %2926
  %2928 = vrot.lane.b32.xlu0 %v2862, 24
  %v2929 = vpop.permute.xlu0 %2928
  %v2935 = vsel %vm1173, %v443, %v1960
  %v2936 = vsel %vm1173, %v444, %v1961
  %v2937 = vsel %vm1173, %v445, %v1962
  %v2938 = vsel %vm1173, %v446, %v1963
  %v2939 = vsel %vm1173, %v447, %v1964
  %vm2940 = vcmask 130048
  %v2941 = vsel %vm2940, %v2935, %v2901
  %v2942 = vsel %vm2940, %v2936, %v2903
  %v2943 = vsel %vm2940, %v2937, %v2905
  %v2944 = vsel %vm2940, %v2938, %v2907
  %v2945 = vsel %vm2940, %v2939, %v2909
  %vm2946 = vcmask 195584
  %v2947 = vsel %vm2946, %v2941, %v2921
  %v2948 = vsel %vm2946, %v2942, %v2923
  %v2949 = vsel %vm2946, %v2943, %v2925
  %v2950 = vsel %vm2946, %v2944, %v2927
  %v2951 = vsel %vm2946, %v2945, %v2929
  %vm2952 = vcmask 261120
  %v2953 = vsel %vm2952, %v2947, %v2865
  %v2954 = vsel %vm2952, %v2948, %v2866
  %v2955 = vsel %vm2952, %v2949, %v2867
  %v2956 = vsel %vm2952, %v2950, %v2868
  %v2957 = vsel %vm2952, %v2951, %v2869
  %vm2958 = vcmask 269312
  %v2959 = vsel %vm2958, %v2953, %v2871
  %v2960 = vsel %vm2958, %v2954, %v2873
  %v2961 = vsel %vm2958, %v2955, %v2875
  %v2962 = vsel %vm2958, %v2956, %v2877
  %v2963 = vsel %vm2958, %v2957, %v2879
  %vm2964 = vcmask 277504
  %v2965 = vsel %vm2964, %v2959, %v2886
  %v2966 = vsel %vm2964, %v2960, %v2888
  %v2967 = vsel %vm2964, %v2961, %v2890
  %v2968 = vsel %vm2964, %v2962, %v2892
  %v2969 = vsel %vm2964, %v2963, %v2894
  %vm2970 = vcmask 285696
  %v2971 = vsel %vm2970, %v2965, 0.0
  %v2972 = vsel %vm2970, %v2966, 0.0
  %v2973 = vsel %vm2970, %v2967, 0.0
  %v2974 = vsel %vm2970, %v2968, 0.0
  %v2975 = vsel %vm2970, %v2969, 0.0
  %2976 = vst [vmem:[%s1] sm:$0xff] %v2971
  %2977 = vst [vmem:[%s1 + $0x8] sm:$0xff] %v2972
  %2978 = vst [vmem:[%s1 + $0x10] sm:$0xff] %v2973
  %2979 = vst [vmem:[%s1 + $0x18] sm:$0xff] %v2974
  %2980 = vst [vmem:[%s1 + $0x20] sm:$0xff] %v2975
  // Predicated region
  $region6: #{liang_forward.1} parent=0 // pred_check
    _
  $region7: #{liang_forward.1} parent=0 // pred_check_branch
    %2982 = sbr.rel (0) target = $region9
  $region8: #{liang_forward.1} parent=0 // pred_region
    _
  $region9: #{liang_forward.1} parent=0 // pred_fallthru
    _
  // Predicated region
  $region10: #{liang_forward.1} parent=0 // pred_check
    _
  $region11: #{liang_forward.1} parent=0 // pred_check_branch
    %2984 = sbr.rel (0) target = $region13
  $region12: #{liang_forward.1} parent=0 // pred_region
    _
  $region13: #{liang_forward.1} parent=0 // pred_fallthru
    _

// kernel: custom-call.11
$region0: #{custom-call.11}
  %s0 = inlined_call_operand.vmem [shape: f32[5,8,10,10], index: 0, kind: input, shape index: {}]
  %s1 = inlined_call_operand.vmem [shape: f32[5,8,10,10], index: 1, kind: output, shape index: {0}]
  %s2 = inlined_call_operand.hbm [shape: s32[5,8,10], index: 2, kind: output, shape index: {1}]
  %s3 = inlined_call_operand.vmem [shape: s32[5,8,10], index: 3, kind: output, shape index: {2}]
  %4 = xla_tuple %s1, %s2, %s3
  $region1: #{custom-call.11} parent=0
    #allocation0 [shape = 'u8[16384]{0}', space=vmem, size = 0x4000, scoped, tag = 'operand span for operand 0']
    #allocation1 [shape = 'u8[16384]{0}', space=vmem, size = 0x4000, scoped, tag = 'operand span for operand 1']
    #allocation2 [shape = 'u8[8192]{0}', space=vmem, size = 0x2000, scoped, tag = 'operand span for operand 2']
    #allocation3 [shape = 's32[2]{0}', space=sflag, size = 0x8, scoped, tag = 'scoped memory for custom-call.11']
    #allocation4 [shape = 'u8[8192]{0}', space=vmem, size = 0x2000, scoped, tag = 'operand span for operand 3']
    %5 = vsyncpa [#allocation3], 0
    %s6 = scalar_lea.sflag [#allocation3], 1
    %7 = vsyncpa %s6, 0
    loop: start=0, step=1, limit=42
    $region2: #{custom-call.11} parent=1 // loop_pre_header
      _
    $region3: #{custom-call.11} parent=1 // loop_header
      %s9 = sphi 0, %s13
      %p10 = scmp.ge.s32.totalorder %s9, 42
      %s16 = sphi 0, %s28
      %s17 = sphi 0, %s24
      %s18 = sphi 0, %s16
      %s19 = sphi 0, %s17
      %s20 = sphi 0, %s18
      %s21 = sphi 0, %s19
      %s35 = sphi 0, %s37
      %s38 = sphi 0, %s35
      %s39 = sphi 0, %s38
      %s55 = sphi 0, %s39
      %s65 = sphi 0, %s67
      %s68 = sphi 0, %s65
      %s69 = sphi 0, %s68
      %s85 = sphi 0, %s69
    $region4: #{custom-call.11} parent=1 // loop_header_branch
      %12 = sbr.rel (%p10) target = $region8
    $region5: #{custom-call.11} parent=1 // loop_body
      %s14 = ssub.s32 %s9, 1
      %s15 = ssub.s32 %s9, 2
      %s22 = sadd.s32 1, %s17
      %p23 = scmp.ge.s32.totalorder %s22, 8
      %s24 = scalar_select %p23, 0, %s22
      %s25 = sadd.s32 1, %s16
      %s26 = scalar_select %p23, %s25, %s16
      %p27 = scmp.ge.s32.totalorder %s26, 5
      %s28 = scalar_select %p27, 0, %s26
      %s29 = sshrl.u32 %s17, 3
      %s30 = sshrl.u32 %s24, 3
      %s31 = ssub.s32 %s16, %s28
      %s32 = ssub.s32 %s29, %s30
      %s33 = sor.u32 %s31, %s32
      %p34 = scmp.eq.s32.totalorder %s33, 0
      %s36 = sadd.s32 %s35, 1
      %s37 = scalar_select %p34, %s35, %s36
      %p40 = pneg %p34
      %p41 = scmp.eq.s32.totalorder %s9, 39
      %p42 = por %p40, %p41
      %p43 = scmp.ne.s32.totalorder %s35, %s38
      %p44 = scmp.eq.s32.totalorder %s9, 0
      %p45 = por %p43, %p44
      %p46 = scmp.ne.s32.totalorder %s35, %s38
      %p47 = scmp.eq.s32.totalorder %s14, 39
      %p48 = por %p46, %p47
      %p49 = scmp.ne.s32.totalorder %s38, %s39
      %p50 = scmp.eq.s32.totalorder %s14, 0
      %p51 = por %p49, %p50
      %p52 = scmp.ne.s32.totalorder %s38, %s39
      %p53 = scmp.eq.s32.totalorder %s15, 39
      %p54 = por %p52, %p53
      %p56 = scmp.ne.s32.totalorder %s39, %s55
      %p57 = scmp.eq.s32.totalorder %s15, 0
      %p58 = por %p56, %p57
      %s59 = sshrl.u32 %s17, 3
      %s60 = sshrl.u32 %s24, 3
      %s61 = ssub.s32 %s16, %s28
      %s62 = ssub.s32 %s59, %s60
      %s63 = sor.u32 %s61, %s62
      %p64 = scmp.eq.s32.totalorder %s63, 0
      %s66 = sadd.s32 %s65, 1
      %s67 = scalar_select %p64, %s65, %s66
      %p70 = pneg %p64
      %p71 = scmp.eq.s32.totalorder %s9, 39
      %p72 = por %p70, %p71
      %p73 = scmp.ne.s32.totalorder %s65, %s68
      %p74 = scmp.eq.s32.totalorder %s9, 0
      %p75 = por %p73, %p74
      %p76 = scmp.ne.s32.totalorder %s65, %s68
      %p77 = scmp.eq.s32.totalorder %s14, 39
      %p78 = por %p76, %p77
      %p79 = scmp.ne.s32.totalorder %s68, %s69
      %p80 = scmp.eq.s32.totalorder %s14, 0
      %p81 = por %p79, %p80
      %p82 = scmp.ne.s32.totalorder %s68, %s69
      %p83 = scmp.eq.s32.totalorder %s15, 39
      %p84 = por %p82, %p83
      %p86 = scmp.ne.s32.totalorder %s69, %s85
      %p87 = scmp.eq.s32.totalorder %s15, 0
      %p88 = por %p86, %p87
      %p89 = scmp.le.s32.totalorder 1, %s9
      %p90 = scmp.lt.s32.totalorder %s9, 41
      %p91 = pnand %p89, %p90
      %p92 = pneg %p91
      // Predicated region
      $region9: #{custom-call.11} parent=5 // pred_check
        _
      $region10: #{custom-call.11} parent=5 // pred_check_branch
        %94 = sbr.rel (%p91) target = $region12
      $region11: #{custom-call.11} parent=5 // pred_region
        %s95 = ssub.s32 %s9, 1
      $region12: #{custom-call.11} parent=5 // pred_fallthru
        _
      %p96 = scmp.lt.s32.totalorder %s9, 40
      // Predicated region
      $region13: #{custom-call.11} parent=5 // pred_check
        %p97 = pneg %p96
      $region14: #{custom-call.11} parent=5 // pred_check_branch
        %99 = sbr.rel (%p97) target = $region16
      $region15: #{custom-call.11} parent=5 // pred_region
        %s100 = sand.u32 %s9, 1
        %s101 = sand.u32 %s9, 1
        %s102 = smul.addr %s101, 16
        %s103 = scalar_lea.vmem [#allocation0], %s102
        %s104 = smul.addr %s16, 8
        %s105 = sadd.s32 %s17, %s104
        %s106 = smul.addr %s105, 16
        %s107 = scalar_lea.vmem %s0, %s106
        // Predicated region
        $region17: #{custom-call.11} parent=15 // pred_check
          _
        $region18: #{custom-call.11} parent=15 // pred_check_branch
          %109 = sbr.rel (0) target = $region20
        $region19: #{custom-call.11} parent=15 // pred_region
          // Predicated region
          $region21: #{custom-call.11} parent=19 // pred_check
            _
          $region22: #{custom-call.11} parent=19 // pred_check_branch
            %111 = sbr.rel (0) target = $region24
          $region23: #{custom-call.11} parent=19 // pred_region
            loop: start=0, step=1, limit=1
            $region25: #{custom-call.11} parent=23 // loop_pre_header
              _
            $region26: #{custom-call.11} parent=23 // loop_header
              %s113 = sphi 0, %s117
              %p114 = scmp.ge.s32.totalorder %s113, 1
              %s118 = sphi %s107, %s107
              %s119 = sphi %s103, %s103
            $region27: #{custom-call.11} parent=23 // loop_header_branch
              %116 = sbr.rel (%p114) target = $region31
            $region28: #{custom-call.11} parent=23 // loop_body
              %v120 = vld [vmem:[%s118] sm:$0xff]
              %121 = vst [vmem:[%s119] sm:$0xff] %v120
              %v122 = vld [vmem:[%s118 + $0x8] sm:$0xff]
              %123 = vst [vmem:[%s119 + $0x8] sm:$0xff] %v122
            $region29: #{custom-call.11} parent=23 // loop_footer
              %s117 = sadd.s32 1, %s113
            $region30: #{custom-call.11} parent=23 // loop_footer_branch
              %112 = sbr.rel target = $region26
            $region31: #{custom-call.11} parent=23 // loop_exit
              _
          $region24: #{custom-call.11} parent=19 // pred_fallthru
            _
          // Predicated region
          $region32: #{custom-call.11} parent=19 // pred_check
            _
          $region33: #{custom-call.11} parent=19 // pred_check_branch
            %125 = sbr.rel target = $region35
          $region34: #{custom-call.11} parent=19 // pred_region
            _
          $region35: #{custom-call.11} parent=19 // pred_fallthru
            _
        $region20: #{custom-call.11} parent=15 // pred_fallthru
          _
        %126 = vnop
      $region16: #{custom-call.11} parent=5 // pred_fallthru
        _
      %p127 = scmp.le.s32.totalorder 1, %s9
      %p128 = scmp.lt.s32.totalorder %s9, 41
      %p129 = pnand %p127, %p128
      %p130 = pneg %p129
      // Predicated region
      $region36: #{custom-call.11} parent=5 // pred_check
        _
      $region37: #{custom-call.11} parent=5 // pred_check_branch
        %132 = sbr.rel (%p129) target = $region39
      $region38: #{custom-call.11} parent=5 // pred_region
        #allocation5 [shape = 's32[10,128]{1,0}', space=vmem, size = 0x2000, scoped, tag = 'scratch for permutations']
        %s133 = ssub.s32 %s9, 1
        %s134 = sand.u32 %s14, 1
        %s135 = sand.u32 %s14, 1
        %s136 = smul.addr %s135, 16
        %s137 = scalar_lea.vmem [#allocation0], %s136
        %s138 = sand.u32 %s14, 1
        %s139 = sand.u32 %s14, 1
        %s140 = smul.addr %s139, 16
        %s141 = scalar_lea.vmem [#allocation0], %s140
        %s142 = sand.u32 %s14, 1
        %s143 = sand.u32 %s14, 1
        %s144 = smul.addr %s143, 16
        %s145 = scalar_lea.vmem [#allocation1], %s144
        %p146 = pneg %p51
        %p147 = pneg %p48
        %s148 = sand.u32 %s38, 1
        %s149 = scalar_lea.sflag [#allocation3], %s148
        %s150 = sand.u32 %s38, 1
        %s151 = smul.addr %s150, 8
        %s152 = scalar_lea.vmem [#allocation2], %s151
        %p153 = pneg %p81
        %p154 = pneg %p78
        %s155 = sand.u32 %s68, 1
        %s156 = sand.u32 %s68, 1
        %s157 = smul.addr %s156, 8
        %s158 = scalar_lea.vmem [#allocation4], %s157
        %s159 = sshrl.u32 %s19, 3
        %s160 = sshrl.u32 %s19, 3
        %v161 = vld [vmem:[%s137] sm:$0xff]
        %162 = vst [vmem:[%s145] sm:$0xff] %v161
        %s163 = scalar_lea.vmem %s145, 8 [#allocation1]
        %s164 = scalar_lea.vmem %s137, 8 [#allocation0]
        %v165 = vld [vmem:[%s164] sm:$0xff]
        %166 = vst [vmem:[%s163] sm:$0xff] %v165
        %s167 = sand.u32 %s19, 7
        %s168 = scalar_lea.vmem %s152, %s167 [#allocation2]
        %s169 = sand.u32 %s19, 7
        %s170 = scalar_lea.vmem %s158, %s169 [#allocation4]
        %171 = vst [vmem:[%s168] sm:$0x1] 0
        %v172 = vlaneseq
        %v173 = vshrl.u32 %v172, 7
        %v174 = vmov %v173
        loop: start=0, step=1, limit=2
        $region40: #{custom-call.11} parent=38 // loop_pre_header
          _
        $region41: #{custom-call.11} parent=38 // loop_header
          %s176 = sphi 0, %s180
          %p177 = scmp.ge.s32.totalorder %s176, 2
        $region42: #{custom-call.11} parent=38 // loop_header_branch
          %179 = sbr.rel (%p177) target = $region46
        $region43: #{custom-call.11} parent=38 // loop_body
          %s181 = smul.addr %s176, 8
          %s182 = scalar_lea.vmem [#allocation5], %s181
          %s183 = smul.u32 %s176, 8
          %v184 = vstv %s183
          %v185 = vadd.s32 %v174, %v184
          %186 = vst [vmem:[%s182] sm:$0xff] %v185
        $region44: #{custom-call.11} parent=38 // loop_footer
          %s180 = sadd.s32 1, %s176
        $region45: #{custom-call.11} parent=38 // loop_footer_branch
          %175 = sbr.rel target = $region41
        $region46: #{custom-call.11} parent=38 // loop_exit
          _
        loop: start=0, step=1, limit=10
        $region47: #{custom-call.11} parent=38 // loop_pre_header
          _
        $region48: #{custom-call.11} parent=38 // loop_header
          %s188 = sphi 0, %s192
          %p189 = scmp.ge.s32.totalorder %s188, 10
        $region49: #{custom-call.11} parent=38 // loop_header_branch
          %191 = sbr.rel (%p189) target = $region53
        $region50: #{custom-call.11} parent=38 // loop_body
          %v193 = vstv %s188
          %v194 = vlaneseq
          %v195 = vshrl.u32 %v194, 7
          %v196 = vmov %v195
          %v197 = vld [vmem:[%s145] sm:$0xff]
          %v198 = vand.u32 2147483647, %v197
          %v200 = vstv %s188
          %vm201 = vcmp.ge.s32.totalorder %v196, %v200
          %vm202 = vcmp.lt.s32.totalorder %v196, 10
          %vm203 = vmand %vm201, %vm202
          %vm204 = vcmp.lt.f32.partialorder -inf, %v198
          %vm205 = vmand %vm203, %vm204
          %v206 = vsel %vm205, %v196, %v193
          %v207 = vsel %vm205, %v198, -inf
          %s208 = scalar_lea.vmem %s145, 8 [#allocation1]
          %v209 = vld [vmem:[%s208] sm:$0xff]
          %v210 = vand.u32 2147483647, %v209
          %v211 = vadd.s32 %v196, 8
          %v212 = vstv %s188
          %vm213 = vcmp.ge.s32.totalorder %v211, %v212
          %vm214 = vcmp.lt.s32.totalorder %v211, 10
          %vm215 = vmand %vm213, %vm214
          %vm216 = vcmp.lt.f32.partialorder %v207, %v210
          %vm217 = vmand %vm215, %vm216
          %v218 = vsel %vm217, %v211, %v206
          %v219 = vsel %vm217, %v210, %v207
          %v220 = vrot.slane %v219, 1
          %v221 = vrot.slane %v218, 1
          %vm222 = vcmp.ge.f32.partialorder %v220, %v219
          %v223 = vsel %vm222, %v220, %v219
          %v224 = vsel %vm222, %v221, %v218
          %v225 = vrot.slane %v220, 1
          %v226 = vrot.slane %v221, 1
          %vm227 = vcmp.ge.f32.partialorder %v225, %v223
          %v228 = vsel %vm227, %v225, %v223
          %v229 = vsel %vm227, %v226, %v224
          %v230 = vrot.slane %v225, 1
          %v231 = vrot.slane %v226, 1
          %vm232 = vcmp.ge.f32.partialorder %v230, %v228
          %v233 = vsel %vm232, %v230, %v228
          %v234 = vsel %vm232, %v231, %v229
          %v235 = vrot.slane %v230, 1
          %v236 = vrot.slane %v231, 1
          %vm237 = vcmp.ge.f32.partialorder %v235, %v233
          %v238 = vsel %vm237, %v235, %v233
          %v239 = vsel %vm237, %v236, %v234
          %v240 = vrot.slane %v235, 1
          %v241 = vrot.slane %v236, 1
          %vm242 = vcmp.ge.f32.partialorder %v240, %v238
          %v243 = vsel %vm242, %v240, %v238
          %v244 = vsel %vm242, %v241, %v239
          %v245 = vrot.slane %v240, 1
          %v246 = vrot.slane %v241, 1
          %vm247 = vcmp.ge.f32.partialorder %v245, %v243
          %v248 = vsel %vm247, %v245, %v243
          %v249 = vsel %vm247, %v246, %v244
          %v250 = vrot.slane %v245, 1
          %v251 = vrot.slane %v246, 1
          %vm252 = vcmp.ge.f32.partialorder %v250, %v248
          %v253 = vsel %vm252, %v250, %v248
          %v254 = vsel %vm252, %v251, %v249
          %s255 = ssub.s32 128, %s188
          %256 = vrot.lane.b32.xlu0 %v254, %s255
          %v257 = vpop.permute.xlu0 %256
          %s258 = vtos %v257
          %v259 = vstv %s188
          %v260 = vlaneseq
          %v261 = vand.u32 %v260, 127
          %vm262 = vcmp.eq.s32.totalorder %v261, %v259
          %v263 = vstv %s258
          %v264 = vld [vmem:[%s168] ss:$0 sm:$0xff]
          %v265 = vsel %vm262, %v263, %v264
          %266 = vst [vmem:[%s168] sm:$0x1] %v265
          %s267 = scalar_lea.vmem %s145, %s188 [#allocation1]
          %s268 = scalar_lea.vmem %s145, %s258 [#allocation1]
          %v269 = vld [vmem:[%s267] ss:$0 sm:$0xff]
          %v270 = vld [vmem:[%s268] ss:$0 sm:$0xff]
          %271 = vst [vmem:[%s268] sm:$0x1] %v269
          %272 = vst [vmem:[%s267] sm:$0x1] %v270
          %s273 = scalar_lea.vmem [#allocation5], %s188
          %s274 = scalar_lea.vmem [#allocation5], %s258
          %v275 = vld [vmem:[%s273] ss:$0 sm:$0xff]
          %v276 = vld [vmem:[%s274] ss:$0 sm:$0xff]
          %277 = vst [vmem:[%s274] sm:$0x1] %v275
          %278 = vst [vmem:[%s273] sm:$0x1] %v276
          %vm279 = vcmp.ne.f32.partialorder %v270, 0.0
          %vm280 = vmand %vm262, %vm279
          %v281 = vsel %vm280, %v270, 1.0
          %v282 = vlaneseq
          %v283 = vand.u32 %v282, 127
          %v284 = vstv %s188
          %vm285 = vcmp.gt.s32.totalorder %v283, %v284
          %v286 = vsel %vm285, %v270, 0.0
          %v287 = vlaneseq
          %v288 = vshrl.u32 %v287, 7
          %v289 = vmov %v288
          %v290 = vld [vmem:[%s145] sm:$0xff]
          %v292 = vstv %s188
          %vm293 = vcmp.gt.s32.totalorder %v289, %v292
          %v294 = vsel %vm293, %v281, 1.0
          %v295 = vrcp.pop %v294
          %v296 = vmul.f32 %v290, %v295
          %vm297 = vmand %vm293, %vm262
          %v298 = vsel %vm297, %v296, 0.0
          %299 = vadd.xlane.f32.xlu0 %v298
          %v300 = vpop.xlane.xlu0 %299
          %v301 = vmul.f32 %v300, %v286
          %v302 = vsub.f32 %v296, %v301
          %303 = vst [vmem:[%s145] sm:$0xff] %v302
          %s304 = scalar_lea.vmem %s145, 8 [#allocation1]
          %v305 = vld [vmem:[%s304] sm:$0xff]
          %v306 = vadd.s32 %v289, 8
          %v307 = vstv %s188
          %vm308 = vcmp.gt.s32.totalorder %v306, %v307
          %v309 = vsel %vm308, %v281, 1.0
          %v310 = vrcp.pop %v309
          %v311 = vmul.f32 %v305, %v310
          %vm312 = vmand %vm308, %vm262
          %v313 = vsel %vm312, %v311, 0.0
          %314 = vadd.xlane.f32.xlu0 %v313
          %v315 = vpop.xlane.xlu0 %314
          %v316 = vmul.f32 %v315, %v286
          %v317 = vsub.f32 %v311, %v316
          %318 = vst [vmem:[%s304] sm:$0xff] %v317
        $region51: #{custom-call.11} parent=38 // loop_footer
          %s192 = sadd.s32 1, %s188
        $region52: #{custom-call.11} parent=38 // loop_footer_branch
          %187 = sbr.rel target = $region48
        $region53: #{custom-call.11} parent=38 // loop_exit
          _
        %v319 = vld [vmem:[#allocation5] sm:$0xff]
        %s320 = scalar_lea.vmem [#allocation5], 8
        %v321 = vld [vmem:[%s320] sm:$0xff]
        %s322 = scalar_lea.vmem [#allocation5], 16
        %s323 = scalar_lea.vmem [#allocation5], 24
        %s324 = scalar_lea.vmem [#allocation5], 32
        %s325 = scalar_lea.vmem [#allocation5], 40
        %s326 = scalar_lea.vmem [#allocation5], 48
        %s327 = scalar_lea.vmem [#allocation5], 56
        %s328 = scalar_lea.vmem [#allocation5], 64
        %s329 = scalar_lea.vmem [#allocation5], 72
        %s330 = scalar_lea.vmem [#allocation5], 80
        %s331 = scalar_lea.vmem [#allocation5], 88
        %s332 = scalar_lea.vmem [#allocation5], 96
        %s333 = scalar_lea.vmem [#allocation5], 104
        %s334 = scalar_lea.vmem [#allocation5], 112
        %s335 = scalar_lea.vmem [#allocation5], 120
        %336 = vxpose.xlu0.b32.start [1/16] %v319, 128
        %337 = vxpose.xlu0.b32.cont [2/16] %v321, 128
        %338 = vxpose.xlu0.b32.cont [3/16] 0, 128
        %339 = vxpose.xlu0.b32.cont [4/16] 0, 128
        %340 = vxpose.xlu0.b32.cont [5/16] 0, 128
        %341 = vxpose.xlu0.b32.cont [6/16] 0, 128
        %342 = vxpose.xlu0.b32.cont [7/16] 0, 128
        %343 = vxpose.xlu0.b32.cont [8/16] 0, 128
        %344 = vxpose.xlu0.b32.cont [9/16] 0, 128
        %345 = vxpose.xlu0.b32.cont [10/16] 0, 128
        %346 = vxpose.xlu0.b32.cont [11/16] 0, 128
        %347 = vxpose.xlu0.b32.cont [12/16] 0, 128
        %348 = vxpose.xlu0.b32.cont [13/16] 0, 128
        %349 = vxpose.xlu0.b32.cont [14/16] 0, 128
        %350 = vxpose.xlu0.b32.cont [15/16] 0, 128
        %351 = vxpose.xlu0.b32.end [16/16] 0, 128
        %v352 = vpop.trf.xlu0
        %v353 = vpop.trf.xlu0
        %v354 = vpop.trf.xlu0
        %v355 = vpop.trf.xlu0
        %v356 = vpop.trf.xlu0
        %v357 = vpop.trf.xlu0
        %v358 = vpop.trf.xlu0
        %v359 = vpop.trf.xlu0
        %v360 = vpop.trf.xlu0
        %v361 = vpop.trf.xlu0
        %v362 = vpop.trf.xlu0
        %v363 = vpop.trf.xlu0
        %v364 = vpop.trf.xlu0
        %v365 = vpop.trf.xlu0
        %v366 = vpop.trf.xlu0
        %v367 = vpop.trf.xlu0
        %368 = vst [vmem:[%s170] sm:$0x1] %v352
        %s369 = sand.u32 %s14, 1
        %s370 = sand.u32 %s14, 1
        %s371 = smul.addr %s370, 16
        %s372 = scalar_lea.vmem [#allocation1], %s371
        %s373 = sand.u32 %s38, 1
        %s374 = scalar_lea.sflag [#allocation3], %s373
        %s375 = sand.u32 %s38, 1
        %s376 = smul.addr %s375, 8
        %s377 = scalar_lea.vmem [#allocation2], %s376
        %s378 = sand.u32 %s68, 1
        %s379 = sand.u32 %s68, 1
        %s380 = smul.addr %s379, 8
        %s381 = scalar_lea.vmem [#allocation4], %s380
        %s382 = smul.addr %s18, 8
        %s383 = sadd.s32 %s19, %s382
        %s384 = smul.addr %s383, 16
        %s385 = scalar_lea.vmem %s1, %s384
        // Predicated region
        $region54: #{custom-call.11} parent=38 // pred_check
          _
        $region55: #{custom-call.11} parent=38 // pred_check_branch
          %387 = sbr.rel (0) target = $region57
        $region56: #{custom-call.11} parent=38 // pred_region
          // Predicated region
          $region58: #{custom-call.11} parent=56 // pred_check
            _
          $region59: #{custom-call.11} parent=56 // pred_check_branch
            %389 = sbr.rel (0) target = $region61
          $region60: #{custom-call.11} parent=56 // pred_region
            loop: start=0, step=1, limit=1
            $region62: #{custom-call.11} parent=60 // loop_pre_header
              _
            $region63: #{custom-call.11} parent=60 // loop_header
              %s391 = sphi 0, %s395
              %p392 = scmp.ge.s32.totalorder %s391, 1
              %s396 = sphi %s372, %s372
              %s397 = sphi %s385, %s385
            $region64: #{custom-call.11} parent=60 // loop_header_branch
              %394 = sbr.rel (%p392) target = $region68
            $region65: #{custom-call.11} parent=60 // loop_body
              %v398 = vld [vmem:[%s396] sm:$0xff]
              %399 = vst [vmem:[%s397] sm:$0xff] %v398
              %v400 = vld [vmem:[%s396 + $0x8] sm:$0xff]
              %401 = vst [vmem:[%s397 + $0x8] sm:$0xff] %v400
            $region66: #{custom-call.11} parent=60 // loop_footer
              %s395 = sadd.s32 1, %s391
            $region67: #{custom-call.11} parent=60 // loop_footer_branch
              %390 = sbr.rel target = $region63
            $region68: #{custom-call.11} parent=60 // loop_exit
              _
          $region61: #{custom-call.11} parent=56 // pred_fallthru
            _
          // Predicated region
          $region69: #{custom-call.11} parent=56 // pred_check
            _
          $region70: #{custom-call.11} parent=56 // pred_check_branch
            %403 = sbr.rel target = $region72
          $region71: #{custom-call.11} parent=56 // pred_region
            _
          $region72: #{custom-call.11} parent=56 // pred_fallthru
            _
        $region57: #{custom-call.11} parent=38 // pred_fallthru
          _
        %404 = vnop
        // Predicated region
        $region73: #{custom-call.11} parent=38 // pred_check
          %p405 = pneg %p48
        $region74: #{custom-call.11} parent=38 // pred_check_branch
          %407 = sbr.rel (%p405) target = $region76
        $region75: #{custom-call.11} parent=38 // pred_region
          %s408 = sshrl.u32 %s19, 3
          %s410 = ssub.s32 128, 128
          %411 = vsyncadd %s374, %s410
          %s412 = sadd.s32 %s408, %s18
          %s413 = smul.addr %s412, 128
          %s414 = scalar_lea.hbm %s2, %s413
          %s416 = sshll.u32 %s377, 4
          %s417 = int_to_ptr.vmem [resolvable:$true] %s416
          %419 = dma.vmem_to_hbm [thread:$0]  %s417, 128, %s414, %s374
        $region76: #{custom-call.11} parent=38 // pred_fallthru
          _
        // Predicated region
        $region77: #{custom-call.11} parent=38 // pred_check
          %p420 = pneg %p78
        $region78: #{custom-call.11} parent=38 // pred_check_branch
          %422 = sbr.rel (%p420) target = $region80
        $region79: #{custom-call.11} parent=38 // pred_region
          %s423 = sshrl.u32 %s19, 3
          %s424 = sadd.s32 %s423, %s18
          %s425 = smul.addr %s424, 8
          %s426 = scalar_lea.vmem %s3, %s425
          // Predicated region
          $region81: #{custom-call.11} parent=79 // pred_check
            _
          $region82: #{custom-call.11} parent=79 // pred_check_branch
            %428 = sbr.rel (0) target = $region84
          $region83: #{custom-call.11} parent=79 // pred_region
            // Predicated region
            $region85: #{custom-call.11} parent=83 // pred_check
              _
            $region86: #{custom-call.11} parent=83 // pred_check_branch
              %430 = sbr.rel (0) target = $region88
            $region87: #{custom-call.11} parent=83 // pred_region
              // Predicated region
              $region100: #{custom-call.11} parent=87 // pred_check
                _
              $region101: #{custom-call.11} parent=87 // pred_check_branch
                %445 = sbr.rel (0) target = $region103
              $region102: #{custom-call.11} parent=87 // pred_region
                loop: start=0, step=1, limit=1
                $region104: #{custom-call.11} parent=102 // loop_pre_header
                  _
                $region105: #{custom-call.11} parent=102 // loop_header
                  %s447 = sphi 0, %s451
                  %p448 = scmp.ge.s32.totalorder %s447, 1
                  %s452 = sphi %s381, %s381
                  %s453 = sphi %s426, %s426
                $region106: #{custom-call.11} parent=102 // loop_header_branch
                  %450 = sbr.rel (%p448) target = $region110
                $region107: #{custom-call.11} parent=102 // loop_body
                  %v454 = vld [vmem:[%s452] sm:$0xff]
                  %455 = vst [vmem:[%s453] sm:$0xff] %v454
                $region108: #{custom-call.11} parent=102 // loop_footer
                  %s451 = sadd.s32 1, %s447
                $region109: #{custom-call.11} parent=102 // loop_footer_branch
                  %446 = sbr.rel target = $region105
                $region110: #{custom-call.11} parent=102 // loop_exit
                  _
              $region103: #{custom-call.11} parent=87 // pred_fallthru
                _
              // Predicated region
              $region111: #{custom-call.11} parent=87 // pred_check
                _
              $region112: #{custom-call.11} parent=87 // pred_check_branch
                %457 = sbr.rel target = $region114
              $region113: #{custom-call.11} parent=87 // pred_region
                _
              $region114: #{custom-call.11} parent=87 // pred_fallthru
                _
            $region88: #{custom-call.11} parent=83 // pred_fallthru
              _
            // Predicated region
            $region89: #{custom-call.11} parent=83 // pred_check
              _
            $region90: #{custom-call.11} parent=83 // pred_check_branch
              %432 = sbr.rel target = $region92
            $region91: #{custom-call.11} parent=83 // pred_region
              loop: start=0, step=1, limit=1
              $region93: #{custom-call.11} parent=91 // loop_pre_header
                _
              $region94: #{custom-call.11} parent=91 // loop_header
                %s435 = sphi 0, %s439
                %p436 = scmp.ge.s32.totalorder %s435, 1
                %s440 = sphi %s381, %s381
                %s441 = sphi %s426, %s426
              $region95: #{custom-call.11} parent=91 // loop_header_branch
                %438 = sbr.rel (%p436) target = $region99
              $region96: #{custom-call.11} parent=91 // loop_body
                %v442 = vld [vmem:[%s440] sm:$0xff]
                %443 = vst [vmem:[%s441] sm:$0xff] %v442
              $region97: #{custom-call.11} parent=91 // loop_footer
                %s439 = sadd.s32 1, %s435
              $region98: #{custom-call.11} parent=91 // loop_footer_branch
                %434 = sbr.rel target = $region94
              $region99: #{custom-call.11} parent=91 // loop_exit
                _
            $region92: #{custom-call.11} parent=83 // pred_fallthru
              _
          $region84: #{custom-call.11} parent=79 // pred_fallthru
            _
          %458 = vnop
        $region80: #{custom-call.11} parent=38 // pred_fallthru
          _
      $region39: #{custom-call.11} parent=5 // pred_fallthru
        _
      %p459 = scmp.le.s32.totalorder 2, %s9
      // Predicated region
      $region115: #{custom-call.11} parent=5 // pred_check
        %p460 = pneg %p459
      $region116: #{custom-call.11} parent=5 // pred_check_branch
        %462 = sbr.rel (%p460) target = $region118
      $region117: #{custom-call.11} parent=5 // pred_region
        %s463 = ssub.s32 %s9, 2
        %s464 = sand.u32 %s15, 1
        %s465 = sand.u32 %s15, 1
        %s466 = smul.addr %s465, 16
        %s467 = scalar_lea.vmem [#allocation1], %s466
        // Predicated region
        $region119: #{custom-call.11} parent=117 // pred_check
          %p468 = pneg %p54
        $region120: #{custom-call.11} parent=117 // pred_check_branch
          %470 = sbr.rel (%p468) target = $region122
        $region121: #{custom-call.11} parent=117 // pred_region
          %s471 = sand.u32 %s39, 1
          %s472 = scalar_lea.sflag [#allocation3], %s471
          %s473 = sand.u32 %s39, 1
          %s474 = smul.addr %s473, 8
          %s475 = scalar_lea.vmem [#allocation2], %s474
          %476 = dma.done %s472, 128
        $region122: #{custom-call.11} parent=117 // pred_fallthru
          _
        // Predicated region
        $region123: #{custom-call.11} parent=117 // pred_check
          %p477 = pneg %p84
        $region124: #{custom-call.11} parent=117 // pred_check_branch
          %479 = sbr.rel (%p477) target = $region126
        $region125: #{custom-call.11} parent=117 // pred_region
          %s480 = sand.u32 %s69, 1
          %s481 = sand.u32 %s69, 1
          %s482 = smul.addr %s481, 8
          %s483 = scalar_lea.vmem [#allocation4], %s482
        $region126: #{custom-call.11} parent=117 // pred_fallthru
          _
      $region118: #{custom-call.11} parent=5 // pred_fallthru
        _
    $region6: #{custom-call.11} parent=1 // loop_footer
      %s13 = sadd.s32 1, %s9
    $region7: #{custom-call.11} parent=1 // loop_footer_branch
      %8 = sbr.rel target = $region3
    $region8: #{custom-call.11} parent=1 // loop_exit
      _
    %484 = vsyncpa [#allocation3], 1
    %s485 = scalar_lea.sflag [#allocation3], 1
    %486 = vsyncpa %s485, 1

// kernel: custom-call.12
$region0: #{custom-call.12}
  %s0 = inlined_call_operand.vmem [shape: f32[5,8,1,10,10], index: 0, kind: input, shape index: {}]
  %s1 = inlined_call_operand.vmem [shape: f32[5,8,1,10,10], index: 1, kind: output, shape index: {}]
  $region1: #{custom-call.12} parent=0
    #allocation0 [shape = 'u8[16384]{0}', space=vmem, size = 0x4000, scoped, tag = 'operand span for operand 0']
    #allocation1 [shape = 'u8[16384]{0}', space=vmem, size = 0x4000, scoped, tag = 'operand span for operand 1']
    loop: start=0, step=1, limit=42
    $region2: #{custom-call.12} parent=1 // loop_pre_header
      _
    $region3: #{custom-call.12} parent=1 // loop_header
      %s3 = sphi 0, %s7
      %p4 = scmp.ge.s32.totalorder %s3, 42
      %s10 = sphi 0, %s43
      %s11 = sphi 0, %s39
      %s12 = sphi 0, %s35
      %s13 = sphi 0, %s31
      %s14 = sphi 0, %s27
      %s15 = sphi 0, %s10
      %s16 = sphi 0, %s11
      %s17 = sphi 0, %s12
      %s18 = sphi 0, %s13
      %s19 = sphi 0, %s14
      %s20 = sphi 0, %s15
      %s21 = sphi 0, %s16
      %s22 = sphi 0, %s17
      %s23 = sphi 0, %s18
      %s24 = sphi 0, %s19
    $region4: #{custom-call.12} parent=1 // loop_header_branch
      %6 = sbr.rel (%p4) target = $region8
    $region5: #{custom-call.12} parent=1 // loop_body
      %s8 = ssub.s32 %s3, 1
      %s9 = ssub.s32 %s3, 2
      %s25 = sadd.s32 1, %s14
      %p26 = scmp.ge.s32.totalorder %s25, 1
      %s27 = scalar_select %p26, 0, %s25
      %s28 = sadd.s32 1, %s13
      %s29 = scalar_select %p26, %s28, %s13
      %p30 = scmp.ge.s32.totalorder %s29, 1
      %s31 = scalar_select %p30, 0, %s29
      %s32 = sadd.s32 1, %s12
      %s33 = scalar_select %p30, %s32, %s12
      %p34 = scmp.ge.s32.totalorder %s33, 1
      %s35 = scalar_select %p34, 0, %s33
      %s36 = sadd.s32 1, %s11
      %s37 = scalar_select %p34, %s36, %s11
      %p38 = scmp.ge.s32.totalorder %s37, 8
      %s39 = scalar_select %p38, 0, %s37
      %s40 = sadd.s32 1, %s10
      %s41 = scalar_select %p38, %s40, %s10
      %p42 = scmp.ge.s32.totalorder %s41, 5
      %s43 = scalar_select %p42, 0, %s41
      %p44 = scmp.le.s32.totalorder 1, %s3
      %p45 = scmp.lt.s32.totalorder %s3, 41
      %p46 = pnand %p44, %p45
      %p47 = pneg %p46
      // Predicated region
      $region9: #{custom-call.12} parent=5 // pred_check
        _
      $region10: #{custom-call.12} parent=5 // pred_check_branch
        %49 = sbr.rel (%p46) target = $region12
      $region11: #{custom-call.12} parent=5 // pred_region
        %s50 = ssub.s32 %s3, 1
      $region12: #{custom-call.12} parent=5 // pred_fallthru
        _
      %p51 = scmp.lt.s32.totalorder %s3, 40
      // Predicated region
      $region13: #{custom-call.12} parent=5 // pred_check
        %p52 = pneg %p51
      $region14: #{custom-call.12} parent=5 // pred_check_branch
        %54 = sbr.rel (%p52) target = $region16
      $region15: #{custom-call.12} parent=5 // pred_region
        %s55 = sand.u32 %s3, 1
        %s56 = sand.u32 %s3, 1
        %s57 = smul.addr %s56, 16
        %s58 = scalar_lea.vmem [#allocation0], %s57
        %s59 = sadd.s32 %s14, %s13
        %s60 = smul.addr %s12, 2
        %s61 = sadd.s32 %s59, %s60
        %s62 = smul.addr %s11, 2
        %s63 = sadd.s32 %s61, %s62
        %s64 = smul.addr %s10, 16
        %s65 = sadd.s32 %s63, %s64
        %s66 = smul.addr %s65, 8
        %s67 = scalar_lea.vmem %s0, %s66
        // Predicated region
        $region17: #{custom-call.12} parent=15 // pred_check
          _
        $region18: #{custom-call.12} parent=15 // pred_check_branch
          %69 = sbr.rel (0) target = $region20
        $region19: #{custom-call.12} parent=15 // pred_region
          // Predicated region
          $region21: #{custom-call.12} parent=19 // pred_check
            _
          $region22: #{custom-call.12} parent=19 // pred_check_branch
            %71 = sbr.rel (0) target = $region24
          $region23: #{custom-call.12} parent=19 // pred_region
            // Predicated region
            $region36: #{custom-call.12} parent=23 // pred_check
              _
            $region37: #{custom-call.12} parent=23 // pred_check_branch
              %88 = sbr.rel (0) target = $region39
            $region38: #{custom-call.12} parent=23 // pred_region
              loop: start=0, step=1, limit=1
              $region40: #{custom-call.12} parent=38 // loop_pre_header
                _
              $region41: #{custom-call.12} parent=38 // loop_header
                %s90 = sphi 0, %s94
                %p91 = scmp.ge.s32.totalorder %s90, 1
                %s95 = sphi %s67, %s67
                %s96 = sphi %s58, %s58
              $region42: #{custom-call.12} parent=38 // loop_header_branch
                %93 = sbr.rel (%p91) target = $region46
              $region43: #{custom-call.12} parent=38 // loop_body
                %v97 = vld [vmem:[%s95] sm:$0xff]
                %98 = vst [vmem:[%s96] sm:$0xff] %v97
                %v99 = vld [vmem:[%s95 + $0x8] sm:$0xff]
                %100 = vst [vmem:[%s96 + $0x8] sm:$0xff] %v99
              $region44: #{custom-call.12} parent=38 // loop_footer
                %s94 = sadd.s32 1, %s90
              $region45: #{custom-call.12} parent=38 // loop_footer_branch
                %89 = sbr.rel target = $region41
              $region46: #{custom-call.12} parent=38 // loop_exit
                _
            $region39: #{custom-call.12} parent=23 // pred_fallthru
              _
            // Predicated region
            $region47: #{custom-call.12} parent=23 // pred_check
              _
            $region48: #{custom-call.12} parent=23 // pred_check_branch
              %102 = sbr.rel target = $region50
            $region49: #{custom-call.12} parent=23 // pred_region
              _
            $region50: #{custom-call.12} parent=23 // pred_fallthru
              _
          $region24: #{custom-call.12} parent=19 // pred_fallthru
            _
          // Predicated region
          $region25: #{custom-call.12} parent=19 // pred_check
            _
          $region26: #{custom-call.12} parent=19 // pred_check_branch
            %73 = sbr.rel target = $region28
          $region27: #{custom-call.12} parent=19 // pred_region
            loop: start=0, step=1, limit=1
            $region29: #{custom-call.12} parent=27 // loop_pre_header
              _
            $region30: #{custom-call.12} parent=27 // loop_header
              %s76 = sphi 0, %s80
              %p77 = scmp.ge.s32.totalorder %s76, 1
              %s81 = sphi %s67, %s67
              %s82 = sphi %s58, %s58
            $region31: #{custom-call.12} parent=27 // loop_header_branch
              %79 = sbr.rel (%p77) target = $region35
            $region32: #{custom-call.12} parent=27 // loop_body
              %v83 = vld [vmem:[%s81] sm:$0xff]
              %84 = vst [vmem:[%s82] sm:$0xff] %v83
              %v85 = vld [vmem:[%s81 + $0x8] sm:$0xff]
              %86 = vst [vmem:[%s82 + $0x8] sm:$0xff] %v85
            $region33: #{custom-call.12} parent=27 // loop_footer
              %s80 = sadd.s32 1, %s76
            $region34: #{custom-call.12} parent=27 // loop_footer_branch
              %75 = sbr.rel target = $region30
            $region35: #{custom-call.12} parent=27 // loop_exit
              _
          $region28: #{custom-call.12} parent=19 // pred_fallthru
            _
        $region20: #{custom-call.12} parent=15 // pred_fallthru
          _
        %103 = vnop
      $region16: #{custom-call.12} parent=5 // pred_fallthru
        _
      %p104 = scmp.le.s32.totalorder 1, %s3
      %p105 = scmp.lt.s32.totalorder %s3, 41
      %p106 = pnand %p104, %p105
      %p107 = pneg %p106
      // Predicated region
      $region51: #{custom-call.12} parent=5 // pred_check
        _
      $region52: #{custom-call.12} parent=5 // pred_check_branch
        %109 = sbr.rel (%p106) target = $region54
      $region53: #{custom-call.12} parent=5 // pred_region
        #allocation2 [shape = 'f32[10,10]{1,0}', space=vmem, size = 0x2000, scoped, tag = 'rescaled input a']
        %s110 = ssub.s32 %s3, 1
        %s111 = sand.u32 %s8, 1
        %s112 = sand.u32 %s8, 1
        %s113 = smul.addr %s112, 16
        %s114 = scalar_lea.vmem [#allocation0], %s113
        %s115 = sand.u32 %s8, 1
        %s116 = sand.u32 %s8, 1
        %s117 = smul.addr %s116, 16
        %s118 = scalar_lea.vmem [#allocation0], %s117
        %s119 = sand.u32 %s8, 1
        %s120 = sand.u32 %s8, 1
        %s121 = smul.addr %s120, 16
        %s122 = scalar_lea.vmem [#allocation1], %s121
        %v123 = vlaneseq
        %v124 = vand.u32 %v123, 127
        %vm125 = vcmp.lt.s32.totalorder %v124, 10
        %v126 = vlaneseq
        %v127 = vshrl.u32 %v126, 7
        %vm129 = vcmp.eq.s32.totalorder %v127, %v124
        %v130 = vld [vmem:[%s114] sm:$0xff]
        %v131 = vsel %vm129, %v130, 0.0
        %132 = vadd.xlane.f32.xlu0 %v131
        %v133 = vpop.xlane.xlu0 %132
        %vm134 = vcmp.le.s32.totalorder %v127, %v124
        %vm135 = vmand %vm134, %vm125
        %v136 = vsel %vm135, %v130, 0.0
        %v137 = vrcp.pop %v133
        %v138 = vmul.f32 %v136, %v137
        %139 = vst [vmem:[#allocation2] sm:$0xff] %v138
        %s140 = scalar_lea.vmem %s114, 8 [#allocation0]
        %s141 = scalar_lea.vmem [#allocation2], 8
        %v142 = vlaneseq
        %v143 = vshrl.u32 %v142, 7
        %v144 = vadd.s32 %v143, 8
        %vm145 = vcmp.eq.s32.totalorder %v144, %v124
        %v146 = vld [vmem:[%s140] sm:$0xff]
        %v147 = vsel %vm145, %v146, 0.0
        %148 = vadd.xlane.f32.xlu0 %v147
        %v149 = vpop.xlane.xlu0 %148
        %vm150 = vcmp.le.s32.totalorder %v144, %v124
        %vm151 = vmand %vm150, %vm125
        %v152 = vsel %vm151, %v146, 0.0
        %v153 = vrcp.pop %v149
        %v154 = vmul.f32 %v152, %v153
        %155 = vst [vmem:[%s141] sm:$0xff] %v154
        %v156 = vlaneseq
        %v157 = vand.u32 %v156, 127
        %v158 = vlaneseq
        %v159 = vshrl.u32 %v158, 7
        %vm161 = vcmp.eq.s32.totalorder %v157, %v159
        %v162 = vsel %vm161, -1.0, 0.0
        %v163 = vlaneseq
        %v164 = vand.u32 %v163, 127
        %v165 = vlaneseq
        %v166 = vshrl.u32 %v165, 7
        %v167 = vadd.s32 %v166, 8
        %vm168 = vcmp.eq.s32.totalorder %v164, %v167
        %v169 = vlaneseq
        %v170 = vand.u32 %v169, 127
        %vm171 = vcmp.eq.s32.totalorder %v170, 9
        %v172 = vsel %vm171, 1.0, -1.0
        %v173 = vsel %vm168, %v172, 0.0
        %s174 = scalar_lea.vmem [#allocation2], 8
        %v175 = vld [vmem:[%s174] ss:$0 sm:$0xff]
        %v176 = vxor.u32 %v175, 2147483648
        %v177 = vlaneseq
        %v178 = vand.u32 %v177, 127
        %vm179 = vcmp.eq.s32.totalorder %v178, 8
        %v180 = vmul.f32 %v176, %v173
        %181 = vadd.xlane.f32.xlu0 %v180
        %v182 = vpop.xlane.xlu0 %181
        %v183 = vsel %vm179, %v182, %v173
        %s184 = scalar_lea.vmem [#allocation2], 7
        %v185 = vld [vmem:[%s184] ss:$0 sm:$0xff]
        %v186 = vxor.u32 %v185, 2147483648
        %v187 = vlaneseq
        %v188 = vand.u32 %v187, 127
        %vm189 = vcmp.eq.s32.totalorder %v188, 7
        %v190 = vmul.f32 %v186, %v162
        %191 = vadd.xlane.f32.xlu0 %v190
        %v192 = vpop.xlane.xlu0 %191
        %v193 = vsel %vm189, %v192, %v162
        %v194 = vmul.f32 %v186, %v183
        %195 = vadd.xlane.f32.xlu0 %v194
        %v196 = vpop.xlane.xlu0 %195
        %v197 = vsel %vm189, %v196, %v183
        %s198 = scalar_lea.vmem [#allocation2], 6
        %v199 = vld [vmem:[%s198] ss:$0 sm:$0xff]
        %v200 = vxor.u32 %v199, 2147483648
        %v201 = vlaneseq
        %v202 = vand.u32 %v201, 127
        %vm203 = vcmp.eq.s32.totalorder %v202, 6
        %v204 = vmul.f32 %v200, %v193
        %205 = vadd.xlane.f32.xlu0 %v204
        %v206 = vpop.xlane.xlu0 %205
        %v207 = vsel %vm203, %v206, %v193
        %v208 = vmul.f32 %v200, %v197
        %209 = vadd.xlane.f32.xlu0 %v208
        %v210 = vpop.xlane.xlu0 %209
        %v211 = vsel %vm203, %v210, %v197
        %s212 = scalar_lea.vmem [#allocation2], 5
        %v213 = vld [vmem:[%s212] ss:$0 sm:$0xff]
        %v214 = vxor.u32 %v213, 2147483648
        %v215 = vlaneseq
        %v216 = vand.u32 %v215, 127
        %vm217 = vcmp.eq.s32.totalorder %v216, 5
        %v218 = vmul.f32 %v214, %v207
        %219 = vadd.xlane.f32.xlu0 %v218
        %v220 = vpop.xlane.xlu0 %219
        %v221 = vsel %vm217, %v220, %v207
        %v222 = vmul.f32 %v214, %v211
        %223 = vadd.xlane.f32.xlu0 %v222
        %v224 = vpop.xlane.xlu0 %223
        %v225 = vsel %vm217, %v224, %v211
        %s226 = scalar_lea.vmem [#allocation2], 4
        %v227 = vld [vmem:[%s226] ss:$0 sm:$0xff]
        %v228 = vxor.u32 %v227, 2147483648
        %v229 = vlaneseq
        %v230 = vand.u32 %v229, 127
        %vm231 = vcmp.eq.s32.totalorder %v230, 4
        %v232 = vmul.f32 %v228, %v221
        %233 = vadd.xlane.f32.xlu0 %v232
        %v234 = vpop.xlane.xlu0 %233
        %v235 = vsel %vm231, %v234, %v221
        %v236 = vmul.f32 %v228, %v225
        %237 = vadd.xlane.f32.xlu0 %v236
        %v238 = vpop.xlane.xlu0 %237
        %v239 = vsel %vm231, %v238, %v225
        %s240 = scalar_lea.vmem [#allocation2], 3
        %v241 = vld [vmem:[%s240] ss:$0 sm:$0xff]
        %v242 = vxor.u32 %v241, 2147483648
        %v243 = vlaneseq
        %v244 = vand.u32 %v243, 127
        %vm245 = vcmp.eq.s32.totalorder %v244, 3
        %v246 = vmul.f32 %v242, %v235
        %247 = vadd.xlane.f32.xlu0 %v246
        %v248 = vpop.xlane.xlu0 %247
        %v249 = vsel %vm245, %v248, %v235
        %v250 = vmul.f32 %v242, %v239
        %251 = vadd.xlane.f32.xlu0 %v250
        %v252 = vpop.xlane.xlu0 %251
        %v253 = vsel %vm245, %v252, %v239
        %s254 = scalar_lea.vmem [#allocation2], 2
        %v255 = vld [vmem:[%s254] ss:$0 sm:$0xff]
        %v256 = vxor.u32 %v255, 2147483648
        %v257 = vlaneseq
        %v258 = vand.u32 %v257, 127
        %vm259 = vcmp.eq.s32.totalorder %v258, 2
        %v260 = vmul.f32 %v256, %v249
        %261 = vadd.xlane.f32.xlu0 %v260
        %v262 = vpop.xlane.xlu0 %261
        %v263 = vsel %vm259, %v262, %v249
        %v264 = vmul.f32 %v256, %v253
        %265 = vadd.xlane.f32.xlu0 %v264
        %v266 = vpop.xlane.xlu0 %265
        %v267 = vsel %vm259, %v266, %v253
        %s268 = scalar_lea.vmem [#allocation2], 1
        %v269 = vld [vmem:[%s268] ss:$0 sm:$0xff]
        %v270 = vxor.u32 %v269, 2147483648
        %v271 = vlaneseq
        %v272 = vand.u32 %v271, 127
        %vm273 = vcmp.eq.s32.totalorder %v272, 1
        %v274 = vmul.f32 %v270, %v263
        %275 = vadd.xlane.f32.xlu0 %v274
        %v276 = vpop.xlane.xlu0 %275
        %v277 = vsel %vm273, %v276, %v263
        %v278 = vmul.f32 %v270, %v267
        %279 = vadd.xlane.f32.xlu0 %v278
        %v280 = vpop.xlane.xlu0 %279
        %v281 = vsel %vm273, %v280, %v267
        %v282 = vld [vmem:[#allocation2] ss:$0 sm:$0xff]
        %v283 = vxor.u32 %v282, 2147483648
        %v284 = vlaneseq
        %v285 = vand.u32 %v284, 127
        %vm286 = vcmp.eq.s32.totalorder %v285, 0
        %v287 = vmul.f32 %v283, %v277
        %288 = vadd.xlane.f32.xlu0 %v287
        %v289 = vpop.xlane.xlu0 %288
        %v290 = vsel %vm286, %v289, %v277
        %v291 = vmul.f32 %v283, %v281
        %292 = vadd.xlane.f32.xlu0 %v291
        %v293 = vpop.xlane.xlu0 %292
        %v294 = vsel %vm286, %v293, %v281
        %v295 = vrcp.pop %v133
        %v296 = vmul.f32 %v290, %v295
        %vm297 = vweird.f32 %v133
        %v298 = vsel %vm297, %v290, %v296
        %299 = vst [vmem:[%s122] sm:$0xff] %v298
        %v300 = vrcp.pop %v149
        %v301 = vmul.f32 %v294, %v300
        %vm302 = vweird.f32 %v149
        %v303 = vsel %vm302, %v294, %v301
        %s304 = scalar_lea.vmem %s122, 8 [#allocation1]
        %305 = vst [vmem:[%s304] sm:$0xff] %v303
        %s306 = sand.u32 %s8, 1
        %s307 = sand.u32 %s8, 1
        %s308 = smul.addr %s307, 16
        %s309 = scalar_lea.vmem [#allocation1], %s308
        %s310 = sadd.s32 %s19, %s18
        %s311 = smul.addr %s17, 2
        %s312 = sadd.s32 %s310, %s311
        %s313 = smul.addr %s16, 2
        %s314 = sadd.s32 %s312, %s313
        %s315 = smul.addr %s15, 16
        %s316 = sadd.s32 %s314, %s315
        %s317 = smul.addr %s316, 8
        %s318 = scalar_lea.vmem %s1, %s317
        // Predicated region
        $region55: #{custom-call.12} parent=53 // pred_check
          _
        $region56: #{custom-call.12} parent=53 // pred_check_branch
          %320 = sbr.rel (0) target = $region58
        $region57: #{custom-call.12} parent=53 // pred_region
          // Predicated region
          $region59: #{custom-call.12} parent=57 // pred_check
            _
          $region60: #{custom-call.12} parent=57 // pred_check_branch
            %322 = sbr.rel (0) target = $region62
          $region61: #{custom-call.12} parent=57 // pred_region
            // Predicated region
            $region74: #{custom-call.12} parent=61 // pred_check
              _
            $region75: #{custom-call.12} parent=61 // pred_check_branch
              %339 = sbr.rel (0) target = $region77
            $region76: #{custom-call.12} parent=61 // pred_region
              loop: start=0, step=1, limit=1
              $region78: #{custom-call.12} parent=76 // loop_pre_header
                _
              $region79: #{custom-call.12} parent=76 // loop_header
                %s341 = sphi 0, %s345
                %p342 = scmp.ge.s32.totalorder %s341, 1
                %s346 = sphi %s309, %s309
                %s347 = sphi %s318, %s318
              $region80: #{custom-call.12} parent=76 // loop_header_branch
                %344 = sbr.rel (%p342) target = $region84
              $region81: #{custom-call.12} parent=76 // loop_body
                %v348 = vld [vmem:[%s346] sm:$0xff]
                %349 = vst [vmem:[%s347] sm:$0xff] %v348
                %v350 = vld [vmem:[%s346 + $0x8] sm:$0xff]
                %351 = vst [vmem:[%s347 + $0x8] sm:$0xff] %v350
              $region82: #{custom-call.12} parent=76 // loop_footer
                %s345 = sadd.s32 1, %s341
              $region83: #{custom-call.12} parent=76 // loop_footer_branch
                %340 = sbr.rel target = $region79
              $region84: #{custom-call.12} parent=76 // loop_exit
                _
            $region77: #{custom-call.12} parent=61 // pred_fallthru
              _
            // Predicated region
            $region85: #{custom-call.12} parent=61 // pred_check
              _
            $region86: #{custom-call.12} parent=61 // pred_check_branch
              %353 = sbr.rel target = $region88
            $region87: #{custom-call.12} parent=61 // pred_region
              _
            $region88: #{custom-call.12} parent=61 // pred_fallthru
              _
          $region62: #{custom-call.12} parent=57 // pred_fallthru
            _
          // Predicated region
          $region63: #{custom-call.12} parent=57 // pred_check
            _
          $region64: #{custom-call.12} parent=57 // pred_check_branch
            %324 = sbr.rel target = $region66
          $region65: #{custom-call.12} parent=57 // pred_region
            loop: start=0, step=1, limit=1
            $region67: #{custom-call.12} parent=65 // loop_pre_header
              _
            $region68: #{custom-call.12} parent=65 // loop_header
              %s327 = sphi 0, %s331
              %p328 = scmp.ge.s32.totalorder %s327, 1
              %s332 = sphi %s309, %s309
              %s333 = sphi %s318, %s318
            $region69: #{custom-call.12} parent=65 // loop_header_branch
              %330 = sbr.rel (%p328) target = $region73
            $region70: #{custom-call.12} parent=65 // loop_body
              %v334 = vld [vmem:[%s332] sm:$0xff]
              %335 = vst [vmem:[%s333] sm:$0xff] %v334
              %v336 = vld [vmem:[%s332 + $0x8] sm:$0xff]
              %337 = vst [vmem:[%s333 + $0x8] sm:$0xff] %v336
            $region71: #{custom-call.12} parent=65 // loop_footer
              %s331 = sadd.s32 1, %s327
            $region72: #{custom-call.12} parent=65 // loop_footer_branch
              %326 = sbr.rel target = $region68
            $region73: #{custom-call.12} parent=65 // loop_exit
              _
          $region66: #{custom-call.12} parent=57 // pred_fallthru
            _
        $region58: #{custom-call.12} parent=53 // pred_fallthru
          _
        %354 = vnop
      $region54: #{custom-call.12} parent=5 // pred_fallthru
        _
      %p355 = scmp.le.s32.totalorder 2, %s3
      // Predicated region
      $region89: #{custom-call.12} parent=5 // pred_check
        %p356 = pneg %p355
      $region90: #{custom-call.12} parent=5 // pred_check_branch
        %358 = sbr.rel (%p356) target = $region92
      $region91: #{custom-call.12} parent=5 // pred_region
        %s359 = ssub.s32 %s3, 2
        %s360 = sand.u32 %s9, 1
        %s361 = sand.u32 %s9, 1
        %s362 = smul.addr %s361, 16
        %s363 = scalar_lea.vmem [#allocation1], %s362
      $region92: #{custom-call.12} parent=5 // pred_fallthru
        _
    $region6: #{custom-call.12} parent=1 // loop_footer
      %s7 = sadd.s32 1, %s3
    $region7: #{custom-call.12} parent=1 // loop_footer_branch
      %2 = sbr.rel target = $region3
    $region8: #{custom-call.12} parent=1 // loop_exit
      _

// kernel: custom-call.13
$region0: #{custom-call.13}
  %s0 = inlined_call_operand.vmem [shape: f32[5,8,1,10,10], index: 0, kind: input, shape index: {}]
  %s1 = inlined_call_operand.vmem [shape: f32[5,8,1,10,10], index: 1, kind: output, shape index: {}]
  $region1: #{custom-call.13} parent=0
    #allocation0 [shape = 'u8[16384]{0}', space=vmem, size = 0x4000, scoped, tag = 'operand span for operand 0']
    #allocation1 [shape = 'u8[16384]{0}', space=vmem, size = 0x4000, scoped, tag = 'operand span for operand 1']
    loop: start=0, step=1, limit=42
    $region2: #{custom-call.13} parent=1 // loop_pre_header
      _
    $region3: #{custom-call.13} parent=1 // loop_header
      %s3 = sphi 0, %s7
      %p4 = scmp.ge.s32.totalorder %s3, 42
      %s10 = sphi 0, %s43
      %s11 = sphi 0, %s39
      %s12 = sphi 0, %s35
      %s13 = sphi 0, %s31
      %s14 = sphi 0, %s27
      %s15 = sphi 0, %s10
      %s16 = sphi 0, %s11
      %s17 = sphi 0, %s12
      %s18 = sphi 0, %s13
      %s19 = sphi 0, %s14
      %s20 = sphi 0, %s15
      %s21 = sphi 0, %s16
      %s22 = sphi 0, %s17
      %s23 = sphi 0, %s18
      %s24 = sphi 0, %s19
    $region4: #{custom-call.13} parent=1 // loop_header_branch
      %6 = sbr.rel (%p4) target = $region8
    $region5: #{custom-call.13} parent=1 // loop_body
      %s8 = ssub.s32 %s3, 1
      %s9 = ssub.s32 %s3, 2
      %s25 = sadd.s32 1, %s14
      %p26 = scmp.ge.s32.totalorder %s25, 1
      %s27 = scalar_select %p26, 0, %s25
      %s28 = sadd.s32 1, %s13
      %s29 = scalar_select %p26, %s28, %s13
      %p30 = scmp.ge.s32.totalorder %s29, 1
      %s31 = scalar_select %p30, 0, %s29
      %s32 = sadd.s32 1, %s12
      %s33 = scalar_select %p30, %s32, %s12
      %p34 = scmp.ge.s32.totalorder %s33, 1
      %s35 = scalar_select %p34, 0, %s33
      %s36 = sadd.s32 1, %s11
      %s37 = scalar_select %p34, %s36, %s11
      %p38 = scmp.ge.s32.totalorder %s37, 8
      %s39 = scalar_select %p38, 0, %s37
      %s40 = sadd.s32 1, %s10
      %s41 = scalar_select %p38, %s40, %s10
      %p42 = scmp.ge.s32.totalorder %s41, 5
      %s43 = scalar_select %p42, 0, %s41
      %p44 = scmp.le.s32.totalorder 1, %s3
      %p45 = scmp.lt.s32.totalorder %s3, 41
      %p46 = pnand %p44, %p45
      %p47 = pneg %p46
      // Predicated region
      $region9: #{custom-call.13} parent=5 // pred_check
        _
      $region10: #{custom-call.13} parent=5 // pred_check_branch
        %49 = sbr.rel (%p46) target = $region12
      $region11: #{custom-call.13} parent=5 // pred_region
        %s50 = ssub.s32 %s3, 1
      $region12: #{custom-call.13} parent=5 // pred_fallthru
        _
      %p51 = scmp.lt.s32.totalorder %s3, 40
      // Predicated region
      $region13: #{custom-call.13} parent=5 // pred_check
        %p52 = pneg %p51
      $region14: #{custom-call.13} parent=5 // pred_check_branch
        %54 = sbr.rel (%p52) target = $region16
      $region15: #{custom-call.13} parent=5 // pred_region
        %s55 = sand.u32 %s3, 1
        %s56 = sand.u32 %s3, 1
        %s57 = smul.addr %s56, 16
        %s58 = scalar_lea.vmem [#allocation0], %s57
        %s59 = sadd.s32 %s14, %s13
        %s60 = smul.addr %s12, 2
        %s61 = sadd.s32 %s59, %s60
        %s62 = smul.addr %s11, 2
        %s63 = sadd.s32 %s61, %s62
        %s64 = smul.addr %s10, 16
        %s65 = sadd.s32 %s63, %s64
        %s66 = smul.addr %s65, 8
        %s67 = scalar_lea.vmem %s0, %s66
        // Predicated region
        $region17: #{custom-call.13} parent=15 // pred_check
          _
        $region18: #{custom-call.13} parent=15 // pred_check_branch
          %69 = sbr.rel (0) target = $region20
        $region19: #{custom-call.13} parent=15 // pred_region
          // Predicated region
          $region21: #{custom-call.13} parent=19 // pred_check
            _
          $region22: #{custom-call.13} parent=19 // pred_check_branch
            %71 = sbr.rel (0) target = $region24
          $region23: #{custom-call.13} parent=19 // pred_region
            // Predicated region
            $region36: #{custom-call.13} parent=23 // pred_check
              _
            $region37: #{custom-call.13} parent=23 // pred_check_branch
              %88 = sbr.rel (0) target = $region39
            $region38: #{custom-call.13} parent=23 // pred_region
              loop: start=0, step=1, limit=1
              $region40: #{custom-call.13} parent=38 // loop_pre_header
                _
              $region41: #{custom-call.13} parent=38 // loop_header
                %s90 = sphi 0, %s94
                %p91 = scmp.ge.s32.totalorder %s90, 1
                %s95 = sphi %s67, %s67
                %s96 = sphi %s58, %s58
              $region42: #{custom-call.13} parent=38 // loop_header_branch
                %93 = sbr.rel (%p91) target = $region46
              $region43: #{custom-call.13} parent=38 // loop_body
                %v97 = vld [vmem:[%s95] sm:$0xff]
                %98 = vst [vmem:[%s96] sm:$0xff] %v97
                %v99 = vld [vmem:[%s95 + $0x8] sm:$0xff]
                %100 = vst [vmem:[%s96 + $0x8] sm:$0xff] %v99
              $region44: #{custom-call.13} parent=38 // loop_footer
                %s94 = sadd.s32 1, %s90
              $region45: #{custom-call.13} parent=38 // loop_footer_branch
                %89 = sbr.rel target = $region41
              $region46: #{custom-call.13} parent=38 // loop_exit
                _
            $region39: #{custom-call.13} parent=23 // pred_fallthru
              _
            // Predicated region
            $region47: #{custom-call.13} parent=23 // pred_check
              _
            $region48: #{custom-call.13} parent=23 // pred_check_branch
              %102 = sbr.rel target = $region50
            $region49: #{custom-call.13} parent=23 // pred_region
              _
            $region50: #{custom-call.13} parent=23 // pred_fallthru
              _
          $region24: #{custom-call.13} parent=19 // pred_fallthru
            _
          // Predicated region
          $region25: #{custom-call.13} parent=19 // pred_check
            _
          $region26: #{custom-call.13} parent=19 // pred_check_branch
            %73 = sbr.rel target = $region28
          $region27: #{custom-call.13} parent=19 // pred_region
            loop: start=0, step=1, limit=1
            $region29: #{custom-call.13} parent=27 // loop_pre_header
              _
            $region30: #{custom-call.13} parent=27 // loop_header
              %s76 = sphi 0, %s80
              %p77 = scmp.ge.s32.totalorder %s76, 1
              %s81 = sphi %s67, %s67
              %s82 = sphi %s58, %s58
            $region31: #{custom-call.13} parent=27 // loop_header_branch
              %79 = sbr.rel (%p77) target = $region35
            $region32: #{custom-call.13} parent=27 // loop_body
              %v83 = vld [vmem:[%s81] sm:$0xff]
              %84 = vst [vmem:[%s82] sm:$0xff] %v83
              %v85 = vld [vmem:[%s81 + $0x8] sm:$0xff]
              %86 = vst [vmem:[%s82 + $0x8] sm:$0xff] %v85
            $region33: #{custom-call.13} parent=27 // loop_footer
              %s80 = sadd.s32 1, %s76
            $region34: #{custom-call.13} parent=27 // loop_footer_branch
              %75 = sbr.rel target = $region30
            $region35: #{custom-call.13} parent=27 // loop_exit
              _
          $region28: #{custom-call.13} parent=19 // pred_fallthru
            _
        $region20: #{custom-call.13} parent=15 // pred_fallthru
          _
        %103 = vnop
      $region16: #{custom-call.13} parent=5 // pred_fallthru
        _
      %p104 = scmp.le.s32.totalorder 1, %s3
      %p105 = scmp.lt.s32.totalorder %s3, 41
      %p106 = pnand %p104, %p105
      %p107 = pneg %p106
      // Predicated region
      $region51: #{custom-call.13} parent=5 // pred_check
        _
      $region52: #{custom-call.13} parent=5 // pred_check_branch
        %109 = sbr.rel (%p106) target = $region54
      $region53: #{custom-call.13} parent=5 // pred_region
        #allocation2 [shape = 'f32[10,10]{1,0}', space=vmem, size = 0x2000, scoped, tag = 'rescaled input a']
        %s110 = ssub.s32 %s3, 1
        %s111 = sand.u32 %s8, 1
        %s112 = sand.u32 %s8, 1
        %s113 = smul.addr %s112, 16
        %s114 = scalar_lea.vmem [#allocation0], %s113
        %s115 = sand.u32 %s8, 1
        %s116 = sand.u32 %s8, 1
        %s117 = smul.addr %s116, 16
        %s118 = scalar_lea.vmem [#allocation0], %s117
        %s119 = sand.u32 %s8, 1
        %s120 = sand.u32 %s8, 1
        %s121 = smul.addr %s120, 16
        %s122 = scalar_lea.vmem [#allocation1], %s121
        %v123 = vlaneseq
        %v124 = vand.u32 %v123, 127
        %vm125 = vcmp.lt.s32.totalorder %v124, 10
        %v126 = vlaneseq
        %v127 = vshrl.u32 %v126, 7
        %vm129 = vcmp.eq.s32.totalorder %v127, %v124
        %v130 = vld [vmem:[%s114] sm:$0xff]
        %v131 = vsel %vm129, %v130, 0.0
        %132 = vadd.xlane.f32.xlu0 %v131
        %v133 = vpop.xlane.xlu0 %132
        %vm134 = vcmp.ge.s32.totalorder %v127, %v124
        %vm135 = vmand %vm134, %vm125
        %v136 = vsel %vm135, %v130, 0.0
        %v137 = vrcp.pop %v133
        %v138 = vmul.f32 %v136, %v137
        %139 = vst [vmem:[#allocation2] sm:$0xff] %v138
        %s140 = scalar_lea.vmem %s114, 8 [#allocation0]
        %s141 = scalar_lea.vmem [#allocation2], 8
        %v142 = vlaneseq
        %v143 = vshrl.u32 %v142, 7
        %v144 = vadd.s32 %v143, 8
        %vm145 = vcmp.eq.s32.totalorder %v144, %v124
        %v146 = vld [vmem:[%s140] sm:$0xff]
        %v147 = vsel %vm145, %v146, 0.0
        %148 = vadd.xlane.f32.xlu0 %v147
        %v149 = vpop.xlane.xlu0 %148
        %vm150 = vcmp.ge.s32.totalorder %v144, %v124
        %vm151 = vmand %vm150, %vm125
        %v152 = vsel %vm151, %v146, 0.0
        %v153 = vrcp.pop %v149
        %v154 = vmul.f32 %v152, %v153
        %155 = vst [vmem:[%s141] sm:$0xff] %v154
        %v156 = vlaneseq
        %v157 = vand.u32 %v156, 127
        %v158 = vlaneseq
        %v159 = vshrl.u32 %v158, 7
        %vm161 = vcmp.eq.s32.totalorder %v157, %v159
        %v162 = vlaneseq
        %v163 = vand.u32 %v162, 127
        %vm164 = vcmp.eq.s32.totalorder %v163, 0
        %v165 = vsel %vm164, 1.0, -1.0
        %v166 = vsel %vm161, %v165, 0.0
        %v167 = vlaneseq
        %v168 = vand.u32 %v167, 127
        %v169 = vlaneseq
        %v170 = vshrl.u32 %v169, 7
        %v171 = vadd.s32 %v170, 8
        %vm172 = vcmp.eq.s32.totalorder %v168, %v171
        %v173 = vsel %vm172, -1.0, 0.0
        %s174 = scalar_lea.vmem [#allocation2], 1
        %v175 = vld [vmem:[%s174] ss:$0 sm:$0xff]
        %v176 = vxor.u32 %v175, 2147483648
        %v177 = vlaneseq
        %v178 = vand.u32 %v177, 127
        %vm179 = vcmp.eq.s32.totalorder %v178, 1
        %v180 = vmul.f32 %v176, %v166
        %181 = vadd.xlane.f32.xlu0 %v180
        %v182 = vpop.xlane.xlu0 %181
        %v183 = vsel %vm179, %v182, %v166
        %s184 = scalar_lea.vmem [#allocation2], 2
        %v185 = vld [vmem:[%s184] ss:$0 sm:$0xff]
        %v186 = vxor.u32 %v185, 2147483648
        %v187 = vlaneseq
        %v188 = vand.u32 %v187, 127
        %vm189 = vcmp.eq.s32.totalorder %v188, 2
        %v190 = vmul.f32 %v186, %v183
        %191 = vadd.xlane.f32.xlu0 %v190
        %v192 = vpop.xlane.xlu0 %191
        %v193 = vsel %vm189, %v192, %v183
        %s194 = scalar_lea.vmem [#allocation2], 3
        %v195 = vld [vmem:[%s194] ss:$0 sm:$0xff]
        %v196 = vxor.u32 %v195, 2147483648
        %v197 = vlaneseq
        %v198 = vand.u32 %v197, 127
        %vm199 = vcmp.eq.s32.totalorder %v198, 3
        %v200 = vmul.f32 %v196, %v193
        %201 = vadd.xlane.f32.xlu0 %v200
        %v202 = vpop.xlane.xlu0 %201
        %v203 = vsel %vm199, %v202, %v193
        %s204 = scalar_lea.vmem [#allocation2], 4
        %v205 = vld [vmem:[%s204] ss:$0 sm:$0xff]
        %v206 = vxor.u32 %v205, 2147483648
        %v207 = vlaneseq
        %v208 = vand.u32 %v207, 127
        %vm209 = vcmp.eq.s32.totalorder %v208, 4
        %v210 = vmul.f32 %v206, %v203
        %211 = vadd.xlane.f32.xlu0 %v210
        %v212 = vpop.xlane.xlu0 %211
        %v213 = vsel %vm209, %v212, %v203
        %s214 = scalar_lea.vmem [#allocation2], 5
        %v215 = vld [vmem:[%s214] ss:$0 sm:$0xff]
        %v216 = vxor.u32 %v215, 2147483648
        %v217 = vlaneseq
        %v218 = vand.u32 %v217, 127
        %vm219 = vcmp.eq.s32.totalorder %v218, 5
        %v220 = vmul.f32 %v216, %v213
        %221 = vadd.xlane.f32.xlu0 %v220
        %v222 = vpop.xlane.xlu0 %221
        %v223 = vsel %vm219, %v222, %v213
        %s224 = scalar_lea.vmem [#allocation2], 6
        %v225 = vld [vmem:[%s224] ss:$0 sm:$0xff]
        %v226 = vxor.u32 %v225, 2147483648
        %v227 = vlaneseq
        %v228 = vand.u32 %v227, 127
        %vm229 = vcmp.eq.s32.totalorder %v228, 6
        %v230 = vmul.f32 %v226, %v223
        %231 = vadd.xlane.f32.xlu0 %v230
        %v232 = vpop.xlane.xlu0 %231
        %v233 = vsel %vm229, %v232, %v223
        %s234 = scalar_lea.vmem [#allocation2], 7
        %v235 = vld [vmem:[%s234] ss:$0 sm:$0xff]
        %v236 = vxor.u32 %v235, 2147483648
        %v237 = vlaneseq
        %v238 = vand.u32 %v237, 127
        %vm239 = vcmp.eq.s32.totalorder %v238, 7
        %v240 = vmul.f32 %v236, %v233
        %241 = vadd.xlane.f32.xlu0 %v240
        %v242 = vpop.xlane.xlu0 %241
        %v243 = vsel %vm239, %v242, %v233
        %s244 = scalar_lea.vmem [#allocation2], 8
        %v245 = vld [vmem:[%s244] ss:$0 sm:$0xff]
        %v246 = vxor.u32 %v245, 2147483648
        %v247 = vlaneseq
        %v248 = vand.u32 %v247, 127
        %vm249 = vcmp.eq.s32.totalorder %v248, 8
        %v250 = vmul.f32 %v246, %v243
        %251 = vadd.xlane.f32.xlu0 %v250
        %v252 = vpop.xlane.xlu0 %251
        %v253 = vsel %vm249, %v252, %v243
        %v254 = vmul.f32 %v246, %v173
        %255 = vadd.xlane.f32.xlu0 %v254
        %v256 = vpop.xlane.xlu0 %255
        %v257 = vsel %vm249, %v256, %v173
        %s258 = scalar_lea.vmem [#allocation2], 9
        %v259 = vld [vmem:[%s258] ss:$0 sm:$0xff]
        %v260 = vxor.u32 %v259, 2147483648
        %v261 = vlaneseq
        %v262 = vand.u32 %v261, 127
        %vm263 = vcmp.eq.s32.totalorder %v262, 9
        %v264 = vmul.f32 %v260, %v253
        %265 = vadd.xlane.f32.xlu0 %v264
        %v266 = vpop.xlane.xlu0 %265
        %v267 = vsel %vm263, %v266, %v253
        %v268 = vmul.f32 %v260, %v257
        %269 = vadd.xlane.f32.xlu0 %v268
        %v270 = vpop.xlane.xlu0 %269
        %v271 = vsel %vm263, %v270, %v257
        %v272 = vrcp.pop %v133
        %v273 = vmul.f32 %v267, %v272
        %vm274 = vweird.f32 %v133
        %v275 = vsel %vm274, %v267, %v273
        %276 = vst [vmem:[%s122] sm:$0xff] %v275
        %v277 = vrcp.pop %v149
        %v278 = vmul.f32 %v271, %v277
        %vm279 = vweird.f32 %v149
        %v280 = vsel %vm279, %v271, %v278
        %s281 = scalar_lea.vmem %s122, 8 [#allocation1]
        %282 = vst [vmem:[%s281] sm:$0xff] %v280
        %s283 = sand.u32 %s8, 1
        %s284 = sand.u32 %s8, 1
        %s285 = smul.addr %s284, 16
        %s286 = scalar_lea.vmem [#allocation1], %s285
        %s287 = sadd.s32 %s19, %s18
        %s288 = smul.addr %s17, 2
        %s289 = sadd.s32 %s287, %s288
        %s290 = smul.addr %s16, 2
        %s291 = sadd.s32 %s289, %s290
        %s292 = smul.addr %s15, 16
        %s293 = sadd.s32 %s291, %s292
        %s294 = smul.addr %s293, 8
        %s295 = scalar_lea.vmem %s1, %s294
        // Predicated region
        $region55: #{custom-call.13} parent=53 // pred_check
          _
        $region56: #{custom-call.13} parent=53 // pred_check_branch
          %297 = sbr.rel (0) target = $region58
        $region57: #{custom-call.13} parent=53 // pred_region
          // Predicated region
          $region59: #{custom-call.13} parent=57 // pred_check
            _
          $region60: #{custom-call.13} parent=57 // pred_check_branch
            %299 = sbr.rel (0) target = $region62
          $region61: #{custom-call.13} parent=57 // pred_region
            // Predicated region
            $region74: #{custom-call.13} parent=61 // pred_check
              _
            $region75: #{custom-call.13} parent=61 // pred_check_branch
              %316 = sbr.rel (0) target = $region77
            $region76: #{custom-call.13} parent=61 // pred_region
              loop: start=0, step=1, limit=1
              $region78: #{custom-call.13} parent=76 // loop_pre_header
                _
              $region79: #{custom-call.13} parent=76 // loop_header
                %s318 = sphi 0, %s322
                %p319 = scmp.ge.s32.totalorder %s318, 1
                %s323 = sphi %s286, %s286
                %s324 = sphi %s295, %s295
              $region80: #{custom-call.13} parent=76 // loop_header_branch
                %321 = sbr.rel (%p319) target = $region84
              $region81: #{custom-call.13} parent=76 // loop_body
                %v325 = vld [vmem:[%s323] sm:$0xff]
                %326 = vst [vmem:[%s324] sm:$0xff] %v325
                %v327 = vld [vmem:[%s323 + $0x8] sm:$0xff]
                %328 = vst [vmem:[%s324 + $0x8] sm:$0xff] %v327
              $region82: #{custom-call.13} parent=76 // loop_footer
                %s322 = sadd.s32 1, %s318
              $region83: #{custom-call.13} parent=76 // loop_footer_branch
                %317 = sbr.rel target = $region79
              $region84: #{custom-call.13} parent=76 // loop_exit
                _
            $region77: #{custom-call.13} parent=61 // pred_fallthru
              _
            // Predicated region
            $region85: #{custom-call.13} parent=61 // pred_check
              _
            $region86: #{custom-call.13} parent=61 // pred_check_branch
              %330 = sbr.rel target = $region88
            $region87: #{custom-call.13} parent=61 // pred_region
              _
            $region88: #{custom-call.13} parent=61 // pred_fallthru
              _
          $region62: #{custom-call.13} parent=57 // pred_fallthru
            _
          // Predicated region
          $region63: #{custom-call.13} parent=57 // pred_check
            _
          $region64: #{custom-call.13} parent=57 // pred_check_branch
            %301 = sbr.rel target = $region66
          $region65: #{custom-call.13} parent=57 // pred_region
            loop: start=0, step=1, limit=1
            $region67: #{custom-call.13} parent=65 // loop_pre_header
              _
            $region68: #{custom-call.13} parent=65 // loop_header
              %s304 = sphi 0, %s308
              %p305 = scmp.ge.s32.totalorder %s304, 1
              %s309 = sphi %s286, %s286
              %s310 = sphi %s295, %s295
            $region69: #{custom-call.13} parent=65 // loop_header_branch
              %307 = sbr.rel (%p305) target = $region73
            $region70: #{custom-call.13} parent=65 // loop_body
              %v311 = vld [vmem:[%s309] sm:$0xff]
              %312 = vst [vmem:[%s310] sm:$0xff] %v311
              %v313 = vld [vmem:[%s309 + $0x8] sm:$0xff]
              %314 = vst [vmem:[%s310 + $0x8] sm:$0xff] %v313
            $region71: #{custom-call.13} parent=65 // loop_footer
              %s308 = sadd.s32 1, %s304
            $region72: #{custom-call.13} parent=65 // loop_footer_branch
              %303 = sbr.rel target = $region68
            $region73: #{custom-call.13} parent=65 // loop_exit
              _
          $region66: #{custom-call.13} parent=57 // pred_fallthru
            _
        $region58: #{custom-call.13} parent=53 // pred_fallthru
          _
        %331 = vnop
      $region54: #{custom-call.13} parent=5 // pred_fallthru
        _
      %p332 = scmp.le.s32.totalorder 2, %s3
      // Predicated region
      $region89: #{custom-call.13} parent=5 // pred_check
        %p333 = pneg %p332
      $region90: #{custom-call.13} parent=5 // pred_check_branch
        %335 = sbr.rel (%p333) target = $region92
      $region91: #{custom-call.13} parent=5 // pred_region
        %s336 = ssub.s32 %s3, 2
        %s337 = sand.u32 %s9, 1
        %s338 = sand.u32 %s9, 1
        %s339 = smul.addr %s338, 16
        %s340 = scalar_lea.vmem [#allocation1], %s339
      $region92: #{custom-call.13} parent=5 // pred_fallthru
        _
    $region6: #{custom-call.13} parent=1 // loop_footer
      %s7 = sadd.s32 1, %s3
    $region7: #{custom-call.13} parent=1 // loop_footer_branch
      %2 = sbr.rel target = $region3
    $region8: #{custom-call.13} parent=1 // loop_exit
      _

</llo_original>
